<compile_context>
chip_gen: v7x
topology: tpu7x:2x2x1
jax: 0.10.0
libtpu: 0.0.40
codegen_flags: <defaults>
</compile_context>

<pallas_src>
import functools

import jax
import jax.numpy as jnp
from jax import lax
from jax.experimental import pallas as pl
from jax.experimental.pallas import tpu as pltpu

# ----------------------------- configuration ------------------------------
PAD_IDX = 0
VOCAB = 50          # vocab_size
EMB = 32            # emb_size
HIDDEN = 32         # hidden_size  (rnn feature dim = 2*HIDDEN)
LAYERS = 2          # layers_num (kernel signature below assumes 2)
LABELS = 16         # labels_num
LINEAR = 32         # linear_size = [32]
BATCH = 2
SEQ = 8
SAMPLED = 4         # number of candidate labels per example

_VMEM = pl.BlockSpec(memory_space=pltpu.MemorySpace.VMEM)


# --------------------------- fused forward kernel ---------------------------
def _fused_forward_kernel(x0_ref, mstk_ref, amask_ref, attn_ref,
                          w0_ref, b0_ref, whh0_ref,
                          w1f_ref, w1b_ref, b1_ref, whh1_ref,
                          l1w_ref, l1b_ref, l2w_ref, l2b_ref,
                          out_ref,
                          o0f, o0b, o1f, o1b,
                          *, seq_len, batch, hidden):
    L, N, H = seq_len, batch, hidden
    f32, bf16 = jnp.float32, jnp.bfloat16

    # ---- hoisted constants (JAX does not CSE iota/broadcast; compute once) ----
    lane4 = lax.broadcasted_iota(jnp.int32, (2 * N, 4 * H), 1)
    g_sel = (lane4 >= 2 * H) & (lane4 < 3 * H)              # tanh (g) gate lanes
    lane2 = lax.broadcasted_iota(jnp.int32, (2 * N, 2 * H), 1)
    row2 = lax.broadcasted_iota(jnp.int32, (2 * N, 2 * H), 0)
    # fwd rows (0:N) live in lanes 0:H of h_pad, bwd rows (N:2N) in lanes H:2H.
    pad_sel = ((row2 < N) & (lane2 < H)) | ((row2 >= N) & (lane2 >= H))

    def run_layer(gin_fn, whh_bf, b_stk, obuf_f, obuf_b):
        # Stacked step-domain recurrence: rows 0:N process time i (fwd direction),
        # rows N:2N process time L-1-i (bwd direction).  Per step: ONE recurrent MXU
        # matmul (128-lane output) and THREE EUP transcendentals for both directions.
        h_pad = jnp.zeros((2 * N, 2 * H), f32)              # zero-padded stacked hidden
        c = jnp.zeros((2 * N, H), f32)
        for i in range(L):
            mm = jnp.dot(h_pad.astype(bf16), whh_bf, preferred_element_type=f32)  # (2N,4H)
            g = gin_fn(i) + b_stk + mm
            th = jnp.tanh(0.5 * g)                          # EUP push #1
            sig = 0.5 * th + 0.5                            # sigmoid(g) -- no extra EUP
            tg = jnp.tanh(g)                                # EUP push #2
            act = jnp.where(g_sel, tg, sig)                 # i,f,g,o (PyTorch order)
            i_g = act[:, 0 * H:1 * H]
            f_g = act[:, 1 * H:2 * H]
            g_g = act[:, 2 * H:3 * H]
            o_g = act[:, 3 * H:4 * H]
            c_new = f_g * c + i_g * g_g
            h_new = o_g * jnp.tanh(c_new)                   # EUP push #3
            m = mstk_ref[i] > 0.0                           # (2N,1) pack_padded validity
            c = jnp.where(m, c_new, c)                      # freeze cell past length
            out = jnp.where(m, h_new, 0.0)                  # padded steps output 0
            obuf_f[i] = out[0:N, :]                         # fwd output for time i
            obuf_b[L - 1 - i] = out[N:2 * N, :]             # bwd output for time L-1-i
            h_dup = jnp.concatenate([h_new, h_new], axis=-1)
            h_pad = jnp.where(m & pad_sel, h_dup, h_pad)    # freeze hidden past length

    # ---- layer 0: input already zero-padded/stacked on the host ----
    w0 = w0_ref[...]                                        # (2E, 4H) bf16, [wih_f; wih_b]
    run_layer(lambda i: jnp.dot(x0_ref[i], w0, preferred_element_type=f32),
              whh0_ref[...], b0_ref[...], o0f, o0b)

    # ---- layer 1: per-step input projection from layer-0 scratch (off critical path) ----
    w1f = w1f_ref[...]
    w1b = w1b_ref[...]

    def gin1(i):
        xf = jnp.concatenate([o0f[i], o0b[i]], axis=-1).astype(bf16)                  # (N,2H)
        xb = jnp.concatenate([o0f[L - 1 - i], o0b[L - 1 - i]], axis=-1).astype(bf16)  # (N,2H)
        return jnp.concatenate(
            [jnp.dot(xf, w1f, preferred_element_type=f32),
             jnp.dot(xb, w1b, preferred_element_type=f32)], axis=0)                   # (2N,4H)

    run_layer(gin1, whh1_ref[...], b1_ref[...], o1f, o1b)

    # ---- FastMLAttention (parallel_attn): masked softmax over sequence ----
    rnn = jnp.concatenate(
        [jnp.concatenate([o1f[t], o1b[t]], axis=-1)[:, None, :] for t in range(L)],
        axis=1)                                             # (N, L, 2H) batch-major
    attnv = attn_ref[...]                                   # (N, S, 2H)
    scores = jnp.einsum('nsd,nld->nsl', attnv, rnn, preferred_element_type=f32)
    amask = amask_ref[...] > 0.0                            # (N, L) token != PAD
    scores = jnp.where(amask[:, None, :], scores, jnp.float32(-1e30))
    mx = jnp.max(scores, axis=-1, keepdims=True)
    e = jnp.exp(scores - mx)
    probs = e * pl.reciprocal(jnp.sum(e, axis=-1, keepdims=True), approx=True)
    ctx = jnp.einsum('nsl,nld->nsd', probs, rnn, preferred_element_type=f32)   # (N,S,2H)

    # ---- MLLinear head: relu(ctx @ W1 + b1) @ w2 + b2, plain 2-D dots ----
    w1l = l1w_ref[...]                                      # (2H, LIN)
    b1l = l1b_ref[...]                                      # (1, LIN)
    w2l = l2w_ref[...]                                      # (LIN, 1)
    b2l = l2b_ref[...]                                      # (1, 1)
    for n in range(N):
        hmid = jnp.maximum(jnp.dot(ctx[n], w1l, preferred_element_type=f32) + b1l, 0.0)
        out_ref[n] = jnp.dot(hmid, w2l, preferred_element_type=f32) + b2l   # (S, 1)


# ----------------------------- parameter packing ----------------------------
def pack_params(p):
    """Pre-pack kernel weight layouts ONCE (outside the per-call jit)."""
    assert LAYERS == 2, "fused kernel signature assumes 2 LSTM layers"
    packed = {'emb': p['emb'], 'attn_emb': p['attn_emb']}
    for layer, name in enumerate(('l0', 'l1')):
        wih_f, whh_f, b_f = p['lstm'][layer]['fwd']
        wih_b, whh_b, b_b = p['lstm'][layer]['bwd']
        # row-stacked recurrent weight [whh_f; whh_b] -> one fused (2N,2H)@(2H,4H) dot
        packed[f'{name}_whh'] = jnp.concatenate([whh_f, whh_b], axis=0).astype(jnp.bfloat16)
        # stacked bias: rows 0:N = fwd bias, rows N:2N = bwd bias
        packed[f'{name}_b'] = jnp.concatenate(
            [jnp.broadcast_to(b_f, (BATCH, 4 * HIDDEN)),
             jnp.broadcast_to(b_b, (BATCH, 4 * HIDDEN))], axis=0).astype(jnp.float32)
        if layer == 0:
            # layer-0 input weight row-stacked to pair with the zero-padded stacked input
            packed['l0_win'] = jnp.concatenate([wih_f, wih_b], axis=0).astype(jnp.bfloat16)
        else:
            packed['l1_wf'] = wih_f.astype(jnp.bfloat16)
            packed['l1_wb'] = wih_b.astype(jnp.bfloat16)
    packed['lin1_w'] = p['lin1_w']
    packed['lin1_b'] = p['lin1_b']
    packed['out_w'] = p['out_w']
    packed['out_b'] = p['out_b']
    return packed


# ----------------------------- host-side wrapper ----------------------------
@jax.jit
def fast_attention_rnn_forward(packed, token_ids, candidates):
    n, seq_len = token_ids.shape
    s = candidates.shape[1]

    # Plain-JAX glue: gathers + activation layout packing (no clean Pallas equivalent
    # for the embedding gathers at these shapes).
    tok_t = token_ids.T                                            # (L, N) time-major
    emb_tm = packed['emb'][tok_t].astype(jnp.float32)              # (L, N, E)
    emb_rev = emb_tm[::-1]                                         # time-reversed for bwd
    zeros_e = jnp.zeros_like(emb_tm)
    # stacked, zero-padded layer-0 input: rows 0:N = [x(t)|0], rows N:2N = [0|x(L-1-t)]
    x0s = jnp.concatenate(
        [jnp.concatenate([emb_tm, zeros_e], axis=-1),
         jnp.concatenate([zeros_e, emb_rev], axis=-1)], axis=1).astype(jnp.bfloat16)

    masks = token_ids != PAD_IDX
    lengths = masks.sum(axis=-1)                                   # (N,)
    t_idx = jnp.arange(seq_len)
    m_f = (t_idx[:, None] < lengths[None, :]).astype(jnp.float32)              # (L, N)
    m_b = ((seq_len - 1 - t_idx)[:, None] < lengths[None, :]).astype(jnp.float32)
    mstk = jnp.concatenate([m_f, m_b], axis=1)[:, :, None]                      # (L, 2N, 1)
    amask = masks.astype(jnp.float32)                              # (N, L)
    attnv = packed['attn_emb'][candidates].astype(jnp.float32)     # (N, S, 2H)

    kernel = functools.partial(_fused_forward_kernel,
                               seq_len=seq_len, batch=n, hidden=HIDDEN)
    out = pl.pallas_call(
        kernel,
        out_shape=jax.ShapeDtypeStruct((n, s, 1), jnp.float32),
        in_specs=[_VMEM] * 15,
        out_specs=_VMEM,
        scratch_shapes=[pltpu.VMEM((seq_len, n, HIDDEN), jnp.float32)
                        for _ in range(4)],
    )(x0s, mstk, amask, attnv,
      packed['l0_win'], packed['l0_b'], packed['l0_whh'],
      packed['l1_wf'], packed['l1_wb'], packed['l1_b'], packed['l1_whh'],
      packed['lin1_w'], packed['lin1_b'], packed['out_w'], packed['out_b'])
    return out[..., 0]


# ----------------------------- parameters ----------------------------------
def init_params(key):
    keys = iter(jax.random.split(key, 64))
    p = {}
    emb = jax.random.normal(next(keys), (VOCAB, EMB), jnp.float32) * 0.1
    p['emb'] = emb.at[PAD_IDX].set(0.0)                       # padding_idx row is zero
    p['lstm'] = []
    for layer in range(LAYERS):
        d_in = EMB if layer == 0 else 2 * HIDDEN
        layer_p = {}
        for direction in ('fwd', 'bwd'):
            w_ih = jax.random.normal(next(keys), (d_in, 4 * HIDDEN), jnp.float32) * 0.1
            w_hh = jax.random.normal(next(keys), (HIDDEN, 4 * HIDDEN), jnp.float32) * 0.1
            bias = jax.random.normal(next(keys), (1, 4 * HIDDEN), jnp.float32) * 0.1
            layer_p[direction] = (w_ih, w_hh, bias)           # bias = b_ih + b_hh combined
        p['lstm'].append(layer_p)
    # FastMLAttention with parallel_attn=True: nn.Embedding(labels_num + 1, 2H)
    p['attn_emb'] = jax.random.normal(next(keys), (LABELS + 1, 2 * HIDDEN), jnp.float32) * 0.1
    # MLLinear([2H, LINEAR], 1)
    p['lin1_w'] = jax.random.normal(next(keys), (2 * HIDDEN, LINEAR), jnp.float32) * 0.1
    p['lin1_b'] = jnp.zeros((1, LINEAR), jnp.float32)
    p['out_w'] = jax.random.normal(next(keys), (LINEAR, 1), jnp.float32) * 0.1
    p['out_b'] = jnp.zeros((1, 1), jnp.float32)
    return p


# ------------------------- pure-JAX reference -------------------------------
def _ref_lstm_dir(x_tm, mask_tm, w_ih, w_hh, b, reverse):
    seq_len, batch, _ = x_tm.shape
    hid = w_hh.shape[0]
    ts = jnp.arange(seq_len)
    if reverse:
        ts = ts[::-1]

    def step(carry, t):
        h, c = carry
        gates = x_tm[t] @ w_ih + h @ w_hh + b
        i_g = jax.nn.sigmoid(gates[:, :hid])
        f_g = jax.nn.sigmoid(gates[:, hid:2 * hid])
        g_g = jnp.tanh(gates[:, 2 * hid:3 * hid])
        o_g = jax.nn.sigmoid(gates[:, 3 * hid:])
        c_new = f_g * c + i_g * g_g
        h_new = o_g * jnp.tanh(c_new)
        m = mask_tm[t]
        return (m * h_new + (1 - m) * h, m * c_new + (1 - m) * c), m * h_new

    init = (jnp.zeros((batch, hid), jnp.float32), jnp.zeros((batch, hid), jnp.float32))
    _, outs = lax.scan(step, init, ts)
    return outs[::-1] if reverse else outs


def reference_forward(params, token_ids, candidates):
    emb_out = params['emb'][token_ids]
    masks = token_ids != PAD_IDX
    lengths = masks.sum(axis=-1)
    seq_len = token_ids.shape[1]
    step_mask = (jnp.arange(seq_len)[None, :] < lengths[:, None]).astype(jnp.float32)
    mask_tm = jnp.transpose(step_mask)[:, :, None]
    x = jnp.transpose(emb_out, (1, 0, 2))
    for layer_p in params['lstm']:
        h_f = _ref_lstm_dir(x, mask_tm, *layer_p['fwd'], reverse=False)
        h_b = _ref_lstm_dir(x, mask_tm, *layer_p['bwd'], reverse=True)
        x = jnp.concatenate([h_f, h_b], axis=-1)
    rnn_out = jnp.transpose(x, (1, 0, 2))
    attn = params['attn_emb'][candidates]
    scores = jnp.einsum('nsd,nld->nsl', attn, rnn_out)
    scores = jnp.where(masks[:, None, :], scores, -jnp.inf)
    probs = jax.nn.softmax(scores, axis=-1)
    attn_out = jnp.einsum('nsl,nld->nsd', probs, rnn_out)
    h = jnp.maximum(attn_out @ params['lin1_w'] + params['lin1_b'][0], 0.0)
    return (h @ params['out_w'] + params['out_b'][0])[..., 0]


# --------------------------------- main --------------------------------------
if __name__ == "__main__":
    key = jax.random.PRNGKey(0)
    k_param, k_tok, k_cand = jax.random.split(key, 3)

    params = init_params(k_param)
    packed = pack_params(params)          # packed once, outside the jitted forward

    # token ids: no accidental padding tokens mid-sequence; seq 0 is full length,
    # seq 1 has 3 trailing pad positions.
    token_ids = jax.random.randint(k_tok, (BATCH, SEQ), minval=1, maxval=VOCAB,
                                   dtype=jnp.int32)
    token_ids = token_ids.at[1, SEQ - 3:].set(PAD_IDX)

    candidates = jax.random.randint(k_cand, (BATCH, SAMPLED), minval=0,
                                    maxval=LABELS + 1, dtype=jnp.int32)

    out = fast_attention_rnn_forward(packed, token_ids, candidates)
    out = jax.block_until_ready(out)

    ref = reference_forward(params, token_ids, candidates)
    assert out.shape == (BATCH, SAMPLED)
    assert jnp.all(jnp.isfinite(out))
    assert jnp.allclose(out, ref, atol=2e-2, rtol=2e-2), (out, ref)

    print("KERNEL_OK")
</pallas_src>

<mosaic_0001>
module attributes {stable_mosaic.version = 11 : i64} {
  func.func @_fused_forward_kernel(%arg0: memref<8x4x64xbf16, #tpu.memory_space<vmem>>, %arg1: memref<8x4x1xf32, #tpu.memory_space<vmem>>, %arg2: memref<2x8xf32, #tpu.memory_space<vmem>>, %arg3: memref<2x4x64xf32, #tpu.memory_space<vmem>>, %arg4: memref<64x128xbf16, #tpu.memory_space<vmem>>, %arg5: memref<4x128xf32, #tpu.memory_space<vmem>>, %arg6: memref<64x128xbf16, #tpu.memory_space<vmem>>, %arg7: memref<64x128xbf16, #tpu.memory_space<vmem>>, %arg8: memref<64x128xbf16, #tpu.memory_space<vmem>>, %arg9: memref<4x128xf32, #tpu.memory_space<vmem>>, %arg10: memref<64x128xbf16, #tpu.memory_space<vmem>>, %arg11: memref<64x32xf32, #tpu.memory_space<vmem>>, %arg12: memref<1x32xf32, #tpu.memory_space<vmem>>, %arg13: memref<32x1xf32, #tpu.memory_space<vmem>>, %arg14: memref<1x1xf32, #tpu.memory_space<vmem>>, %arg15: memref<2x4x1xf32, #tpu.memory_space<vmem>>, %arg16: memref<8x2x32xf32, #tpu.memory_space<vmem>>, %arg17: memref<8x2x32xf32, #tpu.memory_space<vmem>>, %arg18: memref<8x2x32xf32, #tpu.memory_space<vmem>>, %arg19: memref<8x2x32xf32, #tpu.memory_space<vmem>>) attributes {dimension_semantics = [], scalar_prefetch = 0 : i64, scratch_operands = 4 : i64, tpu.core_type = #tpu.core_type<tc>} {
    %0 = tpu.iota {dimensions = array<i32: 1>} : vector<4x128xi32>
    %c64_i32 = arith.constant 64 : i32
    %1 = vector.broadcast %c64_i32 : i32 to vector<4x128xi32>
    %2 = arith.cmpi sge, %0, %1 : vector<4x128xi32>
    %c96_i32 = arith.constant 96 : i32
    %3 = vector.broadcast %c96_i32 : i32 to vector<4x128xi32>
    %4 = arith.cmpi slt, %0, %3 : vector<4x128xi32>
    %5 = arith.andi %2, %4 : vector<4x128xi1>
    %6 = tpu.iota {dimensions = array<i32: 1>} : vector<4x64xi32>
    %7 = tpu.iota {dimensions = array<i32: 0>} : vector<4x64xi32>
    %c2_i32 = arith.constant 2 : i32
    %8 = vector.broadcast %c2_i32 : i32 to vector<4x64xi32>
    %9 = arith.cmpi slt, %7, %8 : vector<4x64xi32>
    %c32_i32 = arith.constant 32 : i32
    %10 = vector.broadcast %c32_i32 : i32 to vector<4x64xi32>
    %11 = arith.cmpi slt, %6, %10 : vector<4x64xi32>
    %12 = arith.andi %9, %11 : vector<4x64xi1>
    %c2_i32_0 = arith.constant 2 : i32
    %13 = vector.broadcast %c2_i32_0 : i32 to vector<4x64xi32>
    %14 = arith.cmpi sge, %7, %13 : vector<4x64xi32>
    %c32_i32_1 = arith.constant 32 : i32
    %15 = vector.broadcast %c32_i32_1 : i32 to vector<4x64xi32>
    %16 = arith.cmpi sge, %6, %15 : vector<4x64xi32>
    %17 = arith.andi %14, %16 : vector<4x64xi1>
    %18 = arith.ori %12, %17 : vector<4x64xi1>
    %c0 = arith.constant 0 : index
    %c0_2 = arith.constant 0 : index
    %19 = vector.load %arg4[%c0, %c0_2] : memref<64x128xbf16, #tpu.memory_space<vmem>>, vector<64x128xbf16>
    %c0_3 = arith.constant 0 : index
    %c0_4 = arith.constant 0 : index
    %20 = vector.load %arg6[%c0_3, %c0_4] : memref<64x128xbf16, #tpu.memory_space<vmem>>, vector<64x128xbf16>
    %c0_5 = arith.constant 0 : index
    %c0_6 = arith.constant 0 : index
    %21 = vector.load %arg5[%c0_5, %c0_6] : memref<4x128xf32, #tpu.memory_space<vmem>>, vector<4x128xf32>
    %cst = arith.constant 0.000000e+00 : f32
    %22 = vector.broadcast %cst : f32 to vector<4x64xf32>
    %cst_7 = arith.constant 0.000000e+00 : f32
    %23 = vector.broadcast %cst_7 : f32 to vector<4x32xf32>
    %24 = arith.truncf %22 : vector<4x64xf32> to vector<4x64xbf16>
    %cst_8 = arith.constant dense<0.000000e+00> : vector<4x128xf32>
    %25 = tpu.matmul %24, %20, %cst_8 {dimension_numbers = #tpu.dot_dimension_numbers<[1], [0], [0], [1], [0, 0, 1, 1], [], []>} : vector<4x64xbf16>, vector<64x128xbf16>, vector<4x128xf32> -> vector<4x128xf32>
    %c0_9 = arith.constant 0 : index
    %c0_10 = arith.constant 0 : index
    %c0_11 = arith.constant 0 : index
    %26 = vector.load %arg0[%c0_9, %c0_10, %c0_11] : memref<8x4x64xbf16, #tpu.memory_space<vmem>>, vector<1x4x64xbf16>
    %27 = vector.shape_cast %26 : vector<1x4x64xbf16> to vector<4x64xbf16>
    %cst_12 = arith.constant dense<0.000000e+00> : vector<4x128xf32>
    %28 = tpu.matmul %27, %19, %cst_12 {dimension_numbers = #tpu.dot_dimension_numbers<[1], [0], [0], [1], [0, 0, 1, 1], [], []>} : vector<4x64xbf16>, vector<64x128xbf16>, vector<4x128xf32> -> vector<4x128xf32>
    %29 = arith.addf %28, %21 : vector<4x128xf32>
    %30 = arith.addf %29, %25 : vector<4x128xf32>
    %cst_13 = arith.constant 5.000000e-01 : f32
    %31 = vector.broadcast %cst_13 : f32 to vector<4x128xf32>
    %32 = arith.mulf %31, %30 : vector<4x128xf32>
    %33 = math.tanh %32 : vector<4x128xf32>
    %cst_14 = arith.constant 5.000000e-01 : f32
    %34 = vector.broadcast %cst_14 : f32 to vector<4x128xf32>
    %35 = arith.mulf %34, %33 : vector<4x128xf32>
    %cst_15 = arith.constant 5.000000e-01 : f32
    %36 = vector.broadcast %cst_15 : f32 to vector<4x128xf32>
    %37 = arith.addf %35, %36 : vector<4x128xf32>
    %38 = math.tanh %30 : vector<4x128xf32>
    %39 = arith.select %5, %38, %37 : vector<4x128xi1>, vector<4x128xf32>
    %40 = vector.extract_strided_slice %39 {offsets = [0, 0], sizes = [4, 32], strides = [1, 1]} : vector<4x128xf32> to vector<4x32xf32>
    %41 = vector.extract_strided_slice %39 {offsets = [0, 32], sizes = [4, 32], strides = [1, 1]} : vector<4x128xf32> to vector<4x32xf32>
    %42 = vector.extract_strided_slice %39 {offsets = [0, 64], sizes = [4, 32], strides = [1, 1]} : vector<4x128xf32> to vector<4x32xf32>
    %43 = vector.extract_strided_slice %39 {offsets = [0, 96], sizes = [4, 32], strides = [1, 1]} : vector<4x128xf32> to vector<4x32xf32>
    %44 = arith.mulf %41, %23 : vector<4x32xf32>
    %45 = arith.mulf %40, %42 : vector<4x32xf32>
    %46 = arith.addf %44, %45 : vector<4x32xf32>
    %47 = math.tanh %46 : vector<4x32xf32>
    %48 = arith.mulf %43, %47 : vector<4x32xf32>
    %c0_16 = arith.constant 0 : index
    %c0_17 = arith.constant 0 : index
    %c0_18 = arith.constant 0 : index
    %49 = vector.load %arg1[%c0_16, %c0_17, %c0_18] : memref<8x4x1xf32, #tpu.memory_space<vmem>>, vector<1x4x1xf32>
    %50 = vector.shape_cast %49 : vector<1x4x1xf32> to vector<4x1xf32>
    %cst_19 = arith.constant 0.000000e+00 : f32
    %51 = vector.broadcast %cst_19 : f32 to vector<4x1xf32>
    %52 = arith.cmpf ogt, %50, %51 : vector<4x1xf32>
    %53 = vector.shape_cast %52 : vector<4x1xi1> to vector<4x1xi1>
    %54 = vector.broadcast %53 : vector<4x1xi1> to vector<4x32xi1>
    %55 = arith.select %54, %46, %23 : vector<4x32xi1>, vector<4x32xf32>
    %cst_20 = arith.constant 0.000000e+00 : f32
    %56 = vector.shape_cast %52 : vector<4x1xi1> to vector<4x1xi1>
    %57 = vector.broadcast %56 : vector<4x1xi1> to vector<4x32xi1>
    %58 = vector.broadcast %cst_20 : f32 to vector<4x32xf32>
    %59 = arith.select %57, %48, %58 : vector<4x32xi1>, vector<4x32xf32>
    %60 = vector.extract_strided_slice %59 {offsets = [0, 0], sizes = [2, 32], strides = [1, 1]} : vector<4x32xf32> to vector<2x32xf32>
    %c0_21 = arith.constant 0 : index
    %c0_22 = arith.constant 0 : index
    %c0_23 = arith.constant 0 : index
    %61 = vector.load %arg16[%c0_21, %c0_22, %c0_23] : memref<8x2x32xf32, #tpu.memory_space<vmem>>, vector<1x2x32xf32>
    %62 = vector.shape_cast %61 : vector<1x2x32xf32> to vector<2x32xf32>
    %63 = vector.shape_cast %60 : vector<2x32xf32> to vector<1x2x32xf32>
    tpu.vector_store %arg16[%c0_21, %c0_22, %c0_23], %63 {strides = array<i32>} : memref<8x2x32xf32, #tpu.memory_space<vmem>>, vector<1x2x32xf32>,
    %64 = vector.extract_strided_slice %59 {offsets = [2, 0], sizes = [2, 32], strides = [1, 1]} : vector<4x32xf32> to vector<2x32xf32>
    %c7 = arith.constant 7 : index
    %c0_24 = arith.constant 0 : index
    %c0_25 = arith.constant 0 : index
    %65 = vector.load %arg17[%c7, %c0_24, %c0_25] : memref<8x2x32xf32, #tpu.memory_space<vmem>>, vector<1x2x32xf32>
    %66 = vector.shape_cast %65 : vector<1x2x32xf32> to vector<2x32xf32>
    %67 = vector.shape_cast %64 : vector<2x32xf32> to vector<1x2x32xf32>
    tpu.vector_store %arg17[%c7, %c0_24, %c0_25], %67 {strides = array<i32>} : memref<8x2x32xf32, #tpu.memory_space<vmem>>, vector<1x2x32xf32>,
    %68 = tpu.concatenate %48, %48 in 1 : vector<4x32xf32>, vector<4x32xf32> -> vector<4x64xf32>
    %69 = vector.broadcast %52 : vector<4x1xi1> to vector<4x64xi1>
    %70 = arith.andi %69, %18 : vector<4x64xi1>
    %71 = arith.select %70, %68, %22 : vector<4x64xi1>, vector<4x64xf32>
    %72 = arith.truncf %71 : vector<4x64xf32> to vector<4x64xbf16>
    %cst_26 = arith.constant dense<0.000000e+00> : vector<4x128xf32>
    %73 = tpu.matmul %72, %20, %cst_26 {dimension_numbers = #tpu.dot_dimension_numbers<[1], [0], [0], [1], [0, 0, 1, 1], [], []>} : vector<4x64xbf16>, vector<64x128xbf16>, vector<4x128xf32> -> vector<4x128xf32>
    %c1 = arith.constant 1 : index
    %c0_27 = arith.constant 0 : index
    %c0_28 = arith.constant 0 : index
    %74 = vector.load %arg0[%c1, %c0_27, %c0_28] : memref<8x4x64xbf16, #tpu.memory_space<vmem>>, vector<1x4x64xbf16>
    %75 = vector.shape_cast %74 : vector<1x4x64xbf16> to vector<4x64xbf16>
    %cst_29 = arith.constant dense<0.000000e+00> : vector<4x128xf32>
    %76 = tpu.matmul %75, %19, %cst_29 {dimension_numbers = #tpu.dot_dimension_numbers<[1], [0], [0], [1], [0, 0, 1, 1], [], []>} : vector<4x64xbf16>, vector<64x128xbf16>, vector<4x128xf32> -> vector<4x128xf32>
    %77 = arith.addf %76, %21 : vector<4x128xf32>
    %78 = arith.addf %77, %73 : vector<4x128xf32>
    %cst_30 = arith.constant 5.000000e-01 : f32
    %79 = vector.broadcast %cst_30 : f32 to vector<4x128xf32>
    %80 = arith.mulf %79, %78 : vector<4x128xf32>
    %81 = math.tanh %80 : vector<4x128xf32>
    %cst_31 = arith.constant 5.000000e-01 : f32
    %82 = vector.broadcast %cst_31 : f32 to vector<4x128xf32>
    %83 = arith.mulf %82, %81 : vector<4x128xf32>
    %cst_32 = arith.constant 5.000000e-01 : f32
    %84 = vector.broadcast %cst_32 : f32 to vector<4x128xf32>
    %85 = arith.addf %83, %84 : vector<4x128xf32>
    %86 = math.tanh %78 : vector<4x128xf32>
    %87 = arith.select %5, %86, %85 : vector<4x128xi1>, vector<4x128xf32>
    %88 = vector.extract_strided_slice %87 {offsets = [0, 0], sizes = [4, 32], strides = [1, 1]} : vector<4x128xf32> to vector<4x32xf32>
    %89 = vector.extract_strided_slice %87 {offsets = [0, 32], sizes = [4, 32], strides = [1, 1]} : vector<4x128xf32> to vector<4x32xf32>
    %90 = vector.extract_strided_slice %87 {offsets = [0, 64], sizes = [4, 32], strides = [1, 1]} : vector<4x128xf32> to vector<4x32xf32>
    %91 = vector.extract_strided_slice %87 {offsets = [0, 96], sizes = [4, 32], strides = [1, 1]} : vector<4x128xf32> to vector<4x32xf32>
    %92 = arith.mulf %89, %55 : vector<4x32xf32>
    %93 = arith.mulf %88, %90 : vector<4x32xf32>
    %94 = arith.addf %92, %93 : vector<4x32xf32>
    %95 = math.tanh %94 : vector<4x32xf32>
    %96 = arith.mulf %91, %95 : vector<4x32xf32>
    %c1_33 = arith.constant 1 : index
    %c0_34 = arith.constant 0 : index
    %c0_35 = arith.constant 0 : index
    %97 = vector.load %arg1[%c1_33, %c0_34, %c0_35] : memref<8x4x1xf32, #tpu.memory_space<vmem>>, vector<1x4x1xf32>
    %98 = vector.shape_cast %97 : vector<1x4x1xf32> to vector<4x1xf32>
    %cst_36 = arith.constant 0.000000e+00 : f32
    %99 = vector.broadcast %cst_36 : f32 to vector<4x1xf32>
    %100 = arith.cmpf ogt, %98, %99 : vector<4x1xf32>
    %101 = vector.shape_cast %100 : vector<4x1xi1> to vector<4x1xi1>
    %102 = vector.broadcast %101 : vector<4x1xi1> to vector<4x32xi1>
    %103 = arith.select %102, %94, %55 : vector<4x32xi1>, vector<4x32xf32>
    %cst_37 = arith.constant 0.000000e+00 : f32
    %104 = vector.shape_cast %100 : vector<4x1xi1> to vector<4x1xi1>
    %105 = vector.broadcast %104 : vector<4x1xi1> to vector<4x32xi1>
    %106 = vector.broadcast %cst_37 : f32 to vector<4x32xf32>
    %107 = arith.select %105, %96, %106 : vector<4x32xi1>, vector<4x32xf32>
    %108 = vector.extract_strided_slice %107 {offsets = [0, 0], sizes = [2, 32], strides = [1, 1]} : vector<4x32xf32> to vector<2x32xf32>
    %c1_38 = arith.constant 1 : index
    %c0_39 = arith.constant 0 : index
    %c0_40 = arith.constant 0 : index
    %109 = vector.load %arg16[%c1_38, %c0_39, %c0_40] : memref<8x2x32xf32, #tpu.memory_space<vmem>>, vector<1x2x32xf32>
    %110 = vector.shape_cast %109 : vector<1x2x32xf32> to vector<2x32xf32>
    %111 = vector.shape_cast %108 : vector<2x32xf32> to vector<1x2x32xf32>
    tpu.vector_store %arg16[%c1_38, %c0_39, %c0_40], %111 {strides = array<i32>} : memref<8x2x32xf32, #tpu.memory_space<vmem>>, vector<1x2x32xf32>,
    %112 = vector.extract_strided_slice %107 {offsets = [2, 0], sizes = [2, 32], strides = [1, 1]} : vector<4x32xf32> to vector<2x32xf32>
    %c6 = arith.constant 6 : index
    %c0_41 = arith.constant 0 : index
    %c0_42 = arith.constant 0 : index
    %113 = vector.load %arg17[%c6, %c0_41, %c0_42] : memref<8x2x32xf32, #tpu.memory_space<vmem>>, vector<1x2x32xf32>
    %114 = vector.shape_cast %113 : vector<1x2x32xf32> to vector<2x32xf32>
    %115 = vector.shape_cast %112 : vector<2x32xf32> to vector<1x2x32xf32>
    tpu.vector_store %arg17[%c6, %c0_41, %c0_42], %115 {strides = array<i32>} : memref<8x2x32xf32, #tpu.memory_space<vmem>>, vector<1x2x32xf32>,
    %116 = tpu.concatenate %96, %96 in 1 : vector<4x32xf32>, vector<4x32xf32> -> vector<4x64xf32>
    %117 = vector.broadcast %100 : vector<4x1xi1> to vector<4x64xi1>
    %118 = arith.andi %117, %18 : vector<4x64xi1>
    %119 = arith.select %118, %116, %71 : vector<4x64xi1>, vector<4x64xf32>
    %120 = arith.truncf %119 : vector<4x64xf32> to vector<4x64xbf16>
    %cst_43 = arith.constant dense<0.000000e+00> : vector<4x128xf32>
    %121 = tpu.matmul %120, %20, %cst_43 {dimension_numbers = #tpu.dot_dimension_numbers<[1], [0], [0], [1], [0, 0, 1, 1], [], []>} : vector<4x64xbf16>, vector<64x128xbf16>, vector<4x128xf32> -> vector<4x128xf32>
    %c2 = arith.constant 2 : index
    %c0_44 = arith.constant 0 : index
    %c0_45 = arith.constant 0 : index
    %122 = vector.load %arg0[%c2, %c0_44, %c0_45] : memref<8x4x64xbf16, #tpu.memory_space<vmem>>, vector<1x4x64xbf16>
    %123 = vector.shape_cast %122 : vector<1x4x64xbf16> to vector<4x64xbf16>
    %cst_46 = arith.constant dense<0.000000e+00> : vector<4x128xf32>
    %124 = tpu.matmul %123, %19, %cst_46 {dimension_numbers = #tpu.dot_dimension_numbers<[1], [0], [0], [1], [0, 0, 1, 1], [], []>} : vector<4x64xbf16>, vector<64x128xbf16>, vector<4x128xf32> -> vector<4x128xf32>
    %125 = arith.addf %124, %21 : vector<4x128xf32>
    %126 = arith.addf %125, %121 : vector<4x128xf32>
    %cst_47 = arith.constant 5.000000e-01 : f32
    %127 = vector.broadcast %cst_47 : f32 to vector<4x128xf32>
    %128 = arith.mulf %127, %126 : vector<4x128xf32>
    %129 = math.tanh %128 : vector<4x128xf32>
    %cst_48 = arith.constant 5.000000e-01 : f32
    %130 = vector.broadcast %cst_48 : f32 to vector<4x128xf32>
    %131 = arith.mulf %130, %129 : vector<4x128xf32>
    %cst_49 = arith.constant 5.000000e-01 : f32
    %132 = vector.broadcast %cst_49 : f32 to vector<4x128xf32>
    %133 = arith.addf %131, %132 : vector<4x128xf32>
    %134 = math.tanh %126 : vector<4x128xf32>
    %135 = arith.select %5, %134, %133 : vector<4x128xi1>, vector<4x128xf32>
    %136 = vector.extract_strided_slice %135 {offsets = [0, 0], sizes = [4, 32], strides = [1, 1]} : vector<4x128xf32> to vector<4x32xf32>
    %137 = vector.extract_strided_slice %135 {offsets = [0, 32], sizes = [4, 32], strides = [1, 1]} : vector<4x128xf32> to vector<4x32xf32>
    %138 = vector.extract_strided_slice %135 {offsets = [0, 64], sizes = [4, 32], strides = [1, 1]} : vector<4x128xf32> to vector<4x32xf32>
    %139 = vector.extract_strided_slice %135 {offsets = [0, 96], sizes = [4, 32], strides = [1, 1]} : vector<4x128xf32> to vector<4x32xf32>
    %140 = arith.mulf %137, %103 : vector<4x32xf32>
    %141 = arith.mulf %136, %138 : vector<4x32xf32>
    %142 = arith.addf %140, %141 : vector<4x32xf32>
    %143 = math.tanh %142 : vector<4x32xf32>
    %144 = arith.mulf %139, %143 : vector<4x32xf32>
    %c2_50 = arith.constant 2 : index
    %c0_51 = arith.constant 0 : index
    %c0_52 = arith.constant 0 : index
    %145 = vector.load %arg1[%c2_50, %c0_51, %c0_52] : memref<8x4x1xf32, #tpu.memory_space<vmem>>, vector<1x4x1xf32>
    %146 = vector.shape_cast %145 : vector<1x4x1xf32> to vector<4x1xf32>
    %cst_53 = arith.constant 0.000000e+00 : f32
    %147 = vector.broadcast %cst_53 : f32 to vector<4x1xf32>
    %148 = arith.cmpf ogt, %146, %147 : vector<4x1xf32>
    %149 = vector.shape_cast %148 : vector<4x1xi1> to vector<4x1xi1>
    %150 = vector.broadcast %149 : vector<4x1xi1> to vector<4x32xi1>
    %151 = arith.select %150, %142, %103 : vector<4x32xi1>, vector<4x32xf32>
    %cst_54 = arith.constant 0.000000e+00 : f32
    %152 = vector.shape_cast %148 : vector<4x1xi1> to vector<4x1xi1>
    %153 = vector.broadcast %152 : vector<4x1xi1> to vector<4x32xi1>
    %154 = vector.broadcast %cst_54 : f32 to vector<4x32xf32>
    %155 = arith.select %153, %144, %154 : vector<4x32xi1>, vector<4x32xf32>
    %156 = vector.extract_strided_slice %155 {offsets = [0, 0], sizes = [2, 32], strides = [1, 1]} : vector<4x32xf32> to vector<2x32xf32>
    %c2_55 = arith.constant 2 : index
    %c0_56 = arith.constant 0 : index
    %c0_57 = arith.constant 0 : index
    %157 = vector.load %arg16[%c2_55, %c0_56, %c0_57] : memref<8x2x32xf32, #tpu.memory_space<vmem>>, vector<1x2x32xf32>
    %158 = vector.shape_cast %157 : vector<1x2x32xf32> to vector<2x32xf32>
    %159 = vector.shape_cast %156 : vector<2x32xf32> to vector<1x2x32xf32>
    tpu.vector_store %arg16[%c2_55, %c0_56, %c0_57], %159 {strides = array<i32>} : memref<8x2x32xf32, #tpu.memory_space<vmem>>, vector<1x2x32xf32>,
    %160 = vector.extract_strided_slice %155 {offsets = [2, 0], sizes = [2, 32], strides = [1, 1]} : vector<4x32xf32> to vector<2x32xf32>
    %c5 = arith.constant 5 : index
    %c0_58 = arith.constant 0 : index
    %c0_59 = arith.constant 0 : index
    %161 = vector.load %arg17[%c5, %c0_58, %c0_59] : memref<8x2x32xf32, #tpu.memory_space<vmem>>, vector<1x2x32xf32>
    %162 = vector.shape_cast %161 : vector<1x2x32xf32> to vector<2x32xf32>
    %163 = vector.shape_cast %160 : vector<2x32xf32> to vector<1x2x32xf32>
    tpu.vector_store %arg17[%c5, %c0_58, %c0_59], %163 {strides = array<i32>} : memref<8x2x32xf32, #tpu.memory_space<vmem>>, vector<1x2x32xf32>,
    %164 = tpu.concatenate %144, %144 in 1 : vector<4x32xf32>, vector<4x32xf32> -> vector<4x64xf32>
    %165 = vector.broadcast %148 : vector<4x1xi1> to vector<4x64xi1>
    %166 = arith.andi %165, %18 : vector<4x64xi1>
    %167 = arith.select %166, %164, %119 : vector<4x64xi1>, vector<4x64xf32>
    %168 = arith.truncf %167 : vector<4x64xf32> to vector<4x64xbf16>
    %cst_60 = arith.constant dense<0.000000e+00> : vector<4x128xf32>
    %169 = tpu.matmul %168, %20, %cst_60 {dimension_numbers = #tpu.dot_dimension_numbers<[1], [0], [0], [1], [0, 0, 1, 1], [], []>} : vector<4x64xbf16>, vector<64x128xbf16>, vector<4x128xf32> -> vector<4x128xf32>
    %c3 = arith.constant 3 : index
    %c0_61 = arith.constant 0 : index
    %c0_62 = arith.constant 0 : index
    %170 = vector.load %arg0[%c3, %c0_61, %c0_62] : memref<8x4x64xbf16, #tpu.memory_space<vmem>>, vector<1x4x64xbf16>
    %171 = vector.shape_cast %170 : vector<1x4x64xbf16> to vector<4x64xbf16>
    %cst_63 = arith.constant dense<0.000000e+00> : vector<4x128xf32>
    %172 = tpu.matmul %171, %19, %cst_63 {dimension_numbers = #tpu.dot_dimension_numbers<[1], [0], [0], [1], [0, 0, 1, 1], [], []>} : vector<4x64xbf16>, vector<64x128xbf16>, vector<4x128xf32> -> vector<4x128xf32>
    %173 = arith.addf %172, %21 : vector<4x128xf32>
    %174 = arith.addf %173, %169 : vector<4x128xf32>
    %cst_64 = arith.constant 5.000000e-01 : f32
    %175 = vector.broadcast %cst_64 : f32 to vector<4x128xf32>
    %176 = arith.mulf %175, %174 : vector<4x128xf32>
    %177 = math.tanh %176 : vector<4x128xf32>
    %cst_65 = arith.constant 5.000000e-01 : f32
    %178 = vector.broadcast %cst_65 : f32 to vector<4x128xf32>
    %179 = arith.mulf %178, %177 : vector<4x128xf32>
    %cst_66 = arith.constant 5.000000e-01 : f32
    %180 = vector.broadcast %cst_66 : f32 to vector<4x128xf32>
    %181 = arith.addf %179, %180 : vector<4x128xf32>
    %182 = math.tanh %174 : vector<4x128xf32>
    %183 = arith.select %5, %182, %181 : vector<4x128xi1>, vector<4x128xf32>
    %184 = vector.extract_strided_slice %183 {offsets = [0, 0], sizes = [4, 32], strides = [1, 1]} : vector<4x128xf32> to vector<4x32xf32>
    %185 = vector.extract_strided_slice %183 {offsets = [0, 32], sizes = [4, 32], strides = [1, 1]} : vector<4x128xf32> to vector<4x32xf32>
    %186 = vector.extract_strided_slice %183 {offsets = [0, 64], sizes = [4, 32], strides = [1, 1]} : vector<4x128xf32> to vector<4x32xf32>
    %187 = vector.extract_strided_slice %183 {offsets = [0, 96], sizes = [4, 32], strides = [1, 1]} : vector<4x128xf32> to vector<4x32xf32>
    %188 = arith.mulf %185, %151 : vector<4x32xf32>
    %189 = arith.mulf %184, %186 : vector<4x32xf32>
    %190 = arith.addf %188, %189 : vector<4x32xf32>
    %191 = math.tanh %190 : vector<4x32xf32>
    %192 = arith.mulf %187, %191 : vector<4x32xf32>
    %c3_67 = arith.constant 3 : index
    %c0_68 = arith.constant 0 : index
    %c0_69 = arith.constant 0 : index
    %193 = vector.load %arg1[%c3_67, %c0_68, %c0_69] : memref<8x4x1xf32, #tpu.memory_space<vmem>>, vector<1x4x1xf32>
    %194 = vector.shape_cast %193 : vector<1x4x1xf32> to vector<4x1xf32>
    %cst_70 = arith.constant 0.000000e+00 : f32
    %195 = vector.broadcast %cst_70 : f32 to vector<4x1xf32>
    %196 = arith.cmpf ogt, %194, %195 : vector<4x1xf32>
    %197 = vector.shape_cast %196 : vector<4x1xi1> to vector<4x1xi1>
    %198 = vector.broadcast %197 : vector<4x1xi1> to vector<4x32xi1>
    %199 = arith.select %198, %190, %151 : vector<4x32xi1>, vector<4x32xf32>
    %cst_71 = arith.constant 0.000000e+00 : f32
    %200 = vector.shape_cast %196 : vector<4x1xi1> to vector<4x1xi1>
    %201 = vector.broadcast %200 : vector<4x1xi1> to vector<4x32xi1>
    %202 = vector.broadcast %cst_71 : f32 to vector<4x32xf32>
    %203 = arith.select %201, %192, %202 : vector<4x32xi1>, vector<4x32xf32>
    %204 = vector.extract_strided_slice %203 {offsets = [0, 0], sizes = [2, 32], strides = [1, 1]} : vector<4x32xf32> to vector<2x32xf32>
    %c3_72 = arith.constant 3 : index
    %c0_73 = arith.constant 0 : index
    %c0_74 = arith.constant 0 : index
    %205 = vector.load %arg16[%c3_72, %c0_73, %c0_74] : memref<8x2x32xf32, #tpu.memory_space<vmem>>, vector<1x2x32xf32>
    %206 = vector.shape_cast %205 : vector<1x2x32xf32> to vector<2x32xf32>
    %207 = vector.shape_cast %204 : vector<2x32xf32> to vector<1x2x32xf32>
    tpu.vector_store %arg16[%c3_72, %c0_73, %c0_74], %207 {strides = array<i32>} : memref<8x2x32xf32, #tpu.memory_space<vmem>>, vector<1x2x32xf32>,
    %208 = vector.extract_strided_slice %203 {offsets = [2, 0], sizes = [2, 32], strides = [1, 1]} : vector<4x32xf32> to vector<2x32xf32>
    %c4 = arith.constant 4 : index
    %c0_75 = arith.constant 0 : index
    %c0_76 = arith.constant 0 : index
    %209 = vector.load %arg17[%c4, %c0_75, %c0_76] : memref<8x2x32xf32, #tpu.memory_space<vmem>>, vector<1x2x32xf32>
    %210 = vector.shape_cast %209 : vector<1x2x32xf32> to vector<2x32xf32>
    %211 = vector.shape_cast %208 : vector<2x32xf32> to vector<1x2x32xf32>
    tpu.vector_store %arg17[%c4, %c0_75, %c0_76], %211 {strides = array<i32>} : memref<8x2x32xf32, #tpu.memory_space<vmem>>, vector<1x2x32xf32>,
    %212 = tpu.concatenate %192, %192 in 1 : vector<4x32xf32>, vector<4x32xf32> -> vector<4x64xf32>
    %213 = vector.broadcast %196 : vector<4x1xi1> to vector<4x64xi1>
    %214 = arith.andi %213, %18 : vector<4x64xi1>
    %215 = arith.select %214, %212, %167 : vector<4x64xi1>, vector<4x64xf32>
    %216 = arith.truncf %215 : vector<4x64xf32> to vector<4x64xbf16>
    %cst_77 = arith.constant dense<0.000000e+00> : vector<4x128xf32>
    %217 = tpu.matmul %216, %20, %cst_77 {dimension_numbers = #tpu.dot_dimension_numbers<[1], [0], [0], [1], [0, 0, 1, 1], [], []>} : vector<4x64xbf16>, vector<64x128xbf16>, vector<4x128xf32> -> vector<4x128xf32>
    %c4_78 = arith.constant 4 : index
    %c0_79 = arith.constant 0 : index
    %c0_80 = arith.constant 0 : index
    %218 = vector.load %arg0[%c4_78, %c0_79, %c0_80] : memref<8x4x64xbf16, #tpu.memory_space<vmem>>, vector<1x4x64xbf16>
    %219 = vector.shape_cast %218 : vector<1x4x64xbf16> to vector<4x64xbf16>
    %cst_81 = arith.constant dense<0.000000e+00> : vector<4x128xf32>
    %220 = tpu.matmul %219, %19, %cst_81 {dimension_numbers = #tpu.dot_dimension_numbers<[1], [0], [0], [1], [0, 0, 1, 1], [], []>} : vector<4x64xbf16>, vector<64x128xbf16>, vector<4x128xf32> -> vector<4x128xf32>
    %221 = arith.addf %220, %21 : vector<4x128xf32>
    %222 = arith.addf %221, %217 : vector<4x128xf32>
    %cst_82 = arith.constant 5.000000e-01 : f32
    %223 = vector.broadcast %cst_82 : f32 to vector<4x128xf32>
    %224 = arith.mulf %223, %222 : vector<4x128xf32>
    %225 = math.tanh %224 : vector<4x128xf32>
    %cst_83 = arith.constant 5.000000e-01 : f32
    %226 = vector.broadcast %cst_83 : f32 to vector<4x128xf32>
    %227 = arith.mulf %226, %225 : vector<4x128xf32>
    %cst_84 = arith.constant 5.000000e-01 : f32
    %228 = vector.broadcast %cst_84 : f32 to vector<4x128xf32>
    %229 = arith.addf %227, %228 : vector<4x128xf32>
    %230 = math.tanh %222 : vector<4x128xf32>
    %231 = arith.select %5, %230, %229 : vector<4x128xi1>, vector<4x128xf32>
    %232 = vector.extract_strided_slice %231 {offsets = [0, 0], sizes = [4, 32], strides = [1, 1]} : vector<4x128xf32> to vector<4x32xf32>
    %233 = vector.extract_strided_slice %231 {offsets = [0, 32], sizes = [4, 32], strides = [1, 1]} : vector<4x128xf32> to vector<4x32xf32>
    %234 = vector.extract_strided_slice %231 {offsets = [0, 64], sizes = [4, 32], strides = [1, 1]} : vector<4x128xf32> to vector<4x32xf32>
    %235 = vector.extract_strided_slice %231 {offsets = [0, 96], sizes = [4, 32], strides = [1, 1]} : vector<4x128xf32> to vector<4x32xf32>
    %236 = arith.mulf %233, %199 : vector<4x32xf32>
    %237 = arith.mulf %232, %234 : vector<4x32xf32>
    %238 = arith.addf %236, %237 : vector<4x32xf32>
    %239 = math.tanh %238 : vector<4x32xf32>
    %240 = arith.mulf %235, %239 : vector<4x32xf32>
    %c4_85 = arith.constant 4 : index
    %c0_86 = arith.constant 0 : index
    %c0_87 = arith.constant 0 : index
    %241 = vector.load %arg1[%c4_85, %c0_86, %c0_87] : memref<8x4x1xf32, #tpu.memory_space<vmem>>, vector<1x4x1xf32>
    %242 = vector.shape_cast %241 : vector<1x4x1xf32> to vector<4x1xf32>
    %cst_88 = arith.constant 0.000000e+00 : f32
    %243 = vector.broadcast %cst_88 : f32 to vector<4x1xf32>
    %244 = arith.cmpf ogt, %242, %243 : vector<4x1xf32>
    %245 = vector.shape_cast %244 : vector<4x1xi1> to vector<4x1xi1>
    %246 = vector.broadcast %245 : vector<4x1xi1> to vector<4x32xi1>
    %247 = arith.select %246, %238, %199 : vector<4x32xi1>, vector<4x32xf32>
    %cst_89 = arith.constant 0.000000e+00 : f32
    %248 = vector.shape_cast %244 : vector<4x1xi1> to vector<4x1xi1>
    %249 = vector.broadcast %248 : vector<4x1xi1> to vector<4x32xi1>
    %250 = vector.broadcast %cst_89 : f32 to vector<4x32xf32>
    %251 = arith.select %249, %240, %250 : vector<4x32xi1>, vector<4x32xf32>
    %252 = vector.extract_strided_slice %251 {offsets = [0, 0], sizes = [2, 32], strides = [1, 1]} : vector<4x32xf32> to vector<2x32xf32>
    %c4_90 = arith.constant 4 : index
    %c0_91 = arith.constant 0 : index
    %c0_92 = arith.constant 0 : index
    %253 = vector.load %arg16[%c4_90, %c0_91, %c0_92] : memref<8x2x32xf32, #tpu.memory_space<vmem>>, vector<1x2x32xf32>
    %254 = vector.shape_cast %253 : vector<1x2x32xf32> to vector<2x32xf32>
    %255 = vector.shape_cast %252 : vector<2x32xf32> to vector<1x2x32xf32>
    tpu.vector_store %arg16[%c4_90, %c0_91, %c0_92], %255 {strides = array<i32>} : memref<8x2x32xf32, #tpu.memory_space<vmem>>, vector<1x2x32xf32>,
    %256 = vector.extract_strided_slice %251 {offsets = [2, 0], sizes = [2, 32], strides = [1, 1]} : vector<4x32xf32> to vector<2x32xf32>
    %c3_93 = arith.constant 3 : index
    %c0_94 = arith.constant 0 : index
    %c0_95 = arith.constant 0 : index
    %257 = vector.load %arg17[%c3_93, %c0_94, %c0_95] : memref<8x2x32xf32, #tpu.memory_space<vmem>>, vector<1x2x32xf32>
    %258 = vector.shape_cast %257 : vector<1x2x32xf32> to vector<2x32xf32>
    %259 = vector.shape_cast %256 : vector<2x32xf32> to vector<1x2x32xf32>
    tpu.vector_store %arg17[%c3_93, %c0_94, %c0_95], %259 {strides = array<i32>} : memref<8x2x32xf32, #tpu.memory_space<vmem>>, vector<1x2x32xf32>,
    %260 = tpu.concatenate %240, %240 in 1 : vector<4x32xf32>, vector<4x32xf32> -> vector<4x64xf32>
    %261 = vector.broadcast %244 : vector<4x1xi1> to vector<4x64xi1>
    %262 = arith.andi %261, %18 : vector<4x64xi1>
    %263 = arith.select %262, %260, %215 : vector<4x64xi1>, vector<4x64xf32>
    %264 = arith.truncf %263 : vector<4x64xf32> to vector<4x64xbf16>
    %cst_96 = arith.constant dense<0.000000e+00> : vector<4x128xf32>
    %265 = tpu.matmul %264, %20, %cst_96 {dimension_numbers = #tpu.dot_dimension_numbers<[1], [0], [0], [1], [0, 0, 1, 1], [], []>} : vector<4x64xbf16>, vector<64x128xbf16>, vector<4x128xf32> -> vector<4x128xf32>
    %c5_97 = arith.constant 5 : index
    %c0_98 = arith.constant 0 : index
    %c0_99 = arith.constant 0 : index
    %266 = vector.load %arg0[%c5_97, %c0_98, %c0_99] : memref<8x4x64xbf16, #tpu.memory_space<vmem>>, vector<1x4x64xbf16>
    %267 = vector.shape_cast %266 : vector<1x4x64xbf16> to vector<4x64xbf16>
    %cst_100 = arith.constant dense<0.000000e+00> : vector<4x128xf32>
    %268 = tpu.matmul %267, %19, %cst_100 {dimension_numbers = #tpu.dot_dimension_numbers<[1], [0], [0], [1], [0, 0, 1, 1], [], []>} : vector<4x64xbf16>, vector<64x128xbf16>, vector<4x128xf32> -> vector<4x128xf32>
    %269 = arith.addf %268, %21 : vector<4x128xf32>
    %270 = arith.addf %269, %265 : vector<4x128xf32>
    %cst_101 = arith.constant 5.000000e-01 : f32
    %271 = vector.broadcast %cst_101 : f32 to vector<4x128xf32>
    %272 = arith.mulf %271, %270 : vector<4x128xf32>
    %273 = math.tanh %272 : vector<4x128xf32>
    %cst_102 = arith.constant 5.000000e-01 : f32
    %274 = vector.broadcast %cst_102 : f32 to vector<4x128xf32>
    %275 = arith.mulf %274, %273 : vector<4x128xf32>
    %cst_103 = arith.constant 5.000000e-01 : f32
    %276 = vector.broadcast %cst_103 : f32 to vector<4x128xf32>
    %277 = arith.addf %275, %276 : vector<4x128xf32>
    %278 = math.tanh %270 : vector<4x128xf32>
    %279 = arith.select %5, %278, %277 : vector<4x128xi1>, vector<4x128xf32>
    %280 = vector.extract_strided_slice %279 {offsets = [0, 0], sizes = [4, 32], strides = [1, 1]} : vector<4x128xf32> to vector<4x32xf32>
    %281 = vector.extract_strided_slice %279 {offsets = [0, 32], sizes = [4, 32], strides = [1, 1]} : vector<4x128xf32> to vector<4x32xf32>
    %282 = vector.extract_strided_slice %279 {offsets = [0, 64], sizes = [4, 32], strides = [1, 1]} : vector<4x128xf32> to vector<4x32xf32>
    %283 = vector.extract_strided_slice %279 {offsets = [0, 96], sizes = [4, 32], strides = [1, 1]} : vector<4x128xf32> to vector<4x32xf32>
    %284 = arith.mulf %281, %247 : vector<4x32xf32>
    %285 = arith.mulf %280, %282 : vector<4x32xf32>
    %286 = arith.addf %284, %285 : vector<4x32xf32>
    %287 = math.tanh %286 : vector<4x32xf32>
    %288 = arith.mulf %283, %287 : vector<4x32xf32>
    %c5_104 = arith.constant 5 : index
    %c0_105 = arith.constant 0 : index
    %c0_106 = arith.constant 0 : index
    %289 = vector.load %arg1[%c5_104, %c0_105, %c0_106] : memref<8x4x1xf32, #tpu.memory_space<vmem>>, vector<1x4x1xf32>
    %290 = vector.shape_cast %289 : vector<1x4x1xf32> to vector<4x1xf32>
    %cst_107 = arith.constant 0.000000e+00 : f32
    %291 = vector.broadcast %cst_107 : f32 to vector<4x1xf32>
    %292 = arith.cmpf ogt, %290, %291 : vector<4x1xf32>
    %293 = vector.shape_cast %292 : vector<4x1xi1> to vector<4x1xi1>
    %294 = vector.broadcast %293 : vector<4x1xi1> to vector<4x32xi1>
    %295 = arith.select %294, %286, %247 : vector<4x32xi1>, vector<4x32xf32>
    %cst_108 = arith.constant 0.000000e+00 : f32
    %296 = vector.shape_cast %292 : vector<4x1xi1> to vector<4x1xi1>
    %297 = vector.broadcast %296 : vector<4x1xi1> to vector<4x32xi1>
    %298 = vector.broadcast %cst_108 : f32 to vector<4x32xf32>
    %299 = arith.select %297, %288, %298 : vector<4x32xi1>, vector<4x32xf32>
    %300 = vector.extract_strided_slice %299 {offsets = [0, 0], sizes = [2, 32], strides = [1, 1]} : vector<4x32xf32> to vector<2x32xf32>
    %c5_109 = arith.constant 5 : index
    %c0_110 = arith.constant 0 : index
    %c0_111 = arith.constant 0 : index
    %301 = vector.load %arg16[%c5_109, %c0_110, %c0_111] : memref<8x2x32xf32, #tpu.memory_space<vmem>>, vector<1x2x32xf32>
    %302 = vector.shape_cast %301 : vector<1x2x32xf32> to vector<2x32xf32>
    %303 = vector.shape_cast %300 : vector<2x32xf32> to vector<1x2x32xf32>
    tpu.vector_store %arg16[%c5_109, %c0_110, %c0_111], %303 {strides = array<i32>} : memref<8x2x32xf32, #tpu.memory_space<vmem>>, vector<1x2x32xf32>,
    %304 = vector.extract_strided_slice %299 {offsets = [2, 0], sizes = [2, 32], strides = [1, 1]} : vector<4x32xf32> to vector<2x32xf32>
    %c2_112 = arith.constant 2 : index
    %c0_113 = arith.constant 0 : index
    %c0_114 = arith.constant 0 : index
    %305 = vector.load %arg17[%c2_112, %c0_113, %c0_114] : memref<8x2x32xf32, #tpu.memory_space<vmem>>, vector<1x2x32xf32>
    %306 = vector.shape_cast %305 : vector<1x2x32xf32> to vector<2x32xf32>
    %307 = vector.shape_cast %304 : vector<2x32xf32> to vector<1x2x32xf32>
    tpu.vector_store %arg17[%c2_112, %c0_113, %c0_114], %307 {strides = array<i32>} : memref<8x2x32xf32, #tpu.memory_space<vmem>>, vector<1x2x32xf32>,
    %308 = tpu.concatenate %288, %288 in 1 : vector<4x32xf32>, vector<4x32xf32> -> vector<4x64xf32>
    %309 = vector.broadcast %292 : vector<4x1xi1> to vector<4x64xi1>
    %310 = arith.andi %309, %18 : vector<4x64xi1>
    %311 = arith.select %310, %308, %263 : vector<4x64xi1>, vector<4x64xf32>
    %312 = arith.truncf %311 : vector<4x64xf32> to vector<4x64xbf16>
    %cst_115 = arith.constant dense<0.000000e+00> : vector<4x128xf32>
    %313 = tpu.matmul %312, %20, %cst_115 {dimension_numbers = #tpu.dot_dimension_numbers<[1], [0], [0], [1], [0, 0, 1, 1], [], []>} : vector<4x64xbf16>, vector<64x128xbf16>, vector<4x128xf32> -> vector<4x128xf32>
    %c6_116 = arith.constant 6 : index
    %c0_117 = arith.constant 0 : index
    %c0_118 = arith.constant 0 : index
    %314 = vector.load %arg0[%c6_116, %c0_117, %c0_118] : memref<8x4x64xbf16, #tpu.memory_space<vmem>>, vector<1x4x64xbf16>
    %315 = vector.shape_cast %314 : vector<1x4x64xbf16> to vector<4x64xbf16>
    %cst_119 = arith.constant dense<0.000000e+00> : vector<4x128xf32>
    %316 = tpu.matmul %315, %19, %cst_119 {dimension_numbers = #tpu.dot_dimension_numbers<[1], [0], [0], [1], [0, 0, 1, 1], [], []>} : vector<4x64xbf16>, vector<64x128xbf16>, vector<4x128xf32> -> vector<4x128xf32>
    %317 = arith.addf %316, %21 : vector<4x128xf32>
    %318 = arith.addf %317, %313 : vector<4x128xf32>
    %cst_120 = arith.constant 5.000000e-01 : f32
    %319 = vector.broadcast %cst_120 : f32 to vector<4x128xf32>
    %320 = arith.mulf %319, %318 : vector<4x128xf32>
    %321 = math.tanh %320 : vector<4x128xf32>
    %cst_121 = arith.constant 5.000000e-01 : f32
    %322 = vector.broadcast %cst_121 : f32 to vector<4x128xf32>
    %323 = arith.mulf %322, %321 : vector<4x128xf32>
    %cst_122 = arith.constant 5.000000e-01 : f32
    %324 = vector.broadcast %cst_122 : f32 to vector<4x128xf32>
    %325 = arith.addf %323, %324 : vector<4x128xf32>
    %326 = math.tanh %318 : vector<4x128xf32>
    %327 = arith.select %5, %326, %325 : vector<4x128xi1>, vector<4x128xf32>
    %328 = vector.extract_strided_slice %327 {offsets = [0, 0], sizes = [4, 32], strides = [1, 1]} : vector<4x128xf32> to vector<4x32xf32>
    %329 = vector.extract_strided_slice %327 {offsets = [0, 32], sizes = [4, 32], strides = [1, 1]} : vector<4x128xf32> to vector<4x32xf32>
    %330 = vector.extract_strided_slice %327 {offsets = [0, 64], sizes = [4, 32], strides = [1, 1]} : vector<4x128xf32> to vector<4x32xf32>
    %331 = vector.extract_strided_slice %327 {offsets = [0, 96], sizes = [4, 32], strides = [1, 1]} : vector<4x128xf32> to vector<4x32xf32>
    %332 = arith.mulf %329, %295 : vector<4x32xf32>
    %333 = arith.mulf %328, %330 : vector<4x32xf32>
    %334 = arith.addf %332, %333 : vector<4x32xf32>
    %335 = math.tanh %334 : vector<4x32xf32>
    %336 = arith.mulf %331, %335 : vector<4x32xf32>
    %c6_123 = arith.constant 6 : index
    %c0_124 = arith.constant 0 : index
    %c0_125 = arith.constant 0 : index
    %337 = vector.load %arg1[%c6_123, %c0_124, %c0_125] : memref<8x4x1xf32, #tpu.memory_space<vmem>>, vector<1x4x1xf32>
    %338 = vector.shape_cast %337 : vector<1x4x1xf32> to vector<4x1xf32>
    %cst_126 = arith.constant 0.000000e+00 : f32
    %339 = vector.broadcast %cst_126 : f32 to vector<4x1xf32>
    %340 = arith.cmpf ogt, %338, %339 : vector<4x1xf32>
    %341 = vector.shape_cast %340 : vector<4x1xi1> to vector<4x1xi1>
    %342 = vector.broadcast %341 : vector<4x1xi1> to vector<4x32xi1>
    %343 = arith.select %342, %334, %295 : vector<4x32xi1>, vector<4x32xf32>
    %cst_127 = arith.constant 0.000000e+00 : f32
    %344 = vector.shape_cast %340 : vector<4x1xi1> to vector<4x1xi1>
    %345 = vector.broadcast %344 : vector<4x1xi1> to vector<4x32xi1>
    %346 = vector.broadcast %cst_127 : f32 to vector<4x32xf32>
    %347 = arith.select %345, %336, %346 : vector<4x32xi1>, vector<4x32xf32>
    %348 = vector.extract_strided_slice %347 {offsets = [0, 0], sizes = [2, 32], strides = [1, 1]} : vector<4x32xf32> to vector<2x32xf32>
    %c6_128 = arith.constant 6 : index
    %c0_129 = arith.constant 0 : index
    %c0_130 = arith.constant 0 : index
    %349 = vector.load %arg16[%c6_128, %c0_129, %c0_130] : memref<8x2x32xf32, #tpu.memory_space<vmem>>, vector<1x2x32xf32>
    %350 = vector.shape_cast %349 : vector<1x2x32xf32> to vector<2x32xf32>
    %351 = vector.shape_cast %348 : vector<2x32xf32> to vector<1x2x32xf32>
    tpu.vector_store %arg16[%c6_128, %c0_129, %c0_130], %351 {strides = array<i32>} : memref<8x2x32xf32, #tpu.memory_space<vmem>>, vector<1x2x32xf32>,
    %352 = vector.extract_strided_slice %347 {offsets = [2, 0], sizes = [2, 32], strides = [1, 1]} : vector<4x32xf32> to vector<2x32xf32>
    %c1_131 = arith.constant 1 : index
    %c0_132 = arith.constant 0 : index
    %c0_133 = arith.constant 0 : index
    %353 = vector.load %arg17[%c1_131, %c0_132, %c0_133] : memref<8x2x32xf32, #tpu.memory_space<vmem>>, vector<1x2x32xf32>
    %354 = vector.shape_cast %353 : vector<1x2x32xf32> to vector<2x32xf32>
    %355 = vector.shape_cast %352 : vector<2x32xf32> to vector<1x2x32xf32>
    tpu.vector_store %arg17[%c1_131, %c0_132, %c0_133], %355 {strides = array<i32>} : memref<8x2x32xf32, #tpu.memory_space<vmem>>, vector<1x2x32xf32>,
    %356 = tpu.concatenate %336, %336 in 1 : vector<4x32xf32>, vector<4x32xf32> -> vector<4x64xf32>
    %357 = vector.broadcast %340 : vector<4x1xi1> to vector<4x64xi1>
    %358 = arith.andi %357, %18 : vector<4x64xi1>
    %359 = arith.select %358, %356, %311 : vector<4x64xi1>, vector<4x64xf32>
    %360 = arith.truncf %359 : vector<4x64xf32> to vector<4x64xbf16>
    %cst_134 = arith.constant dense<0.000000e+00> : vector<4x128xf32>
    %361 = tpu.matmul %360, %20, %cst_134 {dimension_numbers = #tpu.dot_dimension_numbers<[1], [0], [0], [1], [0, 0, 1, 1], [], []>} : vector<4x64xbf16>, vector<64x128xbf16>, vector<4x128xf32> -> vector<4x128xf32>
    %c7_135 = arith.constant 7 : index
    %c0_136 = arith.constant 0 : index
    %c0_137 = arith.constant 0 : index
    %362 = vector.load %arg0[%c7_135, %c0_136, %c0_137] : memref<8x4x64xbf16, #tpu.memory_space<vmem>>, vector<1x4x64xbf16>
    %363 = vector.shape_cast %362 : vector<1x4x64xbf16> to vector<4x64xbf16>
    %cst_138 = arith.constant dense<0.000000e+00> : vector<4x128xf32>
    %364 = tpu.matmul %363, %19, %cst_138 {dimension_numbers = #tpu.dot_dimension_numbers<[1], [0], [0], [1], [0, 0, 1, 1], [], []>} : vector<4x64xbf16>, vector<64x128xbf16>, vector<4x128xf32> -> vector<4x128xf32>
    %365 = arith.addf %364, %21 : vector<4x128xf32>
    %366 = arith.addf %365, %361 : vector<4x128xf32>
    %cst_139 = arith.constant 5.000000e-01 : f32
    %367 = vector.broadcast %cst_139 : f32 to vector<4x128xf32>
    %368 = arith.mulf %367, %366 : vector<4x128xf32>
    %369 = math.tanh %368 : vector<4x128xf32>
    %cst_140 = arith.constant 5.000000e-01 : f32
    %370 = vector.broadcast %cst_140 : f32 to vector<4x128xf32>
    %371 = arith.mulf %370, %369 : vector<4x128xf32>
    %cst_141 = arith.constant 5.000000e-01 : f32
    %372 = vector.broadcast %cst_141 : f32 to vector<4x128xf32>
    %373 = arith.addf %371, %372 : vector<4x128xf32>
    %374 = math.tanh %366 : vector<4x128xf32>
    %375 = arith.select %5, %374, %373 : vector<4x128xi1>, vector<4x128xf32>
    %376 = vector.extract_strided_slice %375 {offsets = [0, 0], sizes = [4, 32], strides = [1, 1]} : vector<4x128xf32> to vector<4x32xf32>
    %377 = vector.extract_strided_slice %375 {offsets = [0, 32], sizes = [4, 32], strides = [1, 1]} : vector<4x128xf32> to vector<4x32xf32>
    %378 = vector.extract_strided_slice %375 {offsets = [0, 64], sizes = [4, 32], strides = [1, 1]} : vector<4x128xf32> to vector<4x32xf32>
    %379 = vector.extract_strided_slice %375 {offsets = [0, 96], sizes = [4, 32], strides = [1, 1]} : vector<4x128xf32> to vector<4x32xf32>
    %380 = arith.mulf %377, %343 : vector<4x32xf32>
    %381 = arith.mulf %376, %378 : vector<4x32xf32>
    %382 = arith.addf %380, %381 : vector<4x32xf32>
    %383 = math.tanh %382 : vector<4x32xf32>
    %384 = arith.mulf %379, %383 : vector<4x32xf32>
    %c7_142 = arith.constant 7 : index
    %c0_143 = arith.constant 0 : index
    %c0_144 = arith.constant 0 : index
    %385 = vector.load %arg1[%c7_142, %c0_143, %c0_144] : memref<8x4x1xf32, #tpu.memory_space<vmem>>, vector<1x4x1xf32>
    %386 = vector.shape_cast %385 : vector<1x4x1xf32> to vector<4x1xf32>
    %cst_145 = arith.constant 0.000000e+00 : f32
    %387 = vector.broadcast %cst_145 : f32 to vector<4x1xf32>
    %388 = arith.cmpf ogt, %386, %387 : vector<4x1xf32>
    %cst_146 = arith.constant 0.000000e+00 : f32
    %389 = vector.shape_cast %388 : vector<4x1xi1> to vector<4x1xi1>
    %390 = vector.broadcast %389 : vector<4x1xi1> to vector<4x32xi1>
    %391 = vector.broadcast %cst_146 : f32 to vector<4x32xf32>
    %392 = arith.select %390, %384, %391 : vector<4x32xi1>, vector<4x32xf32>
    %393 = vector.extract_strided_slice %392 {offsets = [0, 0], sizes = [2, 32], strides = [1, 1]} : vector<4x32xf32> to vector<2x32xf32>
    %c7_147 = arith.constant 7 : index
    %c0_148 = arith.constant 0 : index
    %c0_149 = arith.constant 0 : index
    %394 = vector.load %arg16[%c7_147, %c0_148, %c0_149] : memref<8x2x32xf32, #tpu.memory_space<vmem>>, vector<1x2x32xf32>
    %395 = vector.shape_cast %394 : vector<1x2x32xf32> to vector<2x32xf32>
    %396 = vector.shape_cast %393 : vector<2x32xf32> to vector<1x2x32xf32>
    tpu.vector_store %arg16[%c7_147, %c0_148, %c0_149], %396 {strides = array<i32>} : memref<8x2x32xf32, #tpu.memory_space<vmem>>, vector<1x2x32xf32>,
    %397 = vector.extract_strided_slice %392 {offsets = [2, 0], sizes = [2, 32], strides = [1, 1]} : vector<4x32xf32> to vector<2x32xf32>
    %c0_150 = arith.constant 0 : index
    %c0_151 = arith.constant 0 : index
    %c0_152 = arith.constant 0 : index
    %398 = vector.load %arg17[%c0_150, %c0_151, %c0_152] : memref<8x2x32xf32, #tpu.memory_space<vmem>>, vector<1x2x32xf32>
    %399 = vector.shape_cast %398 : vector<1x2x32xf32> to vector<2x32xf32>
    %400 = vector.shape_cast %397 : vector<2x32xf32> to vector<1x2x32xf32>
    tpu.vector_store %arg17[%c0_150, %c0_151, %c0_152], %400 {strides = array<i32>} : memref<8x2x32xf32, #tpu.memory_space<vmem>>, vector<1x2x32xf32>,
    %c0_153 = arith.constant 0 : index
    %c0_154 = arith.constant 0 : index
    %401 = vector.load %arg7[%c0_153, %c0_154] : memref<64x128xbf16, #tpu.memory_space<vmem>>, vector<64x128xbf16>
    %c0_155 = arith.constant 0 : index
    %c0_156 = arith.constant 0 : index
    %402 = vector.load %arg8[%c0_155, %c0_156] : memref<64x128xbf16, #tpu.memory_space<vmem>>, vector<64x128xbf16>
    %c0_157 = arith.constant 0 : index
    %c0_158 = arith.constant 0 : index
    %403 = vector.load %arg10[%c0_157, %c0_158] : memref<64x128xbf16, #tpu.memory_space<vmem>>, vector<64x128xbf16>
    %c0_159 = arith.constant 0 : index
    %c0_160 = arith.constant 0 : index
    %404 = vector.load %arg9[%c0_159, %c0_160] : memref<4x128xf32, #tpu.memory_space<vmem>>, vector<4x128xf32>
    %cst_161 = arith.constant 0.000000e+00 : f32
    %405 = vector.broadcast %cst_161 : f32 to vector<4x64xf32>
    %cst_162 = arith.constant 0.000000e+00 : f32
    %406 = vector.broadcast %cst_162 : f32 to vector<4x32xf32>
    %407 = arith.truncf %405 : vector<4x64xf32> to vector<4x64xbf16>
    %cst_163 = arith.constant dense<0.000000e+00> : vector<4x128xf32>
    %408 = tpu.matmul %407, %403, %cst_163 {dimension_numbers = #tpu.dot_dimension_numbers<[1], [0], [0], [1], [0, 0, 1, 1], [], []>} : vector<4x64xbf16>, vector<64x128xbf16>, vector<4x128xf32> -> vector<4x128xf32>
    %c0_164 = arith.constant 0 : index
    %c0_165 = arith.constant 0 : index
    %c0_166 = arith.constant 0 : index
    %409 = vector.load %arg16[%c0_164, %c0_165, %c0_166] : memref<8x2x32xf32, #tpu.memory_space<vmem>>, vector<1x2x32xf32>
    %410 = vector.shape_cast %409 : vector<1x2x32xf32> to vector<2x32xf32>
    %c0_167 = arith.constant 0 : index
    %c0_168 = arith.constant 0 : index
    %c0_169 = arith.constant 0 : index
    %411 = vector.load %arg17[%c0_167, %c0_168, %c0_169] : memref<8x2x32xf32, #tpu.memory_space<vmem>>, vector<1x2x32xf32>
    %412 = vector.shape_cast %411 : vector<1x2x32xf32> to vector<2x32xf32>
    %413 = tpu.concatenate %410, %412 in 1 : vector<2x32xf32>, vector<2x32xf32> -> vector<2x64xf32>
    %414 = arith.truncf %413 : vector<2x64xf32> to vector<2x64xbf16>
    %c7_170 = arith.constant 7 : index
    %c0_171 = arith.constant 0 : index
    %c0_172 = arith.constant 0 : index
    %415 = vector.load %arg16[%c7_170, %c0_171, %c0_172] : memref<8x2x32xf32, #tpu.memory_space<vmem>>, vector<1x2x32xf32>
    %416 = vector.shape_cast %415 : vector<1x2x32xf32> to vector<2x32xf32>
    %c7_173 = arith.constant 7 : index
    %c0_174 = arith.constant 0 : index
    %c0_175 = arith.constant 0 : index
    %417 = vector.load %arg17[%c7_173, %c0_174, %c0_175] : memref<8x2x32xf32, #tpu.memory_space<vmem>>, vector<1x2x32xf32>
    %418 = vector.shape_cast %417 : vector<1x2x32xf32> to vector<2x32xf32>
    %419 = tpu.concatenate %416, %418 in 1 : vector<2x32xf32>, vector<2x32xf32> -> vector<2x64xf32>
    %420 = arith.truncf %419 : vector<2x64xf32> to vector<2x64xbf16>
    %cst_176 = arith.constant dense<0.000000e+00> : vector<2x128xf32>
    %421 = tpu.matmul %414, %401, %cst_176 {dimension_numbers = #tpu.dot_dimension_numbers<[1], [0], [0], [1], [0, 0, 1, 1], [], []>} : vector<2x64xbf16>, vector<64x128xbf16>, vector<2x128xf32> -> vector<2x128xf32>
    %cst_177 = arith.constant dense<0.000000e+00> : vector<2x128xf32>
    %422 = tpu.matmul %420, %402, %cst_177 {dimension_numbers = #tpu.dot_dimension_numbers<[1], [0], [0], [1], [0, 0, 1, 1], [], []>} : vector<2x64xbf16>, vector<64x128xbf16>, vector<2x128xf32> -> vector<2x128xf32>
    %423 = tpu.concatenate %421, %422 in 0 : vector<2x128xf32>, vector<2x128xf32> -> vector<4x128xf32>
    %424 = arith.addf %423, %404 : vector<4x128xf32>
    %425 = arith.addf %424, %408 : vector<4x128xf32>
    %cst_178 = arith.constant 5.000000e-01 : f32
    %426 = vector.broadcast %cst_178 : f32 to vector<4x128xf32>
    %427 = arith.mulf %426, %425 : vector<4x128xf32>
    %428 = math.tanh %427 : vector<4x128xf32>
    %cst_179 = arith.constant 5.000000e-01 : f32
    %429 = vector.broadcast %cst_179 : f32 to vector<4x128xf32>
    %430 = arith.mulf %429, %428 : vector<4x128xf32>
    %cst_180 = arith.constant 5.000000e-01 : f32
    %431 = vector.broadcast %cst_180 : f32 to vector<4x128xf32>
    %432 = arith.addf %430, %431 : vector<4x128xf32>
    %433 = math.tanh %425 : vector<4x128xf32>
    %434 = arith.select %5, %433, %432 : vector<4x128xi1>, vector<4x128xf32>
    %435 = vector.extract_strided_slice %434 {offsets = [0, 0], sizes = [4, 32], strides = [1, 1]} : vector<4x128xf32> to vector<4x32xf32>
    %436 = vector.extract_strided_slice %434 {offsets = [0, 32], sizes = [4, 32], strides = [1, 1]} : vector<4x128xf32> to vector<4x32xf32>
    %437 = vector.extract_strided_slice %434 {offsets = [0, 64], sizes = [4, 32], strides = [1, 1]} : vector<4x128xf32> to vector<4x32xf32>
    %438 = vector.extract_strided_slice %434 {offsets = [0, 96], sizes = [4, 32], strides = [1, 1]} : vector<4x128xf32> to vector<4x32xf32>
    %439 = arith.mulf %436, %406 : vector<4x32xf32>
    %440 = arith.mulf %435, %437 : vector<4x32xf32>
    %441 = arith.addf %439, %440 : vector<4x32xf32>
    %442 = math.tanh %441 : vector<4x32xf32>
    %443 = arith.mulf %438, %442 : vector<4x32xf32>
    %c0_181 = arith.constant 0 : index
    %c0_182 = arith.constant 0 : index
    %c0_183 = arith.constant 0 : index
    %444 = vector.load %arg1[%c0_181, %c0_182, %c0_183] : memref<8x4x1xf32, #tpu.memory_space<vmem>>, vector<1x4x1xf32>
    %445 = vector.shape_cast %444 : vector<1x4x1xf32> to vector<4x1xf32>
    %cst_184 = arith.constant 0.000000e+00 : f32
    %446 = vector.broadcast %cst_184 : f32 to vector<4x1xf32>
    %447 = arith.cmpf ogt, %445, %446 : vector<4x1xf32>
    %448 = vector.shape_cast %447 : vector<4x1xi1> to vector<4x1xi1>
    %449 = vector.broadcast %448 : vector<4x1xi1> to vector<4x32xi1>
    %450 = arith.select %449, %441, %406 : vector<4x32xi1>, vector<4x32xf32>
    %cst_185 = arith.constant 0.000000e+00 : f32
    %451 = vector.shape_cast %447 : vector<4x1xi1> to vector<4x1xi1>
    %452 = vector.broadcast %451 : vector<4x1xi1> to vector<4x32xi1>
    %453 = vector.broadcast %cst_185 : f32 to vector<4x32xf32>
    %454 = arith.select %452, %443, %453 : vector<4x32xi1>, vector<4x32xf32>
    %455 = vector.extract_strided_slice %454 {offsets = [0, 0], sizes = [2, 32], strides = [1, 1]} : vector<4x32xf32> to vector<2x32xf32>
    %c0_186 = arith.constant 0 : index
    %c0_187 = arith.constant 0 : index
    %c0_188 = arith.constant 0 : index
    %456 = vector.load %arg18[%c0_186, %c0_187, %c0_188] : memref<8x2x32xf32, #tpu.memory_space<vmem>>, vector<1x2x32xf32>
    %457 = vector.shape_cast %456 : vector<1x2x32xf32> to vector<2x32xf32>
    %458 = vector.shape_cast %455 : vector<2x32xf32> to vector<1x2x32xf32>
    tpu.vector_store %arg18[%c0_186, %c0_187, %c0_188], %458 {strides = array<i32>} : memref<8x2x32xf32, #tpu.memory_space<vmem>>, vector<1x2x32xf32>,
    %459 = vector.extract_strided_slice %454 {offsets = [2, 0], sizes = [2, 32], strides = [1, 1]} : vector<4x32xf32> to vector<2x32xf32>
    %c7_189 = arith.constant 7 : index
    %c0_190 = arith.constant 0 : index
    %c0_191 = arith.constant 0 : index
    %460 = vector.load %arg19[%c7_189, %c0_190, %c0_191] : memref<8x2x32xf32, #tpu.memory_space<vmem>>, vector<1x2x32xf32>
    %461 = vector.shape_cast %460 : vector<1x2x32xf32> to vector<2x32xf32>
    %462 = vector.shape_cast %459 : vector<2x32xf32> to vector<1x2x32xf32>
    tpu.vector_store %arg19[%c7_189, %c0_190, %c0_191], %462 {strides = array<i32>} : memref<8x2x32xf32, #tpu.memory_space<vmem>>, vector<1x2x32xf32>,
    %463 = tpu.concatenate %443, %443 in 1 : vector<4x32xf32>, vector<4x32xf32> -> vector<4x64xf32>
    %464 = vector.broadcast %447 : vector<4x1xi1> to vector<4x64xi1>
    %465 = arith.andi %464, %18 : vector<4x64xi1>
    %466 = arith.select %465, %463, %405 : vector<4x64xi1>, vector<4x64xf32>
    %467 = arith.truncf %466 : vector<4x64xf32> to vector<4x64xbf16>
    %cst_192 = arith.constant dense<0.000000e+00> : vector<4x128xf32>
    %468 = tpu.matmul %467, %403, %cst_192 {dimension_numbers = #tpu.dot_dimension_numbers<[1], [0], [0], [1], [0, 0, 1, 1], [], []>} : vector<4x64xbf16>, vector<64x128xbf16>, vector<4x128xf32> -> vector<4x128xf32>
    %c1_193 = arith.constant 1 : index
    %c0_194 = arith.constant 0 : index
    %c0_195 = arith.constant 0 : index
    %469 = vector.load %arg16[%c1_193, %c0_194, %c0_195] : memref<8x2x32xf32, #tpu.memory_space<vmem>>, vector<1x2x32xf32>
    %470 = vector.shape_cast %469 : vector<1x2x32xf32> to vector<2x32xf32>
    %c1_196 = arith.constant 1 : index
    %c0_197 = arith.constant 0 : index
    %c0_198 = arith.constant 0 : index
    %471 = vector.load %arg17[%c1_196, %c0_197, %c0_198] : memref<8x2x32xf32, #tpu.memory_space<vmem>>, vector<1x2x32xf32>
    %472 = vector.shape_cast %471 : vector<1x2x32xf32> to vector<2x32xf32>
    %473 = tpu.concatenate %470, %472 in 1 : vector<2x32xf32>, vector<2x32xf32> -> vector<2x64xf32>
    %474 = arith.truncf %473 : vector<2x64xf32> to vector<2x64xbf16>
    %c6_199 = arith.constant 6 : index
    %c0_200 = arith.constant 0 : index
    %c0_201 = arith.constant 0 : index
    %475 = vector.load %arg16[%c6_199, %c0_200, %c0_201] : memref<8x2x32xf32, #tpu.memory_space<vmem>>, vector<1x2x32xf32>
    %476 = vector.shape_cast %475 : vector<1x2x32xf32> to vector<2x32xf32>
    %c6_202 = arith.constant 6 : index
    %c0_203 = arith.constant 0 : index
    %c0_204 = arith.constant 0 : index
    %477 = vector.load %arg17[%c6_202, %c0_203, %c0_204] : memref<8x2x32xf32, #tpu.memory_space<vmem>>, vector<1x2x32xf32>
    %478 = vector.shape_cast %477 : vector<1x2x32xf32> to vector<2x32xf32>
    %479 = tpu.concatenate %476, %478 in 1 : vector<2x32xf32>, vector<2x32xf32> -> vector<2x64xf32>
    %480 = arith.truncf %479 : vector<2x64xf32> to vector<2x64xbf16>
    %cst_205 = arith.constant dense<0.000000e+00> : vector<2x128xf32>
    %481 = tpu.matmul %474, %401, %cst_205 {dimension_numbers = #tpu.dot_dimension_numbers<[1], [0], [0], [1], [0, 0, 1, 1], [], []>} : vector<2x64xbf16>, vector<64x128xbf16>, vector<2x128xf32> -> vector<2x128xf32>
    %cst_206 = arith.constant dense<0.000000e+00> : vector<2x128xf32>
    %482 = tpu.matmul %480, %402, %cst_206 {dimension_numbers = #tpu.dot_dimension_numbers<[1], [0], [0], [1], [0, 0, 1, 1], [], []>} : vector<2x64xbf16>, vector<64x128xbf16>, vector<2x128xf32> -> vector<2x128xf32>
    %483 = tpu.concatenate %481, %482 in 0 : vector<2x128xf32>, vector<2x128xf32> -> vector<4x128xf32>
    %484 = arith.addf %483, %404 : vector<4x128xf32>
    %485 = arith.addf %484, %468 : vector<4x128xf32>
    %cst_207 = arith.constant 5.000000e-01 : f32
    %486 = vector.broadcast %cst_207 : f32 to vector<4x128xf32>
    %487 = arith.mulf %486, %485 : vector<4x128xf32>
    %488 = math.tanh %487 : vector<4x128xf32>
    %cst_208 = arith.constant 5.000000e-01 : f32
    %489 = vector.broadcast %cst_208 : f32 to vector<4x128xf32>
    %490 = arith.mulf %489, %488 : vector<4x128xf32>
    %cst_209 = arith.constant 5.000000e-01 : f32
    %491 = vector.broadcast %cst_209 : f32 to vector<4x128xf32>
    %492 = arith.addf %490, %491 : vector<4x128xf32>
    %493 = math.tanh %485 : vector<4x128xf32>
    %494 = arith.select %5, %493, %492 : vector<4x128xi1>, vector<4x128xf32>
    %495 = vector.extract_strided_slice %494 {offsets = [0, 0], sizes = [4, 32], strides = [1, 1]} : vector<4x128xf32> to vector<4x32xf32>
    %496 = vector.extract_strided_slice %494 {offsets = [0, 32], sizes = [4, 32], strides = [1, 1]} : vector<4x128xf32> to vector<4x32xf32>
    %497 = vector.extract_strided_slice %494 {offsets = [0, 64], sizes = [4, 32], strides = [1, 1]} : vector<4x128xf32> to vector<4x32xf32>
    %498 = vector.extract_strided_slice %494 {offsets = [0, 96], sizes = [4, 32], strides = [1, 1]} : vector<4x128xf32> to vector<4x32xf32>
    %499 = arith.mulf %496, %450 : vector<4x32xf32>
    %500 = arith.mulf %495, %497 : vector<4x32xf32>
    %501 = arith.addf %499, %500 : vector<4x32xf32>
    %502 = math.tanh %501 : vector<4x32xf32>
    %503 = arith.mulf %498, %502 : vector<4x32xf32>
    %c1_210 = arith.constant 1 : index
    %c0_211 = arith.constant 0 : index
    %c0_212 = arith.constant 0 : index
    %504 = vector.load %arg1[%c1_210, %c0_211, %c0_212] : memref<8x4x1xf32, #tpu.memory_space<vmem>>, vector<1x4x1xf32>
    %505 = vector.shape_cast %504 : vector<1x4x1xf32> to vector<4x1xf32>
    %cst_213 = arith.constant 0.000000e+00 : f32
    %506 = vector.broadcast %cst_213 : f32 to vector<4x1xf32>
    %507 = arith.cmpf ogt, %505, %506 : vector<4x1xf32>
    %508 = vector.shape_cast %507 : vector<4x1xi1> to vector<4x1xi1>
    %509 = vector.broadcast %508 : vector<4x1xi1> to vector<4x32xi1>
    %510 = arith.select %509, %501, %450 : vector<4x32xi1>, vector<4x32xf32>
    %cst_214 = arith.constant 0.000000e+00 : f32
    %511 = vector.shape_cast %507 : vector<4x1xi1> to vector<4x1xi1>
    %512 = vector.broadcast %511 : vector<4x1xi1> to vector<4x32xi1>
    %513 = vector.broadcast %cst_214 : f32 to vector<4x32xf32>
    %514 = arith.select %512, %503, %513 : vector<4x32xi1>, vector<4x32xf32>
    %515 = vector.extract_strided_slice %514 {offsets = [0, 0], sizes = [2, 32], strides = [1, 1]} : vector<4x32xf32> to vector<2x32xf32>
    %c1_215 = arith.constant 1 : index
    %c0_216 = arith.constant 0 : index
    %c0_217 = arith.constant 0 : index
    %516 = vector.load %arg18[%c1_215, %c0_216, %c0_217] : memref<8x2x32xf32, #tpu.memory_space<vmem>>, vector<1x2x32xf32>
    %517 = vector.shape_cast %516 : vector<1x2x32xf32> to vector<2x32xf32>
    %518 = vector.shape_cast %515 : vector<2x32xf32> to vector<1x2x32xf32>
    tpu.vector_store %arg18[%c1_215, %c0_216, %c0_217], %518 {strides = array<i32>} : memref<8x2x32xf32, #tpu.memory_space<vmem>>, vector<1x2x32xf32>,
    %519 = vector.extract_strided_slice %514 {offsets = [2, 0], sizes = [2, 32], strides = [1, 1]} : vector<4x32xf32> to vector<2x32xf32>
    %c6_218 = arith.constant 6 : index
    %c0_219 = arith.constant 0 : index
    %c0_220 = arith.constant 0 : index
    %520 = vector.load %arg19[%c6_218, %c0_219, %c0_220] : memref<8x2x32xf32, #tpu.memory_space<vmem>>, vector<1x2x32xf32>
    %521 = vector.shape_cast %520 : vector<1x2x32xf32> to vector<2x32xf32>
    %522 = vector.shape_cast %519 : vector<2x32xf32> to vector<1x2x32xf32>
    tpu.vector_store %arg19[%c6_218, %c0_219, %c0_220], %522 {strides = array<i32>} : memref<8x2x32xf32, #tpu.memory_space<vmem>>, vector<1x2x32xf32>,
    %523 = tpu.concatenate %503, %503 in 1 : vector<4x32xf32>, vector<4x32xf32> -> vector<4x64xf32>
    %524 = vector.broadcast %507 : vector<4x1xi1> to vector<4x64xi1>
    %525 = arith.andi %524, %18 : vector<4x64xi1>
    %526 = arith.select %525, %523, %466 : vector<4x64xi1>, vector<4x64xf32>
    %527 = arith.truncf %526 : vector<4x64xf32> to vector<4x64xbf16>
    %cst_221 = arith.constant dense<0.000000e+00> : vector<4x128xf32>
    %528 = tpu.matmul %527, %403, %cst_221 {dimension_numbers = #tpu.dot_dimension_numbers<[1], [0], [0], [1], [0, 0, 1, 1], [], []>} : vector<4x64xbf16>, vector<64x128xbf16>, vector<4x128xf32> -> vector<4x128xf32>
    %c2_222 = arith.constant 2 : index
    %c0_223 = arith.constant 0 : index
    %c0_224 = arith.constant 0 : index
    %529 = vector.load %arg16[%c2_222, %c0_223, %c0_224] : memref<8x2x32xf32, #tpu.memory_space<vmem>>, vector<1x2x32xf32>
    %530 = vector.shape_cast %529 : vector<1x2x32xf32> to vector<2x32xf32>
    %c2_225 = arith.constant 2 : index
    %c0_226 = arith.constant 0 : index
    %c0_227 = arith.constant 0 : index
    %531 = vector.load %arg17[%c2_225, %c0_226, %c0_227] : memref<8x2x32xf32, #tpu.memory_space<vmem>>, vector<1x2x32xf32>
    %532 = vector.shape_cast %531 : vector<1x2x32xf32> to vector<2x32xf32>
    %533 = tpu.concatenate %530, %532 in 1 : vector<2x32xf32>, vector<2x32xf32> -> vector<2x64xf32>
    %534 = arith.truncf %533 : vector<2x64xf32> to vector<2x64xbf16>
    %c5_228 = arith.constant 5 : index
    %c0_229 = arith.constant 0 : index
    %c0_230 = arith.constant 0 : index
    %535 = vector.load %arg16[%c5_228, %c0_229, %c0_230] : memref<8x2x32xf32, #tpu.memory_space<vmem>>, vector<1x2x32xf32>
    %536 = vector.shape_cast %535 : vector<1x2x32xf32> to vector<2x32xf32>
    %c5_231 = arith.constant 5 : index
    %c0_232 = arith.constant 0 : index
    %c0_233 = arith.constant 0 : index
    %537 = vector.load %arg17[%c5_231, %c0_232, %c0_233] : memref<8x2x32xf32, #tpu.memory_space<vmem>>, vector<1x2x32xf32>
    %538 = vector.shape_cast %537 : vector<1x2x32xf32> to vector<2x32xf32>
    %539 = tpu.concatenate %536, %538 in 1 : vector<2x32xf32>, vector<2x32xf32> -> vector<2x64xf32>
    %540 = arith.truncf %539 : vector<2x64xf32> to vector<2x64xbf16>
    %cst_234 = arith.constant dense<0.000000e+00> : vector<2x128xf32>
    %541 = tpu.matmul %534, %401, %cst_234 {dimension_numbers = #tpu.dot_dimension_numbers<[1], [0], [0], [1], [0, 0, 1, 1], [], []>} : vector<2x64xbf16>, vector<64x128xbf16>, vector<2x128xf32> -> vector<2x128xf32>
    %cst_235 = arith.constant dense<0.000000e+00> : vector<2x128xf32>
    %542 = tpu.matmul %540, %402, %cst_235 {dimension_numbers = #tpu.dot_dimension_numbers<[1], [0], [0], [1], [0, 0, 1, 1], [], []>} : vector<2x64xbf16>, vector<64x128xbf16>, vector<2x128xf32> -> vector<2x128xf32>
    %543 = tpu.concatenate %541, %542 in 0 : vector<2x128xf32>, vector<2x128xf32> -> vector<4x128xf32>
    %544 = arith.addf %543, %404 : vector<4x128xf32>
    %545 = arith.addf %544, %528 : vector<4x128xf32>
    %cst_236 = arith.constant 5.000000e-01 : f32
    %546 = vector.broadcast %cst_236 : f32 to vector<4x128xf32>
    %547 = arith.mulf %546, %545 : vector<4x128xf32>
    %548 = math.tanh %547 : vector<4x128xf32>
    %cst_237 = arith.constant 5.000000e-01 : f32
    %549 = vector.broadcast %cst_237 : f32 to vector<4x128xf32>
    %550 = arith.mulf %549, %548 : vector<4x128xf32>
    %cst_238 = arith.constant 5.000000e-01 : f32
    %551 = vector.broadcast %cst_238 : f32 to vector<4x128xf32>
    %552 = arith.addf %550, %551 : vector<4x128xf32>
    %553 = math.tanh %545 : vector<4x128xf32>
    %554 = arith.select %5, %553, %552 : vector<4x128xi1>, vector<4x128xf32>
    %555 = vector.extract_strided_slice %554 {offsets = [0, 0], sizes = [4, 32], strides = [1, 1]} : vector<4x128xf32> to vector<4x32xf32>
    %556 = vector.extract_strided_slice %554 {offsets = [0, 32], sizes = [4, 32], strides = [1, 1]} : vector<4x128xf32> to vector<4x32xf32>
    %557 = vector.extract_strided_slice %554 {offsets = [0, 64], sizes = [4, 32], strides = [1, 1]} : vector<4x128xf32> to vector<4x32xf32>
    %558 = vector.extract_strided_slice %554 {offsets = [0, 96], sizes = [4, 32], strides = [1, 1]} : vector<4x128xf32> to vector<4x32xf32>
    %559 = arith.mulf %556, %510 : vector<4x32xf32>
    %560 = arith.mulf %555, %557 : vector<4x32xf32>
    %561 = arith.addf %559, %560 : vector<4x32xf32>
    %562 = math.tanh %561 : vector<4x32xf32>
    %563 = arith.mulf %558, %562 : vector<4x32xf32>
    %c2_239 = arith.constant 2 : index
    %c0_240 = arith.constant 0 : index
    %c0_241 = arith.constant 0 : index
    %564 = vector.load %arg1[%c2_239, %c0_240, %c0_241] : memref<8x4x1xf32, #tpu.memory_space<vmem>>, vector<1x4x1xf32>
    %565 = vector.shape_cast %564 : vector<1x4x1xf32> to vector<4x1xf32>
    %cst_242 = arith.constant 0.000000e+00 : f32
    %566 = vector.broadcast %cst_242 : f32 to vector<4x1xf32>
    %567 = arith.cmpf ogt, %565, %566 : vector<4x1xf32>
    %568 = vector.shape_cast %567 : vector<4x1xi1> to vector<4x1xi1>
    %569 = vector.broadcast %568 : vector<4x1xi1> to vector<4x32xi1>
    %570 = arith.select %569, %561, %510 : vector<4x32xi1>, vector<4x32xf32>
    %cst_243 = arith.constant 0.000000e+00 : f32
    %571 = vector.shape_cast %567 : vector<4x1xi1> to vector<4x1xi1>
    %572 = vector.broadcast %571 : vector<4x1xi1> to vector<4x32xi1>
    %573 = vector.broadcast %cst_243 : f32 to vector<4x32xf32>
    %574 = arith.select %572, %563, %573 : vector<4x32xi1>, vector<4x32xf32>
    %575 = vector.extract_strided_slice %574 {offsets = [0, 0], sizes = [2, 32], strides = [1, 1]} : vector<4x32xf32> to vector<2x32xf32>
    %c2_244 = arith.constant 2 : index
    %c0_245 = arith.constant 0 : index
    %c0_246 = arith.constant 0 : index
    %576 = vector.load %arg18[%c2_244, %c0_245, %c0_246] : memref<8x2x32xf32, #tpu.memory_space<vmem>>, vector<1x2x32xf32>
    %577 = vector.shape_cast %576 : vector<1x2x32xf32> to vector<2x32xf32>
    %578 = vector.shape_cast %575 : vector<2x32xf32> to vector<1x2x32xf32>
    tpu.vector_store %arg18[%c2_244, %c0_245, %c0_246], %578 {strides = array<i32>} : memref<8x2x32xf32, #tpu.memory_space<vmem>>, vector<1x2x32xf32>,
    %579 = vector.extract_strided_slice %574 {offsets = [2, 0], sizes = [2, 32], strides = [1, 1]} : vector<4x32xf32> to vector<2x32xf32>
    %c5_247 = arith.constant 5 : index
    %c0_248 = arith.constant 0 : index
    %c0_249 = arith.constant 0 : index
    %580 = vector.load %arg19[%c5_247, %c0_248, %c0_249] : memref<8x2x32xf32, #tpu.memory_space<vmem>>, vector<1x2x32xf32>
    %581 = vector.shape_cast %580 : vector<1x2x32xf32> to vector<2x32xf32>
    %582 = vector.shape_cast %579 : vector<2x32xf32> to vector<1x2x32xf32>
    tpu.vector_store %arg19[%c5_247, %c0_248, %c0_249], %582 {strides = array<i32>} : memref<8x2x32xf32, #tpu.memory_space<vmem>>, vector<1x2x32xf32>,
    %583 = tpu.concatenate %563, %563 in 1 : vector<4x32xf32>, vector<4x32xf32> -> vector<4x64xf32>
    %584 = vector.broadcast %567 : vector<4x1xi1> to vector<4x64xi1>
    %585 = arith.andi %584, %18 : vector<4x64xi1>
    %586 = arith.select %585, %583, %526 : vector<4x64xi1>, vector<4x64xf32>
    %587 = arith.truncf %586 : vector<4x64xf32> to vector<4x64xbf16>
    %cst_250 = arith.constant dense<0.000000e+00> : vector<4x128xf32>
    %588 = tpu.matmul %587, %403, %cst_250 {dimension_numbers = #tpu.dot_dimension_numbers<[1], [0], [0], [1], [0, 0, 1, 1], [], []>} : vector<4x64xbf16>, vector<64x128xbf16>, vector<4x128xf32> -> vector<4x128xf32>
    %c3_251 = arith.constant 3 : index
    %c0_252 = arith.constant 0 : index
    %c0_253 = arith.constant 0 : index
    %589 = vector.load %arg16[%c3_251, %c0_252, %c0_253] : memref<8x2x32xf32, #tpu.memory_space<vmem>>, vector<1x2x32xf32>
    %590 = vector.shape_cast %589 : vector<1x2x32xf32> to vector<2x32xf32>
    %c3_254 = arith.constant 3 : index
    %c0_255 = arith.constant 0 : index
    %c0_256 = arith.constant 0 : index
    %591 = vector.load %arg17[%c3_254, %c0_255, %c0_256] : memref<8x2x32xf32, #tpu.memory_space<vmem>>, vector<1x2x32xf32>
    %592 = vector.shape_cast %591 : vector<1x2x32xf32> to vector<2x32xf32>
    %593 = tpu.concatenate %590, %592 in 1 : vector<2x32xf32>, vector<2x32xf32> -> vector<2x64xf32>
    %594 = arith.truncf %593 : vector<2x64xf32> to vector<2x64xbf16>
    %c4_257 = arith.constant 4 : index
    %c0_258 = arith.constant 0 : index
    %c0_259 = arith.constant 0 : index
    %595 = vector.load %arg16[%c4_257, %c0_258, %c0_259] : memref<8x2x32xf32, #tpu.memory_space<vmem>>, vector<1x2x32xf32>
    %596 = vector.shape_cast %595 : vector<1x2x32xf32> to vector<2x32xf32>
    %c4_260 = arith.constant 4 : index
    %c0_261 = arith.constant 0 : index
    %c0_262 = arith.constant 0 : index
    %597 = vector.load %arg17[%c4_260, %c0_261, %c0_262] : memref<8x2x32xf32, #tpu.memory_space<vmem>>, vector<1x2x32xf32>
    %598 = vector.shape_cast %597 : vector<1x2x32xf32> to vector<2x32xf32>
    %599 = tpu.concatenate %596, %598 in 1 : vector<2x32xf32>, vector<2x32xf32> -> vector<2x64xf32>
    %600 = arith.truncf %599 : vector<2x64xf32> to vector<2x64xbf16>
    %cst_263 = arith.constant dense<0.000000e+00> : vector<2x128xf32>
    %601 = tpu.matmul %594, %401, %cst_263 {dimension_numbers = #tpu.dot_dimension_numbers<[1], [0], [0], [1], [0, 0, 1, 1], [], []>} : vector<2x64xbf16>, vector<64x128xbf16>, vector<2x128xf32> -> vector<2x128xf32>
    %cst_264 = arith.constant dense<0.000000e+00> : vector<2x128xf32>
    %602 = tpu.matmul %600, %402, %cst_264 {dimension_numbers = #tpu.dot_dimension_numbers<[1], [0], [0], [1], [0, 0, 1, 1], [], []>} : vector<2x64xbf16>, vector<64x128xbf16>, vector<2x128xf32> -> vector<2x128xf32>
    %603 = tpu.concatenate %601, %602 in 0 : vector<2x128xf32>, vector<2x128xf32> -> vector<4x128xf32>
    %604 = arith.addf %603, %404 : vector<4x128xf32>
    %605 = arith.addf %604, %588 : vector<4x128xf32>
    %cst_265 = arith.constant 5.000000e-01 : f32
    %606 = vector.broadcast %cst_265 : f32 to vector<4x128xf32>
    %607 = arith.mulf %606, %605 : vector<4x128xf32>
    %608 = math.tanh %607 : vector<4x128xf32>
    %cst_266 = arith.constant 5.000000e-01 : f32
    %609 = vector.broadcast %cst_266 : f32 to vector<4x128xf32>
    %610 = arith.mulf %609, %608 : vector<4x128xf32>
    %cst_267 = arith.constant 5.000000e-01 : f32
    %611 = vector.broadcast %cst_267 : f32 to vector<4x128xf32>
    %612 = arith.addf %610, %611 : vector<4x128xf32>
    %613 = math.tanh %605 : vector<4x128xf32>
    %614 = arith.select %5, %613, %612 : vector<4x128xi1>, vector<4x128xf32>
    %615 = vector.extract_strided_slice %614 {offsets = [0, 0], sizes = [4, 32], strides = [1, 1]} : vector<4x128xf32> to vector<4x32xf32>
    %616 = vector.extract_strided_slice %614 {offsets = [0, 32], sizes = [4, 32], strides = [1, 1]} : vector<4x128xf32> to vector<4x32xf32>
    %617 = vector.extract_strided_slice %614 {offsets = [0, 64], sizes = [4, 32], strides = [1, 1]} : vector<4x128xf32> to vector<4x32xf32>
    %618 = vector.extract_strided_slice %614 {offsets = [0, 96], sizes = [4, 32], strides = [1, 1]} : vector<4x128xf32> to vector<4x32xf32>
    %619 = arith.mulf %616, %570 : vector<4x32xf32>
    %620 = arith.mulf %615, %617 : vector<4x32xf32>
    %621 = arith.addf %619, %620 : vector<4x32xf32>
    %622 = math.tanh %621 : vector<4x32xf32>
    %623 = arith.mulf %618, %622 : vector<4x32xf32>
    %c3_268 = arith.constant 3 : index
    %c0_269 = arith.constant 0 : index
    %c0_270 = arith.constant 0 : index
    %624 = vector.load %arg1[%c3_268, %c0_269, %c0_270] : memref<8x4x1xf32, #tpu.memory_space<vmem>>, vector<1x4x1xf32>
    %625 = vector.shape_cast %624 : vector<1x4x1xf32> to vector<4x1xf32>
    %cst_271 = arith.constant 0.000000e+00 : f32
    %626 = vector.broadcast %cst_271 : f32 to vector<4x1xf32>
    %627 = arith.cmpf ogt, %625, %626 : vector<4x1xf32>
    %628 = vector.shape_cast %627 : vector<4x1xi1> to vector<4x1xi1>
    %629 = vector.broadcast %628 : vector<4x1xi1> to vector<4x32xi1>
    %630 = arith.select %629, %621, %570 : vector<4x32xi1>, vector<4x32xf32>
    %cst_272 = arith.constant 0.000000e+00 : f32
    %631 = vector.shape_cast %627 : vector<4x1xi1> to vector<4x1xi1>
    %632 = vector.broadcast %631 : vector<4x1xi1> to vector<4x32xi1>
    %633 = vector.broadcast %cst_272 : f32 to vector<4x32xf32>
    %634 = arith.select %632, %623, %633 : vector<4x32xi1>, vector<4x32xf32>
    %635 = vector.extract_strided_slice %634 {offsets = [0, 0], sizes = [2, 32], strides = [1, 1]} : vector<4x32xf32> to vector<2x32xf32>
    %c3_273 = arith.constant 3 : index
    %c0_274 = arith.constant 0 : index
    %c0_275 = arith.constant 0 : index
    %636 = vector.load %arg18[%c3_273, %c0_274, %c0_275] : memref<8x2x32xf32, #tpu.memory_space<vmem>>, vector<1x2x32xf32>
    %637 = vector.shape_cast %636 : vector<1x2x32xf32> to vector<2x32xf32>
    %638 = vector.shape_cast %635 : vector<2x32xf32> to vector<1x2x32xf32>
    tpu.vector_store %arg18[%c3_273, %c0_274, %c0_275], %638 {strides = array<i32>} : memref<8x2x32xf32, #tpu.memory_space<vmem>>, vector<1x2x32xf32>,
    %639 = vector.extract_strided_slice %634 {offsets = [2, 0], sizes = [2, 32], strides = [1, 1]} : vector<4x32xf32> to vector<2x32xf32>
    %c4_276 = arith.constant 4 : index
    %c0_277 = arith.constant 0 : index
    %c0_278 = arith.constant 0 : index
    %640 = vector.load %arg19[%c4_276, %c0_277, %c0_278] : memref<8x2x32xf32, #tpu.memory_space<vmem>>, vector<1x2x32xf32>
    %641 = vector.shape_cast %640 : vector<1x2x32xf32> to vector<2x32xf32>
    %642 = vector.shape_cast %639 : vector<2x32xf32> to vector<1x2x32xf32>
    tpu.vector_store %arg19[%c4_276, %c0_277, %c0_278], %642 {strides = array<i32>} : memref<8x2x32xf32, #tpu.memory_space<vmem>>, vector<1x2x32xf32>,
    %643 = tpu.concatenate %623, %623 in 1 : vector<4x32xf32>, vector<4x32xf32> -> vector<4x64xf32>
    %644 = vector.broadcast %627 : vector<4x1xi1> to vector<4x64xi1>
    %645 = arith.andi %644, %18 : vector<4x64xi1>
    %646 = arith.select %645, %643, %586 : vector<4x64xi1>, vector<4x64xf32>
    %647 = arith.truncf %646 : vector<4x64xf32> to vector<4x64xbf16>
    %cst_279 = arith.constant dense<0.000000e+00> : vector<4x128xf32>
    %648 = tpu.matmul %647, %403, %cst_279 {dimension_numbers = #tpu.dot_dimension_numbers<[1], [0], [0], [1], [0, 0, 1, 1], [], []>} : vector<4x64xbf16>, vector<64x128xbf16>, vector<4x128xf32> -> vector<4x128xf32>
    %c4_280 = arith.constant 4 : index
    %c0_281 = arith.constant 0 : index
    %c0_282 = arith.constant 0 : index
    %649 = vector.load %arg16[%c4_280, %c0_281, %c0_282] : memref<8x2x32xf32, #tpu.memory_space<vmem>>, vector<1x2x32xf32>
    %650 = vector.shape_cast %649 : vector<1x2x32xf32> to vector<2x32xf32>
    %c4_283 = arith.constant 4 : index
    %c0_284 = arith.constant 0 : index
    %c0_285 = arith.constant 0 : index
    %651 = vector.load %arg17[%c4_283, %c0_284, %c0_285] : memref<8x2x32xf32, #tpu.memory_space<vmem>>, vector<1x2x32xf32>
    %652 = vector.shape_cast %651 : vector<1x2x32xf32> to vector<2x32xf32>
    %653 = tpu.concatenate %650, %652 in 1 : vector<2x32xf32>, vector<2x32xf32> -> vector<2x64xf32>
    %654 = arith.truncf %653 : vector<2x64xf32> to vector<2x64xbf16>
    %c3_286 = arith.constant 3 : index
    %c0_287 = arith.constant 0 : index
    %c0_288 = arith.constant 0 : index
    %655 = vector.load %arg16[%c3_286, %c0_287, %c0_288] : memref<8x2x32xf32, #tpu.memory_space<vmem>>, vector<1x2x32xf32>
    %656 = vector.shape_cast %655 : vector<1x2x32xf32> to vector<2x32xf32>
    %c3_289 = arith.constant 3 : index
    %c0_290 = arith.constant 0 : index
    %c0_291 = arith.constant 0 : index
    %657 = vector.load %arg17[%c3_289, %c0_290, %c0_291] : memref<8x2x32xf32, #tpu.memory_space<vmem>>, vector<1x2x32xf32>
    %658 = vector.shape_cast %657 : vector<1x2x32xf32> to vector<2x32xf32>
    %659 = tpu.concatenate %656, %658 in 1 : vector<2x32xf32>, vector<2x32xf32> -> vector<2x64xf32>
    %660 = arith.truncf %659 : vector<2x64xf32> to vector<2x64xbf16>
    %cst_292 = arith.constant dense<0.000000e+00> : vector<2x128xf32>
    %661 = tpu.matmul %654, %401, %cst_292 {dimension_numbers = #tpu.dot_dimension_numbers<[1], [0], [0], [1], [0, 0, 1, 1], [], []>} : vector<2x64xbf16>, vector<64x128xbf16>, vector<2x128xf32> -> vector<2x128xf32>
    %cst_293 = arith.constant dense<0.000000e+00> : vector<2x128xf32>
    %662 = tpu.matmul %660, %402, %cst_293 {dimension_numbers = #tpu.dot_dimension_numbers<[1], [0], [0], [1], [0, 0, 1, 1], [], []>} : vector<2x64xbf16>, vector<64x128xbf16>, vector<2x128xf32> -> vector<2x128xf32>
    %663 = tpu.concatenate %661, %662 in 0 : vector<2x128xf32>, vector<2x128xf32> -> vector<4x128xf32>
    %664 = arith.addf %663, %404 : vector<4x128xf32>
    %665 = arith.addf %664, %648 : vector<4x128xf32>
    %cst_294 = arith.constant 5.000000e-01 : f32
    %666 = vector.broadcast %cst_294 : f32 to vector<4x128xf32>
    %667 = arith.mulf %666, %665 : vector<4x128xf32>
    %668 = math.tanh %667 : vector<4x128xf32>
    %cst_295 = arith.constant 5.000000e-01 : f32
    %669 = vector.broadcast %cst_295 : f32 to vector<4x128xf32>
    %670 = arith.mulf %669, %668 : vector<4x128xf32>
    %cst_296 = arith.constant 5.000000e-01 : f32
    %671 = vector.broadcast %cst_296 : f32 to vector<4x128xf32>
    %672 = arith.addf %670, %671 : vector<4x128xf32>
    %673 = math.tanh %665 : vector<4x128xf32>
    %674 = arith.select %5, %673, %672 : vector<4x128xi1>, vector<4x128xf32>
    %675 = vector.extract_strided_slice %674 {offsets = [0, 0], sizes = [4, 32], strides = [1, 1]} : vector<4x128xf32> to vector<4x32xf32>
    %676 = vector.extract_strided_slice %674 {offsets = [0, 32], sizes = [4, 32], strides = [1, 1]} : vector<4x128xf32> to vector<4x32xf32>
    %677 = vector.extract_strided_slice %674 {offsets = [0, 64], sizes = [4, 32], strides = [1, 1]} : vector<4x128xf32> to vector<4x32xf32>
    %678 = vector.extract_strided_slice %674 {offsets = [0, 96], sizes = [4, 32], strides = [1, 1]} : vector<4x128xf32> to vector<4x32xf32>
    %679 = arith.mulf %676, %630 : vector<4x32xf32>
    %680 = arith.mulf %675, %677 : vector<4x32xf32>
    %681 = arith.addf %679, %680 : vector<4x32xf32>
    %682 = math.tanh %681 : vector<4x32xf32>
    %683 = arith.mulf %678, %682 : vector<4x32xf32>
    %c4_297 = arith.constant 4 : index
    %c0_298 = arith.constant 0 : index
    %c0_299 = arith.constant 0 : index
    %684 = vector.load %arg1[%c4_297, %c0_298, %c0_299] : memref<8x4x1xf32, #tpu.memory_space<vmem>>, vector<1x4x1xf32>
    %685 = vector.shape_cast %684 : vector<1x4x1xf32> to vector<4x1xf32>
    %cst_300 = arith.constant 0.000000e+00 : f32
    %686 = vector.broadcast %cst_300 : f32 to vector<4x1xf32>
    %687 = arith.cmpf ogt, %685, %686 : vector<4x1xf32>
    %688 = vector.shape_cast %687 : vector<4x1xi1> to vector<4x1xi1>
    %689 = vector.broadcast %688 : vector<4x1xi1> to vector<4x32xi1>
    %690 = arith.select %689, %681, %630 : vector<4x32xi1>, vector<4x32xf32>
    %cst_301 = arith.constant 0.000000e+00 : f32
    %691 = vector.shape_cast %687 : vector<4x1xi1> to vector<4x1xi1>
    %692 = vector.broadcast %691 : vector<4x1xi1> to vector<4x32xi1>
    %693 = vector.broadcast %cst_301 : f32 to vector<4x32xf32>
    %694 = arith.select %692, %683, %693 : vector<4x32xi1>, vector<4x32xf32>
    %695 = vector.extract_strided_slice %694 {offsets = [0, 0], sizes = [2, 32], strides = [1, 1]} : vector<4x32xf32> to vector<2x32xf32>
    %c4_302 = arith.constant 4 : index
    %c0_303 = arith.constant 0 : index
    %c0_304 = arith.constant 0 : index
    %696 = vector.load %arg18[%c4_302, %c0_303, %c0_304] : memref<8x2x32xf32, #tpu.memory_space<vmem>>, vector<1x2x32xf32>
    %697 = vector.shape_cast %696 : vector<1x2x32xf32> to vector<2x32xf32>
    %698 = vector.shape_cast %695 : vector<2x32xf32> to vector<1x2x32xf32>
    tpu.vector_store %arg18[%c4_302, %c0_303, %c0_304], %698 {strides = array<i32>} : memref<8x2x32xf32, #tpu.memory_space<vmem>>, vector<1x2x32xf32>,
    %699 = vector.extract_strided_slice %694 {offsets = [2, 0], sizes = [2, 32], strides = [1, 1]} : vector<4x32xf32> to vector<2x32xf32>
    %c3_305 = arith.constant 3 : index
    %c0_306 = arith.constant 0 : index
    %c0_307 = arith.constant 0 : index
    %700 = vector.load %arg19[%c3_305, %c0_306, %c0_307] : memref<8x2x32xf32, #tpu.memory_space<vmem>>, vector<1x2x32xf32>
    %701 = vector.shape_cast %700 : vector<1x2x32xf32> to vector<2x32xf32>
    %702 = vector.shape_cast %699 : vector<2x32xf32> to vector<1x2x32xf32>
    tpu.vector_store %arg19[%c3_305, %c0_306, %c0_307], %702 {strides = array<i32>} : memref<8x2x32xf32, #tpu.memory_space<vmem>>, vector<1x2x32xf32>,
    %703 = tpu.concatenate %683, %683 in 1 : vector<4x32xf32>, vector<4x32xf32> -> vector<4x64xf32>
    %704 = vector.broadcast %687 : vector<4x1xi1> to vector<4x64xi1>
    %705 = arith.andi %704, %18 : vector<4x64xi1>
    %706 = arith.select %705, %703, %646 : vector<4x64xi1>, vector<4x64xf32>
    %707 = arith.truncf %706 : vector<4x64xf32> to vector<4x64xbf16>
    %cst_308 = arith.constant dense<0.000000e+00> : vector<4x128xf32>
    %708 = tpu.matmul %707, %403, %cst_308 {dimension_numbers = #tpu.dot_dimension_numbers<[1], [0], [0], [1], [0, 0, 1, 1], [], []>} : vector<4x64xbf16>, vector<64x128xbf16>, vector<4x128xf32> -> vector<4x128xf32>
    %c5_309 = arith.constant 5 : index
    %c0_310 = arith.constant 0 : index
    %c0_311 = arith.constant 0 : index
    %709 = vector.load %arg16[%c5_309, %c0_310, %c0_311] : memref<8x2x32xf32, #tpu.memory_space<vmem>>, vector<1x2x32xf32>
    %710 = vector.shape_cast %709 : vector<1x2x32xf32> to vector<2x32xf32>
    %c5_312 = arith.constant 5 : index
    %c0_313 = arith.constant 0 : index
    %c0_314 = arith.constant 0 : index
    %711 = vector.load %arg17[%c5_312, %c0_313, %c0_314] : memref<8x2x32xf32, #tpu.memory_space<vmem>>, vector<1x2x32xf32>
    %712 = vector.shape_cast %711 : vector<1x2x32xf32> to vector<2x32xf32>
    %713 = tpu.concatenate %710, %712 in 1 : vector<2x32xf32>, vector<2x32xf32> -> vector<2x64xf32>
    %714 = arith.truncf %713 : vector<2x64xf32> to vector<2x64xbf16>
    %c2_315 = arith.constant 2 : index
    %c0_316 = arith.constant 0 : index
    %c0_317 = arith.constant 0 : index
    %715 = vector.load %arg16[%c2_315, %c0_316, %c0_317] : memref<8x2x32xf32, #tpu.memory_space<vmem>>, vector<1x2x32xf32>
    %716 = vector.shape_cast %715 : vector<1x2x32xf32> to vector<2x32xf32>
    %c2_318 = arith.constant 2 : index
    %c0_319 = arith.constant 0 : index
    %c0_320 = arith.constant 0 : index
    %717 = vector.load %arg17[%c2_318, %c0_319, %c0_320] : memref<8x2x32xf32, #tpu.memory_space<vmem>>, vector<1x2x32xf32>
    %718 = vector.shape_cast %717 : vector<1x2x32xf32> to vector<2x32xf32>
    %719 = tpu.concatenate %716, %718 in 1 : vector<2x32xf32>, vector<2x32xf32> -> vector<2x64xf32>
    %720 = arith.truncf %719 : vector<2x64xf32> to vector<2x64xbf16>
    %cst_321 = arith.constant dense<0.000000e+00> : vector<2x128xf32>
    %721 = tpu.matmul %714, %401, %cst_321 {dimension_numbers = #tpu.dot_dimension_numbers<[1], [0], [0], [1], [0, 0, 1, 1], [], []>} : vector<2x64xbf16>, vector<64x128xbf16>, vector<2x128xf32> -> vector<2x128xf32>
    %cst_322 = arith.constant dense<0.000000e+00> : vector<2x128xf32>
    %722 = tpu.matmul %720, %402, %cst_322 {dimension_numbers = #tpu.dot_dimension_numbers<[1], [0], [0], [1], [0, 0, 1, 1], [], []>} : vector<2x64xbf16>, vector<64x128xbf16>, vector<2x128xf32> -> vector<2x128xf32>
    %723 = tpu.concatenate %721, %722 in 0 : vector<2x128xf32>, vector<2x128xf32> -> vector<4x128xf32>
    %724 = arith.addf %723, %404 : vector<4x128xf32>
    %725 = arith.addf %724, %708 : vector<4x128xf32>
    %cst_323 = arith.constant 5.000000e-01 : f32
    %726 = vector.broadcast %cst_323 : f32 to vector<4x128xf32>
    %727 = arith.mulf %726, %725 : vector<4x128xf32>
    %728 = math.tanh %727 : vector<4x128xf32>
    %cst_324 = arith.constant 5.000000e-01 : f32
    %729 = vector.broadcast %cst_324 : f32 to vector<4x128xf32>
    %730 = arith.mulf %729, %728 : vector<4x128xf32>
    %cst_325 = arith.constant 5.000000e-01 : f32
    %731 = vector.broadcast %cst_325 : f32 to vector<4x128xf32>
    %732 = arith.addf %730, %731 : vector<4x128xf32>
    %733 = math.tanh %725 : vector<4x128xf32>
    %734 = arith.select %5, %733, %732 : vector<4x128xi1>, vector<4x128xf32>
    %735 = vector.extract_strided_slice %734 {offsets = [0, 0], sizes = [4, 32], strides = [1, 1]} : vector<4x128xf32> to vector<4x32xf32>
    %736 = vector.extract_strided_slice %734 {offsets = [0, 32], sizes = [4, 32], strides = [1, 1]} : vector<4x128xf32> to vector<4x32xf32>
    %737 = vector.extract_strided_slice %734 {offsets = [0, 64], sizes = [4, 32], strides = [1, 1]} : vector<4x128xf32> to vector<4x32xf32>
    %738 = vector.extract_strided_slice %734 {offsets = [0, 96], sizes = [4, 32], strides = [1, 1]} : vector<4x128xf32> to vector<4x32xf32>
    %739 = arith.mulf %736, %690 : vector<4x32xf32>
    %740 = arith.mulf %735, %737 : vector<4x32xf32>
    %741 = arith.addf %739, %740 : vector<4x32xf32>
    %742 = math.tanh %741 : vector<4x32xf32>
    %743 = arith.mulf %738, %742 : vector<4x32xf32>
    %c5_326 = arith.constant 5 : index
    %c0_327 = arith.constant 0 : index
    %c0_328 = arith.constant 0 : index
    %744 = vector.load %arg1[%c5_326, %c0_327, %c0_328] : memref<8x4x1xf32, #tpu.memory_space<vmem>>, vector<1x4x1xf32>
    %745 = vector.shape_cast %744 : vector<1x4x1xf32> to vector<4x1xf32>
    %cst_329 = arith.constant 0.000000e+00 : f32
    %746 = vector.broadcast %cst_329 : f32 to vector<4x1xf32>
    %747 = arith.cmpf ogt, %745, %746 : vector<4x1xf32>
    %748 = vector.shape_cast %747 : vector<4x1xi1> to vector<4x1xi1>
    %749 = vector.broadcast %748 : vector<4x1xi1> to vector<4x32xi1>
    %750 = arith.select %749, %741, %690 : vector<4x32xi1>, vector<4x32xf32>
    %cst_330 = arith.constant 0.000000e+00 : f32
    %751 = vector.shape_cast %747 : vector<4x1xi1> to vector<4x1xi1>
    %752 = vector.broadcast %751 : vector<4x1xi1> to vector<4x32xi1>
    %753 = vector.broadcast %cst_330 : f32 to vector<4x32xf32>
    %754 = arith.select %752, %743, %753 : vector<4x32xi1>, vector<4x32xf32>
    %755 = vector.extract_strided_slice %754 {offsets = [0, 0], sizes = [2, 32], strides = [1, 1]} : vector<4x32xf32> to vector<2x32xf32>
    %c5_331 = arith.constant 5 : index
    %c0_332 = arith.constant 0 : index
    %c0_333 = arith.constant 0 : index
    %756 = vector.load %arg18[%c5_331, %c0_332, %c0_333] : memref<8x2x32xf32, #tpu.memory_space<vmem>>, vector<1x2x32xf32>
    %757 = vector.shape_cast %756 : vector<1x2x32xf32> to vector<2x32xf32>
    %758 = vector.shape_cast %755 : vector<2x32xf32> to vector<1x2x32xf32>
    tpu.vector_store %arg18[%c5_331, %c0_332, %c0_333], %758 {strides = array<i32>} : memref<8x2x32xf32, #tpu.memory_space<vmem>>, vector<1x2x32xf32>,
    %759 = vector.extract_strided_slice %754 {offsets = [2, 0], sizes = [2, 32], strides = [1, 1]} : vector<4x32xf32> to vector<2x32xf32>
    %c2_334 = arith.constant 2 : index
    %c0_335 = arith.constant 0 : index
    %c0_336 = arith.constant 0 : index
    %760 = vector.load %arg19[%c2_334, %c0_335, %c0_336] : memref<8x2x32xf32, #tpu.memory_space<vmem>>, vector<1x2x32xf32>
    %761 = vector.shape_cast %760 : vector<1x2x32xf32> to vector<2x32xf32>
    %762 = vector.shape_cast %759 : vector<2x32xf32> to vector<1x2x32xf32>
    tpu.vector_store %arg19[%c2_334, %c0_335, %c0_336], %762 {strides = array<i32>} : memref<8x2x32xf32, #tpu.memory_space<vmem>>, vector<1x2x32xf32>,
    %763 = tpu.concatenate %743, %743 in 1 : vector<4x32xf32>, vector<4x32xf32> -> vector<4x64xf32>
    %764 = vector.broadcast %747 : vector<4x1xi1> to vector<4x64xi1>
    %765 = arith.andi %764, %18 : vector<4x64xi1>
    %766 = arith.select %765, %763, %706 : vector<4x64xi1>, vector<4x64xf32>
    %767 = arith.truncf %766 : vector<4x64xf32> to vector<4x64xbf16>
    %cst_337 = arith.constant dense<0.000000e+00> : vector<4x128xf32>
    %768 = tpu.matmul %767, %403, %cst_337 {dimension_numbers = #tpu.dot_dimension_numbers<[1], [0], [0], [1], [0, 0, 1, 1], [], []>} : vector<4x64xbf16>, vector<64x128xbf16>, vector<4x128xf32> -> vector<4x128xf32>
    %c6_338 = arith.constant 6 : index
    %c0_339 = arith.constant 0 : index
    %c0_340 = arith.constant 0 : index
    %769 = vector.load %arg16[%c6_338, %c0_339, %c0_340] : memref<8x2x32xf32, #tpu.memory_space<vmem>>, vector<1x2x32xf32>
    %770 = vector.shape_cast %769 : vector<1x2x32xf32> to vector<2x32xf32>
    %c6_341 = arith.constant 6 : index
    %c0_342 = arith.constant 0 : index
    %c0_343 = arith.constant 0 : index
    %771 = vector.load %arg17[%c6_341, %c0_342, %c0_343] : memref<8x2x32xf32, #tpu.memory_space<vmem>>, vector<1x2x32xf32>
    %772 = vector.shape_cast %771 : vector<1x2x32xf32> to vector<2x32xf32>
    %773 = tpu.concatenate %770, %772 in 1 : vector<2x32xf32>, vector<2x32xf32> -> vector<2x64xf32>
    %774 = arith.truncf %773 : vector<2x64xf32> to vector<2x64xbf16>
    %c1_344 = arith.constant 1 : index
    %c0_345 = arith.constant 0 : index
    %c0_346 = arith.constant 0 : index
    %775 = vector.load %arg16[%c1_344, %c0_345, %c0_346] : memref<8x2x32xf32, #tpu.memory_space<vmem>>, vector<1x2x32xf32>
    %776 = vector.shape_cast %775 : vector<1x2x32xf32> to vector<2x32xf32>
    %c1_347 = arith.constant 1 : index
    %c0_348 = arith.constant 0 : index
    %c0_349 = arith.constant 0 : index
    %777 = vector.load %arg17[%c1_347, %c0_348, %c0_349] : memref<8x2x32xf32, #tpu.memory_space<vmem>>, vector<1x2x32xf32>
    %778 = vector.shape_cast %777 : vector<1x2x32xf32> to vector<2x32xf32>
    %779 = tpu.concatenate %776, %778 in 1 : vector<2x32xf32>, vector<2x32xf32> -> vector<2x64xf32>
    %780 = arith.truncf %779 : vector<2x64xf32> to vector<2x64xbf16>
    %cst_350 = arith.constant dense<0.000000e+00> : vector<2x128xf32>
    %781 = tpu.matmul %774, %401, %cst_350 {dimension_numbers = #tpu.dot_dimension_numbers<[1], [0], [0], [1], [0, 0, 1, 1], [], []>} : vector<2x64xbf16>, vector<64x128xbf16>, vector<2x128xf32> -> vector<2x128xf32>
    %cst_351 = arith.constant dense<0.000000e+00> : vector<2x128xf32>
    %782 = tpu.matmul %780, %402, %cst_351 {dimension_numbers = #tpu.dot_dimension_numbers<[1], [0], [0], [1], [0, 0, 1, 1], [], []>} : vector<2x64xbf16>, vector<64x128xbf16>, vector<2x128xf32> -> vector<2x128xf32>
    %783 = tpu.concatenate %781, %782 in 0 : vector<2x128xf32>, vector<2x128xf32> -> vector<4x128xf32>
    %784 = arith.addf %783, %404 : vector<4x128xf32>
    %785 = arith.addf %784, %768 : vector<4x128xf32>
    %cst_352 = arith.constant 5.000000e-01 : f32
    %786 = vector.broadcast %cst_352 : f32 to vector<4x128xf32>
    %787 = arith.mulf %786, %785 : vector<4x128xf32>
    %788 = math.tanh %787 : vector<4x128xf32>
    %cst_353 = arith.constant 5.000000e-01 : f32
    %789 = vector.broadcast %cst_353 : f32 to vector<4x128xf32>
    %790 = arith.mulf %789, %788 : vector<4x128xf32>
    %cst_354 = arith.constant 5.000000e-01 : f32
    %791 = vector.broadcast %cst_354 : f32 to vector<4x128xf32>
    %792 = arith.addf %790, %791 : vector<4x128xf32>
    %793 = math.tanh %785 : vector<4x128xf32>
    %794 = arith.select %5, %793, %792 : vector<4x128xi1>, vector<4x128xf32>
    %795 = vector.extract_strided_slice %794 {offsets = [0, 0], sizes = [4, 32], strides = [1, 1]} : vector<4x128xf32> to vector<4x32xf32>
    %796 = vector.extract_strided_slice %794 {offsets = [0, 32], sizes = [4, 32], strides = [1, 1]} : vector<4x128xf32> to vector<4x32xf32>
    %797 = vector.extract_strided_slice %794 {offsets = [0, 64], sizes = [4, 32], strides = [1, 1]} : vector<4x128xf32> to vector<4x32xf32>
    %798 = vector.extract_strided_slice %794 {offsets = [0, 96], sizes = [4, 32], strides = [1, 1]} : vector<4x128xf32> to vector<4x32xf32>
    %799 = arith.mulf %796, %750 : vector<4x32xf32>
    %800 = arith.mulf %795, %797 : vector<4x32xf32>
    %801 = arith.addf %799, %800 : vector<4x32xf32>
    %802 = math.tanh %801 : vector<4x32xf32>
    %803 = arith.mulf %798, %802 : vector<4x32xf32>
    %c6_355 = arith.constant 6 : index
    %c0_356 = arith.constant 0 : index
    %c0_357 = arith.constant 0 : index
    %804 = vector.load %arg1[%c6_355, %c0_356, %c0_357] : memref<8x4x1xf32, #tpu.memory_space<vmem>>, vector<1x4x1xf32>
    %805 = vector.shape_cast %804 : vector<1x4x1xf32> to vector<4x1xf32>
    %cst_358 = arith.constant 0.000000e+00 : f32
    %806 = vector.broadcast %cst_358 : f32 to vector<4x1xf32>
    %807 = arith.cmpf ogt, %805, %806 : vector<4x1xf32>
    %808 = vector.shape_cast %807 : vector<4x1xi1> to vector<4x1xi1>
    %809 = vector.broadcast %808 : vector<4x1xi1> to vector<4x32xi1>
    %810 = arith.select %809, %801, %750 : vector<4x32xi1>, vector<4x32xf32>
    %cst_359 = arith.constant 0.000000e+00 : f32
    %811 = vector.shape_cast %807 : vector<4x1xi1> to vector<4x1xi1>
    %812 = vector.broadcast %811 : vector<4x1xi1> to vector<4x32xi1>
    %813 = vector.broadcast %cst_359 : f32 to vector<4x32xf32>
    %814 = arith.select %812, %803, %813 : vector<4x32xi1>, vector<4x32xf32>
    %815 = vector.extract_strided_slice %814 {offsets = [0, 0], sizes = [2, 32], strides = [1, 1]} : vector<4x32xf32> to vector<2x32xf32>
    %c6_360 = arith.constant 6 : index
    %c0_361 = arith.constant 0 : index
    %c0_362 = arith.constant 0 : index
    %816 = vector.load %arg18[%c6_360, %c0_361, %c0_362] : memref<8x2x32xf32, #tpu.memory_space<vmem>>, vector<1x2x32xf32>
    %817 = vector.shape_cast %816 : vector<1x2x32xf32> to vector<2x32xf32>
    %818 = vector.shape_cast %815 : vector<2x32xf32> to vector<1x2x32xf32>
    tpu.vector_store %arg18[%c6_360, %c0_361, %c0_362], %818 {strides = array<i32>} : memref<8x2x32xf32, #tpu.memory_space<vmem>>, vector<1x2x32xf32>,
    %819 = vector.extract_strided_slice %814 {offsets = [2, 0], sizes = [2, 32], strides = [1, 1]} : vector<4x32xf32> to vector<2x32xf32>
    %c1_363 = arith.constant 1 : index
    %c0_364 = arith.constant 0 : index
    %c0_365 = arith.constant 0 : index
    %820 = vector.load %arg19[%c1_363, %c0_364, %c0_365] : memref<8x2x32xf32, #tpu.memory_space<vmem>>, vector<1x2x32xf32>
    %821 = vector.shape_cast %820 : vector<1x2x32xf32> to vector<2x32xf32>
    %822 = vector.shape_cast %819 : vector<2x32xf32> to vector<1x2x32xf32>
    tpu.vector_store %arg19[%c1_363, %c0_364, %c0_365], %822 {strides = array<i32>} : memref<8x2x32xf32, #tpu.memory_space<vmem>>, vector<1x2x32xf32>,
    %823 = tpu.concatenate %803, %803 in 1 : vector<4x32xf32>, vector<4x32xf32> -> vector<4x64xf32>
    %824 = vector.broadcast %807 : vector<4x1xi1> to vector<4x64xi1>
    %825 = arith.andi %824, %18 : vector<4x64xi1>
    %826 = arith.select %825, %823, %766 : vector<4x64xi1>, vector<4x64xf32>
    %827 = arith.truncf %826 : vector<4x64xf32> to vector<4x64xbf16>
    %cst_366 = arith.constant dense<0.000000e+00> : vector<4x128xf32>
    %828 = tpu.matmul %827, %403, %cst_366 {dimension_numbers = #tpu.dot_dimension_numbers<[1], [0], [0], [1], [0, 0, 1, 1], [], []>} : vector<4x64xbf16>, vector<64x128xbf16>, vector<4x128xf32> -> vector<4x128xf32>
    %c7_367 = arith.constant 7 : index
    %c0_368 = arith.constant 0 : index
    %c0_369 = arith.constant 0 : index
    %829 = vector.load %arg16[%c7_367, %c0_368, %c0_369] : memref<8x2x32xf32, #tpu.memory_space<vmem>>, vector<1x2x32xf32>
    %830 = vector.shape_cast %829 : vector<1x2x32xf32> to vector<2x32xf32>
    %c7_370 = arith.constant 7 : index
    %c0_371 = arith.constant 0 : index
    %c0_372 = arith.constant 0 : index
    %831 = vector.load %arg17[%c7_370, %c0_371, %c0_372] : memref<8x2x32xf32, #tpu.memory_space<vmem>>, vector<1x2x32xf32>
    %832 = vector.shape_cast %831 : vector<1x2x32xf32> to vector<2x32xf32>
    %833 = tpu.concatenate %830, %832 in 1 : vector<2x32xf32>, vector<2x32xf32> -> vector<2x64xf32>
    %834 = arith.truncf %833 : vector<2x64xf32> to vector<2x64xbf16>
    %c0_373 = arith.constant 0 : index
    %c0_374 = arith.constant 0 : index
    %c0_375 = arith.constant 0 : index
    %835 = vector.load %arg16[%c0_373, %c0_374, %c0_375] : memref<8x2x32xf32, #tpu.memory_space<vmem>>, vector<1x2x32xf32>
    %836 = vector.shape_cast %835 : vector<1x2x32xf32> to vector<2x32xf32>
    %c0_376 = arith.constant 0 : index
    %c0_377 = arith.constant 0 : index
    %c0_378 = arith.constant 0 : index
    %837 = vector.load %arg17[%c0_376, %c0_377, %c0_378] : memref<8x2x32xf32, #tpu.memory_space<vmem>>, vector<1x2x32xf32>
    %838 = vector.shape_cast %837 : vector<1x2x32xf32> to vector<2x32xf32>
    %839 = tpu.concatenate %836, %838 in 1 : vector<2x32xf32>, vector<2x32xf32> -> vector<2x64xf32>
    %840 = arith.truncf %839 : vector<2x64xf32> to vector<2x64xbf16>
    %cst_379 = arith.constant dense<0.000000e+00> : vector<2x128xf32>
    %841 = tpu.matmul %834, %401, %cst_379 {dimension_numbers = #tpu.dot_dimension_numbers<[1], [0], [0], [1], [0, 0, 1, 1], [], []>} : vector<2x64xbf16>, vector<64x128xbf16>, vector<2x128xf32> -> vector<2x128xf32>
    %cst_380 = arith.constant dense<0.000000e+00> : vector<2x128xf32>
    %842 = tpu.matmul %840, %402, %cst_380 {dimension_numbers = #tpu.dot_dimension_numbers<[1], [0], [0], [1], [0, 0, 1, 1], [], []>} : vector<2x64xbf16>, vector<64x128xbf16>, vector<2x128xf32> -> vector<2x128xf32>
    %843 = tpu.concatenate %841, %842 in 0 : vector<2x128xf32>, vector<2x128xf32> -> vector<4x128xf32>
    %844 = arith.addf %843, %404 : vector<4x128xf32>
    %845 = arith.addf %844, %828 : vector<4x128xf32>
    %cst_381 = arith.constant 5.000000e-01 : f32
    %846 = vector.broadcast %cst_381 : f32 to vector<4x128xf32>
    %847 = arith.mulf %846, %845 : vector<4x128xf32>
    %848 = math.tanh %847 : vector<4x128xf32>
    %cst_382 = arith.constant 5.000000e-01 : f32
    %849 = vector.broadcast %cst_382 : f32 to vector<4x128xf32>
    %850 = arith.mulf %849, %848 : vector<4x128xf32>
    %cst_383 = arith.constant 5.000000e-01 : f32
    %851 = vector.broadcast %cst_383 : f32 to vector<4x128xf32>
    %852 = arith.addf %850, %851 : vector<4x128xf32>
    %853 = math.tanh %845 : vector<4x128xf32>
    %854 = arith.select %5, %853, %852 : vector<4x128xi1>, vector<4x128xf32>
    %855 = vector.extract_strided_slice %854 {offsets = [0, 0], sizes = [4, 32], strides = [1, 1]} : vector<4x128xf32> to vector<4x32xf32>
    %856 = vector.extract_strided_slice %854 {offsets = [0, 32], sizes = [4, 32], strides = [1, 1]} : vector<4x128xf32> to vector<4x32xf32>
    %857 = vector.extract_strided_slice %854 {offsets = [0, 64], sizes = [4, 32], strides = [1, 1]} : vector<4x128xf32> to vector<4x32xf32>
    %858 = vector.extract_strided_slice %854 {offsets = [0, 96], sizes = [4, 32], strides = [1, 1]} : vector<4x128xf32> to vector<4x32xf32>
    %859 = arith.mulf %856, %810 : vector<4x32xf32>
    %860 = arith.mulf %855, %857 : vector<4x32xf32>
    %861 = arith.addf %859, %860 : vector<4x32xf32>
    %862 = math.tanh %861 : vector<4x32xf32>
    %863 = arith.mulf %858, %862 : vector<4x32xf32>
    %c7_384 = arith.constant 7 : index
    %c0_385 = arith.constant 0 : index
    %c0_386 = arith.constant 0 : index
    %864 = vector.load %arg1[%c7_384, %c0_385, %c0_386] : memref<8x4x1xf32, #tpu.memory_space<vmem>>, vector<1x4x1xf32>
    %865 = vector.shape_cast %864 : vector<1x4x1xf32> to vector<4x1xf32>
    %cst_387 = arith.constant 0.000000e+00 : f32
    %866 = vector.broadcast %cst_387 : f32 to vector<4x1xf32>
    %867 = arith.cmpf ogt, %865, %866 : vector<4x1xf32>
    %cst_388 = arith.constant 0.000000e+00 : f32
    %868 = vector.shape_cast %867 : vector<4x1xi1> to vector<4x1xi1>
    %869 = vector.broadcast %868 : vector<4x1xi1> to vector<4x32xi1>
    %870 = vector.broadcast %cst_388 : f32 to vector<4x32xf32>
    %871 = arith.select %869, %863, %870 : vector<4x32xi1>, vector<4x32xf32>
    %872 = vector.extract_strided_slice %871 {offsets = [0, 0], sizes = [2, 32], strides = [1, 1]} : vector<4x32xf32> to vector<2x32xf32>
    %c7_389 = arith.constant 7 : index
    %c0_390 = arith.constant 0 : index
    %c0_391 = arith.constant 0 : index
    %873 = vector.load %arg18[%c7_389, %c0_390, %c0_391] : memref<8x2x32xf32, #tpu.memory_space<vmem>>, vector<1x2x32xf32>
    %874 = vector.shape_cast %873 : vector<1x2x32xf32> to vector<2x32xf32>
    %875 = vector.shape_cast %872 : vector<2x32xf32> to vector<1x2x32xf32>
    tpu.vector_store %arg18[%c7_389, %c0_390, %c0_391], %875 {strides = array<i32>} : memref<8x2x32xf32, #tpu.memory_space<vmem>>, vector<1x2x32xf32>,
    %876 = vector.extract_strided_slice %871 {offsets = [2, 0], sizes = [2, 32], strides = [1, 1]} : vector<4x32xf32> to vector<2x32xf32>
    %c0_392 = arith.constant 0 : index
    %c0_393 = arith.constant 0 : index
    %c0_394 = arith.constant 0 : index
    %877 = vector.load %arg19[%c0_392, %c0_393, %c0_394] : memref<8x2x32xf32, #tpu.memory_space<vmem>>, vector<1x2x32xf32>
    %878 = vector.shape_cast %877 : vector<1x2x32xf32> to vector<2x32xf32>
    %879 = vector.shape_cast %876 : vector<2x32xf32> to vector<1x2x32xf32>
    tpu.vector_store %arg19[%c0_392, %c0_393, %c0_394], %879 {strides = array<i32>} : memref<8x2x32xf32, #tpu.memory_space<vmem>>, vector<1x2x32xf32>,
    %c0_395 = arith.constant 0 : index
    %c0_396 = arith.constant 0 : index
    %c0_397 = arith.constant 0 : index
    %880 = vector.load %arg18[%c0_395, %c0_396, %c0_397] : memref<8x2x32xf32, #tpu.memory_space<vmem>>, vector<1x2x32xf32>
    %881 = vector.shape_cast %880 : vector<1x2x32xf32> to vector<2x32xf32>
    %c0_398 = arith.constant 0 : index
    %c0_399 = arith.constant 0 : index
    %c0_400 = arith.constant 0 : index
    %882 = vector.load %arg19[%c0_398, %c0_399, %c0_400] : memref<8x2x32xf32, #tpu.memory_space<vmem>>, vector<1x2x32xf32>
    %883 = vector.shape_cast %882 : vector<1x2x32xf32> to vector<2x32xf32>
    %884 = tpu.concatenate %881, %883 in 1 : vector<2x32xf32>, vector<2x32xf32> -> vector<2x64xf32>
    %885 = vector.shape_cast %884 : vector<2x64xf32> to vector<2x1x64xf32>
    %c1_401 = arith.constant 1 : index
    %c0_402 = arith.constant 0 : index
    %c0_403 = arith.constant 0 : index
    %886 = vector.load %arg18[%c1_401, %c0_402, %c0_403] : memref<8x2x32xf32, #tpu.memory_space<vmem>>, vector<1x2x32xf32>
    %887 = vector.shape_cast %886 : vector<1x2x32xf32> to vector<2x32xf32>
    %c1_404 = arith.constant 1 : index
    %c0_405 = arith.constant 0 : index
    %c0_406 = arith.constant 0 : index
    %888 = vector.load %arg19[%c1_404, %c0_405, %c0_406] : memref<8x2x32xf32, #tpu.memory_space<vmem>>, vector<1x2x32xf32>
    %889 = vector.shape_cast %888 : vector<1x2x32xf32> to vector<2x32xf32>
    %890 = tpu.concatenate %887, %889 in 1 : vector<2x32xf32>, vector<2x32xf32> -> vector<2x64xf32>
    %891 = vector.shape_cast %890 : vector<2x64xf32> to vector<2x1x64xf32>
    %c2_407 = arith.constant 2 : index
    %c0_408 = arith.constant 0 : index
    %c0_409 = arith.constant 0 : index
    %892 = vector.load %arg18[%c2_407, %c0_408, %c0_409] : memref<8x2x32xf32, #tpu.memory_space<vmem>>, vector<1x2x32xf32>
    %893 = vector.shape_cast %892 : vector<1x2x32xf32> to vector<2x32xf32>
    %c2_410 = arith.constant 2 : index
    %c0_411 = arith.constant 0 : index
    %c0_412 = arith.constant 0 : index
    %894 = vector.load %arg19[%c2_410, %c0_411, %c0_412] : memref<8x2x32xf32, #tpu.memory_space<vmem>>, vector<1x2x32xf32>
    %895 = vector.shape_cast %894 : vector<1x2x32xf32> to vector<2x32xf32>
    %896 = tpu.concatenate %893, %895 in 1 : vector<2x32xf32>, vector<2x32xf32> -> vector<2x64xf32>
    %897 = vector.shape_cast %896 : vector<2x64xf32> to vector<2x1x64xf32>
    %c3_413 = arith.constant 3 : index
    %c0_414 = arith.constant 0 : index
    %c0_415 = arith.constant 0 : index
    %898 = vector.load %arg18[%c3_413, %c0_414, %c0_415] : memref<8x2x32xf32, #tpu.memory_space<vmem>>, vector<1x2x32xf32>
    %899 = vector.shape_cast %898 : vector<1x2x32xf32> to vector<2x32xf32>
    %c3_416 = arith.constant 3 : index
    %c0_417 = arith.constant 0 : index
    %c0_418 = arith.constant 0 : index
    %900 = vector.load %arg19[%c3_416, %c0_417, %c0_418] : memref<8x2x32xf32, #tpu.memory_space<vmem>>, vector<1x2x32xf32>
    %901 = vector.shape_cast %900 : vector<1x2x32xf32> to vector<2x32xf32>
    %902 = tpu.concatenate %899, %901 in 1 : vector<2x32xf32>, vector<2x32xf32> -> vector<2x64xf32>
    %903 = vector.shape_cast %902 : vector<2x64xf32> to vector<2x1x64xf32>
    %c4_419 = arith.constant 4 : index
    %c0_420 = arith.constant 0 : index
    %c0_421 = arith.constant 0 : index
    %904 = vector.load %arg18[%c4_419, %c0_420, %c0_421] : memref<8x2x32xf32, #tpu.memory_space<vmem>>, vector<1x2x32xf32>
    %905 = vector.shape_cast %904 : vector<1x2x32xf32> to vector<2x32xf32>
    %c4_422 = arith.constant 4 : index
    %c0_423 = arith.constant 0 : index
    %c0_424 = arith.constant 0 : index
    %906 = vector.load %arg19[%c4_422, %c0_423, %c0_424] : memref<8x2x32xf32, #tpu.memory_space<vmem>>, vector<1x2x32xf32>
    %907 = vector.shape_cast %906 : vector<1x2x32xf32> to vector<2x32xf32>
    %908 = tpu.concatenate %905, %907 in 1 : vector<2x32xf32>, vector<2x32xf32> -> vector<2x64xf32>
    %909 = vector.shape_cast %908 : vector<2x64xf32> to vector<2x1x64xf32>
    %c5_425 = arith.constant 5 : index
    %c0_426 = arith.constant 0 : index
    %c0_427 = arith.constant 0 : index
    %910 = vector.load %arg18[%c5_425, %c0_426, %c0_427] : memref<8x2x32xf32, #tpu.memory_space<vmem>>, vector<1x2x32xf32>
    %911 = vector.shape_cast %910 : vector<1x2x32xf32> to vector<2x32xf32>
    %c5_428 = arith.constant 5 : index
    %c0_429 = arith.constant 0 : index
    %c0_430 = arith.constant 0 : index
    %912 = vector.load %arg19[%c5_428, %c0_429, %c0_430] : memref<8x2x32xf32, #tpu.memory_space<vmem>>, vector<1x2x32xf32>
    %913 = vector.shape_cast %912 : vector<1x2x32xf32> to vector<2x32xf32>
    %914 = tpu.concatenate %911, %913 in 1 : vector<2x32xf32>, vector<2x32xf32> -> vector<2x64xf32>
    %915 = vector.shape_cast %914 : vector<2x64xf32> to vector<2x1x64xf32>
    %c6_431 = arith.constant 6 : index
    %c0_432 = arith.constant 0 : index
    %c0_433 = arith.constant 0 : index
    %916 = vector.load %arg18[%c6_431, %c0_432, %c0_433] : memref<8x2x32xf32, #tpu.memory_space<vmem>>, vector<1x2x32xf32>
    %917 = vector.shape_cast %916 : vector<1x2x32xf32> to vector<2x32xf32>
    %c6_434 = arith.constant 6 : index
    %c0_435 = arith.constant 0 : index
    %c0_436 = arith.constant 0 : index
    %918 = vector.load %arg19[%c6_434, %c0_435, %c0_436] : memref<8x2x32xf32, #tpu.memory_space<vmem>>, vector<1x2x32xf32>
    %919 = vector.shape_cast %918 : vector<1x2x32xf32> to vector<2x32xf32>
    %920 = tpu.concatenate %917, %919 in 1 : vector<2x32xf32>, vector<2x32xf32> -> vector<2x64xf32>
    %921 = vector.shape_cast %920 : vector<2x64xf32> to vector<2x1x64xf32>
    %c7_437 = arith.constant 7 : index
    %c0_438 = arith.constant 0 : index
    %c0_439 = arith.constant 0 : index
    %922 = vector.load %arg18[%c7_437, %c0_438, %c0_439] : memref<8x2x32xf32, #tpu.memory_space<vmem>>, vector<1x2x32xf32>
    %923 = vector.shape_cast %922 : vector<1x2x32xf32> to vector<2x32xf32>
    %c7_440 = arith.constant 7 : index
    %c0_441 = arith.constant 0 : index
    %c0_442 = arith.constant 0 : index
    %924 = vector.load %arg19[%c7_440, %c0_441, %c0_442] : memref<8x2x32xf32, #tpu.memory_space<vmem>>, vector<1x2x32xf32>
    %925 = vector.shape_cast %924 : vector<1x2x32xf32> to vector<2x32xf32>
    %926 = tpu.concatenate %923, %925 in 1 : vector<2x32xf32>, vector<2x32xf32> -> vector<2x64xf32>
    %927 = vector.shape_cast %926 : vector<2x64xf32> to vector<2x1x64xf32>
    %928 = tpu.concatenate %885, %891, %897, %903, %909, %915, %921, %927 in 1 : vector<2x1x64xf32>, vector<2x1x64xf32>, vector<2x1x64xf32>, vector<2x1x64xf32>, vector<2x1x64xf32>, vector<2x1x64xf32>, vector<2x1x64xf32>, vector<2x1x64xf32> -> vector<2x8x64xf32>
    %c0_443 = arith.constant 0 : index
    %c0_444 = arith.constant 0 : index
    %c0_445 = arith.constant 0 : index
    %929 = vector.load %arg3[%c0_443, %c0_444, %c0_445] : memref<2x4x64xf32, #tpu.memory_space<vmem>>, vector<2x4x64xf32>
    "tpu.trace_start"() <{level = 10 : i32, message = "nsd,nld->nsl"}> : () -> ()
    %cst_446 = arith.constant dense<0.000000e+00> : vector<2x4x8xf32>
    %930 = tpu.matmul %929, %928, %cst_446 {dimension_numbers = #tpu.dot_dimension_numbers<[2], [2], [1], [1], [0, 0, 0, 1, 1, 1], [0], [0]>} : vector<2x4x64xf32>, vector<2x8x64xf32>, vector<2x4x8xf32> -> vector<2x4x8xf32>
    "tpu.trace_stop"() : () -> ()
    %c0_447 = arith.constant 0 : index
    %c0_448 = arith.constant 0 : index
    %931 = vector.load %arg2[%c0_447, %c0_448] : memref<2x8xf32, #tpu.memory_space<vmem>>, vector<2x8xf32>
    %cst_449 = arith.constant 0.000000e+00 : f32
    %932 = vector.broadcast %cst_449 : f32 to vector<2x8xf32>
    %933 = arith.cmpf ogt, %931, %932 : vector<2x8xf32>
    %934 = vector.shape_cast %933 : vector<2x8xi1> to vector<2x1x8xi1>
    %cst_450 = arith.constant -1.000000e+30 : f32
    %935 = vector.shape_cast %934 : vector<2x1x8xi1> to vector<2x1x8xi1>
    %936 = vector.broadcast %935 : vector<2x1x8xi1> to vector<2x4x8xi1>
    %937 = vector.broadcast %cst_450 : f32 to vector<2x4x8xf32>
    %938 = arith.select %936, %930, %937 : vector<2x4x8xi1>, vector<2x4x8xf32>
    %cst_451 = arith.constant dense<0xFF800000> : vector<2x4xf32>
    %939 = vector.multi_reduction <maximumf>, %938, %cst_451 [2] : vector<2x4x8xf32> to vector<2x4xf32>
    %940 = vector.shape_cast %939 : vector<2x4xf32> to vector<2x4x1xf32>
    %941 = vector.broadcast %940 : vector<2x4x1xf32> to vector<2x4x8xf32>
    %942 = arith.subf %938, %941 : vector<2x4x8xf32>
    %943 = math.exp %942 : vector<2x4x8xf32>
    %cst_452 = arith.constant dense<0.000000e+00> : vector<2x4xf32>
    %944 = vector.multi_reduction <add>, %943, %cst_452 [2] : vector<2x4x8xf32> to vector<2x4xf32>
    %945 = vector.shape_cast %944 : vector<2x4xf32> to vector<2x4x1xf32>
    %946 = tpu.reciprocal %945 {approx = true} : vector<2x4x1xf32> -> vector<2x4x1xf32>
    %947 = vector.broadcast %946 : vector<2x4x1xf32> to vector<2x4x8xf32>
    %948 = arith.mulf %943, %947 : vector<2x4x8xf32>
    "tpu.trace_start"() <{level = 10 : i32, message = "nsl,nld->nsd"}> : () -> ()
    %cst_453 = arith.constant dense<0.000000e+00> : vector<2x4x64xf32>
    %949 = tpu.matmul %948, %928, %cst_453 {dimension_numbers = #tpu.dot_dimension_numbers<[2], [1], [1], [2], [0, 0, 0, 1, 1, 2], [0], [0]>} : vector<2x4x8xf32>, vector<2x8x64xf32>, vector<2x4x64xf32> -> vector<2x4x64xf32>
    "tpu.trace_stop"() : () -> ()
    %c0_454 = arith.constant 0 : index
    %c0_455 = arith.constant 0 : index
    %950 = vector.load %arg11[%c0_454, %c0_455] : memref<64x32xf32, #tpu.memory_space<vmem>>, vector<64x32xf32>
    %c0_456 = arith.constant 0 : index
    %c0_457 = arith.constant 0 : index
    %951 = vector.load %arg12[%c0_456, %c0_457] : memref<1x32xf32, #tpu.memory_space<vmem>>, vector<1x32xf32>
    %c0_458 = arith.constant 0 : index
    %c0_459 = arith.constant 0 : index
    %952 = vector.load %arg13[%c0_458, %c0_459] : memref<32x1xf32, #tpu.memory_space<vmem>>, vector<32x1xf32>
    %c0_460 = arith.constant 0 : index
    %c0_461 = arith.constant 0 : index
    %953 = vector.load %arg14[%c0_460, %c0_461] : memref<1x1xf32, #tpu.memory_space<vmem>>, vector<1x1xf32>
    %954 = vector.extract_strided_slice %949 {offsets = [0, 0, 0], sizes = [1, 4, 64], strides = [1, 1, 1]} : vector<2x4x64xf32> to vector<1x4x64xf32>
    %955 = vector.shape_cast %954 : vector<1x4x64xf32> to vector<4x64xf32>
    %cst_462 = arith.constant dense<0.000000e+00> : vector<4x32xf32>
    %956 = tpu.matmul %955, %950, %cst_462 {dimension_numbers = #tpu.dot_dimension_numbers<[1], [0], [0], [1], [0, 0, 1, 1], [], []>} : vector<4x64xf32>, vector<64x32xf32>, vector<4x32xf32> -> vector<4x32xf32>
    %957 = vector.broadcast %951 : vector<1x32xf32> to vector<4x32xf32>
    %958 = arith.addf %956, %957 : vector<4x32xf32>
    %cst_463 = arith.constant 0.000000e+00 : f32
    %959 = vector.broadcast %cst_463 : f32 to vector<4x32xf32>
    %960 = arith.maximumf %958, %959 : vector<4x32xf32>
    %cst_464 = arith.constant dense<0.000000e+00> : vector<4x1xf32>
    %961 = tpu.matmul %960, %952, %cst_464 {dimension_numbers = #tpu.dot_dimension_numbers<[1], [0], [0], [1], [0, 0, 1, 1], [], []>} : vector<4x32xf32>, vector<32x1xf32>, vector<4x1xf32> -> vector<4x1xf32>
    %962 = vector.broadcast %953 : vector<1x1xf32> to vector<4x1xf32>
    %963 = arith.addf %961, %962 : vector<4x1xf32>
    %c0_465 = arith.constant 0 : index
    %c0_466 = arith.constant 0 : index
    %c0_467 = arith.constant 0 : index
    %964 = vector.load %arg15[%c0_465, %c0_466, %c0_467] : memref<2x4x1xf32, #tpu.memory_space<vmem>>, vector<1x4x1xf32>
    %965 = vector.shape_cast %964 : vector<1x4x1xf32> to vector<4x1xf32>
    %966 = vector.shape_cast %963 : vector<4x1xf32> to vector<1x4x1xf32>
    tpu.vector_store %arg15[%c0_465, %c0_466, %c0_467], %966 {strides = array<i32>} : memref<2x4x1xf32, #tpu.memory_space<vmem>>, vector<1x4x1xf32>,
    %967 = vector.extract_strided_slice %949 {offsets = [1, 0, 0], sizes = [1, 4, 64], strides = [1, 1, 1]} : vector<2x4x64xf32> to vector<1x4x64xf32>
    %968 = vector.shape_cast %967 : vector<1x4x64xf32> to vector<4x64xf32>
    %cst_468 = arith.constant dense<0.000000e+00> : vector<4x32xf32>
    %969 = tpu.matmul %968, %950, %cst_468 {dimension_numbers = #tpu.dot_dimension_numbers<[1], [0], [0], [1], [0, 0, 1, 1], [], []>} : vector<4x64xf32>, vector<64x32xf32>, vector<4x32xf32> -> vector<4x32xf32>
    %970 = vector.broadcast %951 : vector<1x32xf32> to vector<4x32xf32>
    %971 = arith.addf %969, %970 : vector<4x32xf32>
    %cst_469 = arith.constant 0.000000e+00 : f32
    %972 = vector.broadcast %cst_469 : f32 to vector<4x32xf32>
    %973 = arith.maximumf %971, %972 : vector<4x32xf32>
    %cst_470 = arith.constant dense<0.000000e+00> : vector<4x1xf32>
    %974 = tpu.matmul %973, %952, %cst_470 {dimension_numbers = #tpu.dot_dimension_numbers<[1], [0], [0], [1], [0, 0, 1, 1], [], []>} : vector<4x32xf32>, vector<32x1xf32>, vector<4x1xf32> -> vector<4x1xf32>
    %975 = vector.broadcast %953 : vector<1x1xf32> to vector<4x1xf32>
    %976 = arith.addf %974, %975 : vector<4x1xf32>
    %c1_471 = arith.constant 1 : index
    %c0_472 = arith.constant 0 : index
    %c0_473 = arith.constant 0 : index
    %977 = vector.load %arg15[%c1_471, %c0_472, %c0_473] : memref<2x4x1xf32, #tpu.memory_space<vmem>>, vector<1x4x1xf32>
    %978 = vector.shape_cast %977 : vector<1x4x1xf32> to vector<4x1xf32>
    %979 = vector.shape_cast %976 : vector<4x1xf32> to vector<1x4x1xf32>
    tpu.vector_store %arg15[%c1_471, %c0_472, %c0_473], %979 {strides = array<i32>} : memref<2x4x1xf32, #tpu.memory_space<vmem>>, vector<1x4x1xf32>,
    return
  }
}

</mosaic_0001>

<llo_original>
// kernel: fast_attention_rnn_forward.1
$region0: #{fast_attention_rnn_forward.1}
  #allocation0 [shape = 'u32[]', space=smem, size = 0x4, offset = 0x4, fixed_abs, tag = 'smem constant byte address 0x4 - core index']
  #allocation1 [shape = 'u32[144,128]{1,0:T(1,128)}', space=vmem, size = 0x12000, scoped, tag = 'internal scratch']
  #allocation2 [shape = 'f32[8,2,32]{2,1,0:T(2,128)}', space=vmem, size = 0x2000, scoped, tag = 'scratch operand']
  #allocation3 [shape = 'f32[8,2,32]{2,1,0:T(2,128)}', space=vmem, size = 0x2000, scoped, tag = 'scratch operand']
  #allocation4 [shape = 'f32[8,2,32]{2,1,0:T(2,128)}', space=vmem, size = 0x2000, scoped, tag = 'scratch operand']
  #allocation5 [shape = 'f32[8,2,32]{2,1,0:T(2,128)}', space=vmem, size = 0x2000, scoped, tag = 'scratch operand']
  #allocation6 [shape = 'f32[1,1]{1,0:T(1,128)S(1)}', space=vmem, size = 0x200, scoped, tag = 'scoped memory for fast_attention_rnn_forward.1']
  %s0 = inlined_call_operand.vmem [shape: bf16[8,4,64], index: 0, kind: input, shape index: {}]
  %s1 = inlined_call_operand.vmem [shape: f32[8,4,1], index: 1, kind: input, shape index: {}]
  %s2 = inlined_call_operand.vmem [shape: f32[2,8], index: 2, kind: input, shape index: {}]
  %s3 = inlined_call_operand.vmem [shape: f32[2,4,64], index: 3, kind: input, shape index: {}]
  %s4 = inlined_call_operand.vmem [shape: bf16[64,128], index: 4, kind: input, shape index: {}]
  %s5 = inlined_call_operand.vmem [shape: f32[4,128], index: 5, kind: input, shape index: {}]
  %s6 = inlined_call_operand.vmem [shape: bf16[64,128], index: 6, kind: input, shape index: {}]
  %s7 = inlined_call_operand.vmem [shape: bf16[64,128], index: 7, kind: input, shape index: {}]
  %s8 = inlined_call_operand.vmem [shape: bf16[64,128], index: 8, kind: input, shape index: {}]
  %s9 = inlined_call_operand.vmem [shape: f32[4,128], index: 9, kind: input, shape index: {}]
  %s10 = inlined_call_operand.vmem [shape: bf16[64,128], index: 10, kind: input, shape index: {}]
  %s11 = inlined_call_operand.vmem [shape: f32[64,32], index: 11, kind: input, shape index: {}]
  %s12 = inlined_call_operand.vmem [shape: f32[1,32], index: 12, kind: input, shape index: {}]
  %s13 = inlined_call_operand.vmem [shape: f32[32,1], index: 13, kind: input, shape index: {}]
  %s14 = inlined_call_operand.<no memory space> [shape: f32[1,1], index: 14, kind: input, shape index: {}]
  %s15 = inlined_call_operand.vmem [shape: f32[2,4,1], index: 15, kind: output, shape index: {}]
  %s16 = sld [smem:[#allocation0]]
  $region70: #{fast_attention_rnn_forward.1} parent=0
    _
  %s18 = ssub.s32 1, %s16
  %s19 = scalar_select 0, %s18, %s16
  %v20 = vstv %s14
  %21 = vst [vmem:[#allocation6] sm:$0x1] %v20
  // Predicated region
  $region2: #{fast_attention_rnn_forward.1} parent=0 // pred_check
    _
  $region3: #{fast_attention_rnn_forward.1} parent=0 // pred_check_branch
    %23 = sbr.rel (0) target = $region5
  $region4: #{fast_attention_rnn_forward.1} parent=0 // pred_region
    _
  $region5: #{fast_attention_rnn_forward.1} parent=0 // pred_fallthru
    _
  // Predicated region
  $region6: #{fast_attention_rnn_forward.1} parent=0 // pred_check
    _
  $region7: #{fast_attention_rnn_forward.1} parent=0 // pred_check_branch
    %25 = sbr.rel (0) target = $region9
  $region8: #{fast_attention_rnn_forward.1} parent=0 // pred_region
    _
  $region9: #{fast_attention_rnn_forward.1} parent=0 // pred_fallthru
    _
  // Predicated region
  $region10: #{fast_attention_rnn_forward.1} parent=0 // pred_check
    _
  $region11: #{fast_attention_rnn_forward.1} parent=0 // pred_check_branch
    %27 = sbr.rel (0) target = $region13
  $region12: #{fast_attention_rnn_forward.1} parent=0 // pred_region
    _
  $region13: #{fast_attention_rnn_forward.1} parent=0 // pred_fallthru
    _
  // Predicated region
  $region14: #{fast_attention_rnn_forward.1} parent=0 // pred_check
    _
  $region15: #{fast_attention_rnn_forward.1} parent=0 // pred_check_branch
    %29 = sbr.rel (0) target = $region17
  $region16: #{fast_attention_rnn_forward.1} parent=0 // pred_region
    _
  $region17: #{fast_attention_rnn_forward.1} parent=0 // pred_fallthru
    _
  // Predicated region
  $region18: #{fast_attention_rnn_forward.1} parent=0 // pred_check
    _
  $region19: #{fast_attention_rnn_forward.1} parent=0 // pred_check_branch
    %31 = sbr.rel (0) target = $region21
  $region20: #{fast_attention_rnn_forward.1} parent=0 // pred_region
    _
  $region21: #{fast_attention_rnn_forward.1} parent=0 // pred_fallthru
    _
  // Predicated region
  $region22: #{fast_attention_rnn_forward.1} parent=0 // pred_check
    _
  $region23: #{fast_attention_rnn_forward.1} parent=0 // pred_check_branch
    %33 = sbr.rel (0) target = $region25
  $region24: #{fast_attention_rnn_forward.1} parent=0 // pred_region
    _
  $region25: #{fast_attention_rnn_forward.1} parent=0 // pred_fallthru
    _
  // Predicated region
  $region26: #{fast_attention_rnn_forward.1} parent=0 // pred_check
    _
  $region27: #{fast_attention_rnn_forward.1} parent=0 // pred_check_branch
    %35 = sbr.rel (0) target = $region29
  $region28: #{fast_attention_rnn_forward.1} parent=0 // pred_region
    _
  $region29: #{fast_attention_rnn_forward.1} parent=0 // pred_fallthru
    _
  // Predicated region
  $region30: #{fast_attention_rnn_forward.1} parent=0 // pred_check
    _
  $region31: #{fast_attention_rnn_forward.1} parent=0 // pred_check_branch
    %37 = sbr.rel (0) target = $region33
  $region32: #{fast_attention_rnn_forward.1} parent=0 // pred_region
    _
  $region33: #{fast_attention_rnn_forward.1} parent=0 // pred_fallthru
    _
  // Predicated region
  $region34: #{fast_attention_rnn_forward.1} parent=0 // pred_check
    _
  $region35: #{fast_attention_rnn_forward.1} parent=0 // pred_check_branch
    %39 = sbr.rel (0) target = $region37
  $region36: #{fast_attention_rnn_forward.1} parent=0 // pred_region
    _
  $region37: #{fast_attention_rnn_forward.1} parent=0 // pred_fallthru
    _
  // Predicated region
  $region38: #{fast_attention_rnn_forward.1} parent=0 // pred_check
    _
  $region39: #{fast_attention_rnn_forward.1} parent=0 // pred_check_branch
    %41 = sbr.rel (0) target = $region41
  $region40: #{fast_attention_rnn_forward.1} parent=0 // pred_region
    _
  $region41: #{fast_attention_rnn_forward.1} parent=0 // pred_fallthru
    _
  // Predicated region
  $region42: #{fast_attention_rnn_forward.1} parent=0 // pred_check
    _
  $region43: #{fast_attention_rnn_forward.1} parent=0 // pred_check_branch
    %43 = sbr.rel (0) target = $region45
  $region44: #{fast_attention_rnn_forward.1} parent=0 // pred_region
    _
  $region45: #{fast_attention_rnn_forward.1} parent=0 // pred_fallthru
    _
  // Predicated region
  $region46: #{fast_attention_rnn_forward.1} parent=0 // pred_check
    _
  $region47: #{fast_attention_rnn_forward.1} parent=0 // pred_check_branch
    %45 = sbr.rel (0) target = $region49
  $region48: #{fast_attention_rnn_forward.1} parent=0 // pred_region
    _
  $region49: #{fast_attention_rnn_forward.1} parent=0 // pred_fallthru
    _
  // Predicated region
  $region50: #{fast_attention_rnn_forward.1} parent=0 // pred_check
    _
  $region51: #{fast_attention_rnn_forward.1} parent=0 // pred_check_branch
    %47 = sbr.rel (0) target = $region53
  $region52: #{fast_attention_rnn_forward.1} parent=0 // pred_region
    _
  $region53: #{fast_attention_rnn_forward.1} parent=0 // pred_fallthru
    _
  // Predicated region
  $region54: #{fast_attention_rnn_forward.1} parent=0 // pred_check
    _
  $region55: #{fast_attention_rnn_forward.1} parent=0 // pred_check_branch
    %49 = sbr.rel (0) target = $region57
  $region56: #{fast_attention_rnn_forward.1} parent=0 // pred_region
    _
  $region57: #{fast_attention_rnn_forward.1} parent=0 // pred_fallthru
    _
  // Predicated region
  $region58: #{fast_attention_rnn_forward.1} parent=0 // pred_check
    _
  $region59: #{fast_attention_rnn_forward.1} parent=0 // pred_check_branch
    %51 = sbr.rel (0) target = $region61
  $region60: #{fast_attention_rnn_forward.1} parent=0 // pred_region
    _
  $region61: #{fast_attention_rnn_forward.1} parent=0 // pred_fallthru
    _
  %v53 = vlaneseq
  %v54 = vand.u32 %v53, 127
  %vm55 = vcmp.ge.s32.totalorder %v54, 64
  %vm56 = vcmp.lt.s32.totalorder %v54, 96
  %vm57 = vmand %vm55, %vm56
  %v58 = vlaneseq
  %v59 = vshrl.u32 %v58, 7
  %vm60 = vcmp.lt.s32.totalorder %v59, 2
  %vm61 = vcmp.lt.s32.totalorder %v54, 32
  %vm62 = vmand %vm60, %vm61
  %vm63 = vcmp.ge.s32.totalorder %v59, 2
  %vm64 = vcmp.ge.s32.totalorder %v54, 32
  %vm65 = vmand %vm63, %vm64
  %vm66 = vmor %vm62, %vm65
  %v67 = vld [vmem:[%s4] sm:$0xf]
  %v68 = vld [vmem:[%s4 + $0x4] sm:$0xf]
  %v69 = vld [vmem:[%s4 + $0x8] sm:$0xf]
  %v70 = vld [vmem:[%s4 + $0xc] sm:$0xf]
  %v71 = vld [vmem:[%s4 + $0x10] sm:$0xf]
  %v72 = vld [vmem:[%s4 + $0x14] sm:$0xf]
  %v73 = vld [vmem:[%s4 + $0x18] sm:$0xf]
  %v74 = vld [vmem:[%s4 + $0x1c] sm:$0xf]
  %v75 = vld [vmem:[%s6] sm:$0xf]
  %v76 = vld [vmem:[%s6 + $0x4] sm:$0xf]
  %v77 = vld [vmem:[%s6 + $0x8] sm:$0xf]
  %v78 = vld [vmem:[%s6 + $0xc] sm:$0xf]
  %v79 = vld [vmem:[%s6 + $0x10] sm:$0xf]
  %v80 = vld [vmem:[%s6 + $0x14] sm:$0xf]
  %v81 = vld [vmem:[%s6 + $0x18] sm:$0xf]
  %v82 = vld [vmem:[%s6 + $0x1c] sm:$0xf]
  %v83 = vld [vmem:[%s5] sm:$0xf]
  %v92 = vunpack.c.l.b16 %v75
  %v93 = vunpack.c.l.b16 %v76
  %v94 = vunpack.c.l.b16 %v77
  %v95 = vunpack.c.l.b16 %v78
  %v96 = vunpack.c.l.b16 %v79
  %v97 = vunpack.c.l.b16 %v80
  %v98 = vunpack.c.l.b16 %v81
  %v99 = vunpack.c.l.b16 %v82
  %v100 = vpack.c.b16 %v93, %v92
  %v101 = vpack.c.b16 %v95, %v94
  %v102 = vpack.c.b16 %v97, %v96
  %v103 = vpack.c.b16 %v99, %v98
  %vm108 = vcmask 523264
  %v110 = vsel %vm108, 0, 0
  %112 = vmatprep.subr.bf16.mxu0 0
  %113 = vmatpush1.bf16.msra.mxu0 %v100
  %114 = vmatprep.subr.bf16.mxu0 0
  %115 = vmatpush1.bf16.msra.mxu0 %v101
  %116 = vmatprep.subr.bf16.mxu0 0
  %117 = vmatpush1.bf16.msra.mxu0 %v102
  %118 = vmatprep.subr.bf16.mxu0 0
  %119 = vmatpush1.bf16.msra.mxu0 %v103
  %120 = vmatprep.subr.bf16.mxu0 0
  %121 = vmatpush1.bf16.msra.mxu0 0
  %122 = vmatprep.subr.bf16.mxu0 0
  %123 = vmatpush1.bf16.msra.mxu0 0
  %124 = vmatprep.subr.bf16.mxu0 0
  %125 = vmatpush1.bf16.msra.mxu0 0
  %126 = vmatprep.subr.bf16.mxu0 0
  %127 = vmatpush1.bf16.msra.mxu0 0
  %128 = vmatprep.subr.bf16.mxu0 0
  %129 = vmatpush1.bf16.msra.mxu0 0
  %130 = vmatprep.subr.bf16.mxu0 0
  %131 = vmatpush1.bf16.msra.mxu0 0
  %132 = vmatprep.subr.bf16.mxu0 0
  %133 = vmatpush1.bf16.msra.mxu0 0
  %134 = vmatprep.subr.bf16.mxu0 0
  %135 = vmatpush1.bf16.msra.mxu0 0
  %136 = vmatprep.subr.bf16.mxu0 0
  %137 = vmatpush1.bf16.msra.mxu0 0
  %138 = vmatprep.subr.bf16.mxu0 0
  %139 = vmatpush1.bf16.msra.mxu0 0
  %140 = vmatprep.subr.bf16.mxu0 0
  %141 = vmatpush1.bf16.msra.mxu0 0
  %142 = vmatprep.subr.bf16.mxu0 0
  %143 = vmatpush1.bf16.msra.mxu0 0
  %144 = vmatprep.mubr.bf16.mxu0 0
  %145 = vmatmul.mubr.bf16.gmra.mrb[0].mxu0 %v110
  %v146 = vpop.f32.mrb[0].mxu0
  %v147 = vadd.f32 0.0, %v146
  %v148 = vpop.f32.mrb[0].mxu0
  %v149 = vpop.f32.mrb[0].mxu0
  %v150 = vpop.f32.mrb[0].mxu0
  %151 = vdwg.mxu0
  %v152 = vld [vmem:[%s0] sm:$0x3]
  %v161 = vunpack.c.l.b16 %v67
  %v162 = vunpack.c.l.b16 %v68
  %v163 = vunpack.c.l.b16 %v69
  %v164 = vunpack.c.l.b16 %v70
  %v165 = vunpack.c.l.b16 %v71
  %v166 = vunpack.c.l.b16 %v72
  %v167 = vunpack.c.l.b16 %v73
  %v168 = vunpack.c.l.b16 %v74
  %v169 = vpack.c.b16 %v162, %v161
  %v170 = vpack.c.b16 %v164, %v163
  %v171 = vpack.c.b16 %v166, %v165
  %v172 = vpack.c.b16 %v168, %v167
  %v178 = vsel %vm108, %v152, 0
  %180 = vmatprep.subr.bf16.mxu0 0
  %181 = vmatpush1.bf16.msra.mxu0 %v169
  %182 = vmatprep.subr.bf16.mxu0 0
  %183 = vmatpush1.bf16.msra.mxu0 %v170
  %184 = vmatprep.subr.bf16.mxu0 0
  %185 = vmatpush1.bf16.msra.mxu0 %v171
  %186 = vmatprep.subr.bf16.mxu0 0
  %187 = vmatpush1.bf16.msra.mxu0 %v172
  %188 = vmatprep.subr.bf16.mxu0 0
  %189 = vmatpush1.bf16.msra.mxu0 0
  %190 = vmatprep.subr.bf16.mxu0 0
  %191 = vmatpush1.bf16.msra.mxu0 0
  %192 = vmatprep.subr.bf16.mxu0 0
  %193 = vmatpush1.bf16.msra.mxu0 0
  %194 = vmatprep.subr.bf16.mxu0 0
  %195 = vmatpush1.bf16.msra.mxu0 0
  %196 = vmatprep.subr.bf16.mxu0 0
  %197 = vmatpush1.bf16.msra.mxu0 0
  %198 = vmatprep.subr.bf16.mxu0 0
  %199 = vmatpush1.bf16.msra.mxu0 0
  %200 = vmatprep.subr.bf16.mxu0 0
  %201 = vmatpush1.bf16.msra.mxu0 0
  %202 = vmatprep.subr.bf16.mxu0 0
  %203 = vmatpush1.bf16.msra.mxu0 0
  %204 = vmatprep.subr.bf16.mxu0 0
  %205 = vmatpush1.bf16.msra.mxu0 0
  %206 = vmatprep.subr.bf16.mxu0 0
  %207 = vmatpush1.bf16.msra.mxu0 0
  %208 = vmatprep.subr.bf16.mxu0 0
  %209 = vmatpush1.bf16.msra.mxu0 0
  %210 = vmatprep.subr.bf16.mxu0 0
  %211 = vmatpush1.bf16.msra.mxu0 0
  %212 = vmatprep.mubr.bf16.mxu0 0
  %213 = vmatmul.mubr.bf16.gmra.mrb[0].mxu0 %v178
  %v214 = vpop.f32.mrb[0].mxu0
  %v215 = vadd.f32 %v83, %v214
  %v216 = vpop.f32.mrb[0].mxu0
  %v217 = vpop.f32.mrb[0].mxu0
  %v218 = vpop.f32.mrb[0].mxu0
  %219 = vdwg.mxu0
  %v220 = vadd.f32 %v215, %v147
  %v221 = vmul.f32 %v220, 0.5
  %v222 = vtanh.pop %v221
  %v223 = vmul.f32 %v222, 0.5
  %v224 = vadd.f32 %v223, 0.5
  %v225 = vtanh.pop %v220
  %v226 = vsel %vm57, %v225, %v224
  %v227 = vmul.f32 %v226, 0.0
  %229 = vrot.lane.b32.xlu0 %v226, 64
  %v230 = vpop.permute.xlu0 %229
  %v232 = vmul.f32 %v226, %v230
  %234 = vrot.lane.b32.xlu0 %v232, 32
  %v235 = vpop.permute.xlu0 %234
  %v237 = vadd.f32 %v227, %v235
  %v238 = vtanh.pop %v237
  %240 = vrot.lane.b32.xlu0 %v238, 64
  %v241 = vpop.permute.xlu0 %240
  %v243 = vmul.f32 %v226, %v241
  %v244 = vld [vmem:[%s1] sm:$0xf]
  %vm245 = vcmp.gt.f32.partialorder %v244, 0.0
  %v246 = vsel %vm245, 1, 0
  %247 = vset.pattern.permute.xlu0 0
  %248 = vperm.xlu0 %247, %v246
  %v249 = vpop.permute.xlu0 %248
  %vm250 = vcmp.eq.s32.totalorder %v249, 1
  %v251 = vsel %vm250, %v237, 0.0
  %v252 = vsel %vm250, %v243, 0.0
  %254 = vrot.lane.b32.xlu0 %v252, 32
  %v255 = vpop.permute.xlu0 %254
  %vm257 = vcmask 254976
  %258 = vst.msk [vmem:[#allocation2] sm:$0x3] %vm257, %v255
  %s259 = scalar_lea.vmem [#allocation3], 14
  %vm260 = vcmask 257026
  %261 = vst.msk [vmem:[%s259 - $0x2] sm:$0xc] %vm260, %v255
  %263 = vrot.lane.b32.xlu0 %v243, 32
  %v264 = vpop.permute.xlu0 %263
  %266 = vrot.lane.b32.xlu0 %v243, 64
  %v267 = vpop.permute.xlu0 %266
  %vm269 = vcmask 261120
  %v270 = vsel %vm269, %v264, %v267
  %vm271 = vmand %vm250, %vm66
  %v272 = vsel %vm271, %v270, 0.0
  %v273 = vpack.c.bf16 %v272, %v272
  %v275 = vsel %vm108, %v273, 0
  %277 = vmatprep.subr.bf16.mxu0 0
  %278 = vmatpush1.bf16.msra.mxu0 %v100
  %279 = vmatprep.subr.bf16.mxu0 0
  %280 = vmatpush1.bf16.msra.mxu0 %v101
  %281 = vmatprep.subr.bf16.mxu0 0
  %282 = vmatpush1.bf16.msra.mxu0 %v102
  %283 = vmatprep.subr.bf16.mxu0 0
  %284 = vmatpush1.bf16.msra.mxu0 %v103
  %285 = vmatprep.subr.bf16.mxu0 0
  %286 = vmatpush1.bf16.msra.mxu0 0
  %287 = vmatprep.subr.bf16.mxu0 0
  %288 = vmatpush1.bf16.msra.mxu0 0
  %289 = vmatprep.subr.bf16.mxu0 0
  %290 = vmatpush1.bf16.msra.mxu0 0
  %291 = vmatprep.subr.bf16.mxu0 0
  %292 = vmatpush1.bf16.msra.mxu0 0
  %293 = vmatprep.subr.bf16.mxu0 0
  %294 = vmatpush1.bf16.msra.mxu0 0
  %295 = vmatprep.subr.bf16.mxu0 0
  %296 = vmatpush1.bf16.msra.mxu0 0
  %297 = vmatprep.subr.bf16.mxu0 0
  %298 = vmatpush1.bf16.msra.mxu0 0
  %299 = vmatprep.subr.bf16.mxu0 0
  %300 = vmatpush1.bf16.msra.mxu0 0
  %301 = vmatprep.subr.bf16.mxu0 0
  %302 = vmatpush1.bf16.msra.mxu0 0
  %303 = vmatprep.subr.bf16.mxu0 0
  %304 = vmatpush1.bf16.msra.mxu0 0
  %305 = vmatprep.subr.bf16.mxu0 0
  %306 = vmatpush1.bf16.msra.mxu0 0
  %307 = vmatprep.subr.bf16.mxu0 0
  %308 = vmatpush1.bf16.msra.mxu0 0
  %309 = vmatprep.mubr.bf16.mxu0 0
  %310 = vmatmul.mubr.bf16.gmra.mrb[0].mxu0 %v275
  %v311 = vpop.f32.mrb[0].mxu0
  %v312 = vadd.f32 0.0, %v311
  %v313 = vpop.f32.mrb[0].mxu0
  %v314 = vpop.f32.mrb[0].mxu0
  %v315 = vpop.f32.mrb[0].mxu0
  %316 = vdwg.mxu0
  %s317 = scalar_lea.vmem %s0, 2
  %v318 = vld [vmem:[%s317] sm:$0x3]
  %v320 = vsel %vm108, %v318, 0
  %322 = vmatprep.subr.bf16.mxu0 0
  %323 = vmatpush1.bf16.msra.mxu0 %v169
  %324 = vmatprep.subr.bf16.mxu0 0
  %325 = vmatpush1.bf16.msra.mxu0 %v170
  %326 = vmatprep.subr.bf16.mxu0 0
  %327 = vmatpush1.bf16.msra.mxu0 %v171
  %328 = vmatprep.subr.bf16.mxu0 0
  %329 = vmatpush1.bf16.msra.mxu0 %v172
  %330 = vmatprep.subr.bf16.mxu0 0
  %331 = vmatpush1.bf16.msra.mxu0 0
  %332 = vmatprep.subr.bf16.mxu0 0
  %333 = vmatpush1.bf16.msra.mxu0 0
  %334 = vmatprep.subr.bf16.mxu0 0
  %335 = vmatpush1.bf16.msra.mxu0 0
  %336 = vmatprep.subr.bf16.mxu0 0
  %337 = vmatpush1.bf16.msra.mxu0 0
  %338 = vmatprep.subr.bf16.mxu0 0
  %339 = vmatpush1.bf16.msra.mxu0 0
  %340 = vmatprep.subr.bf16.mxu0 0
  %341 = vmatpush1.bf16.msra.mxu0 0
  %342 = vmatprep.subr.bf16.mxu0 0
  %343 = vmatpush1.bf16.msra.mxu0 0
  %344 = vmatprep.subr.bf16.mxu0 0
  %345 = vmatpush1.bf16.msra.mxu0 0
  %346 = vmatprep.subr.bf16.mxu0 0
  %347 = vmatpush1.bf16.msra.mxu0 0
  %348 = vmatprep.subr.bf16.mxu0 0
  %349 = vmatpush1.bf16.msra.mxu0 0
  %350 = vmatprep.subr.bf16.mxu0 0
  %351 = vmatpush1.bf16.msra.mxu0 0
  %352 = vmatprep.subr.bf16.mxu0 0
  %353 = vmatpush1.bf16.msra.mxu0 0
  %354 = vmatprep.mubr.bf16.mxu0 0
  %355 = vmatmul.mubr.bf16.gmra.mrb[0].mxu0 %v320
  %v356 = vpop.f32.mrb[0].mxu0
  %v357 = vadd.f32 %v83, %v356
  %v358 = vpop.f32.mrb[0].mxu0
  %v359 = vpop.f32.mrb[0].mxu0
  %v360 = vpop.f32.mrb[0].mxu0
  %361 = vdwg.mxu0
  %v362 = vadd.f32 %v357, %v312
  %v363 = vmul.f32 %v362, 0.5
  %v364 = vtanh.pop %v363
  %v365 = vmul.f32 %v364, 0.5
  %v366 = vadd.f32 %v365, 0.5
  %v367 = vtanh.pop %v362
  %v368 = vsel %vm57, %v367, %v366
  %v369 = vmul.f32 %v368, %v251
  %371 = vrot.lane.b32.xlu0 %v368, 64
  %v372 = vpop.permute.xlu0 %371
  %v374 = vmul.f32 %v368, %v372
  %376 = vrot.lane.b32.xlu0 %v374, 32
  %v377 = vpop.permute.xlu0 %376
  %v379 = vadd.f32 %v369, %v377
  %v380 = vtanh.pop %v379
  %382 = vrot.lane.b32.xlu0 %v380, 64
  %v383 = vpop.permute.xlu0 %382
  %v385 = vmul.f32 %v368, %v383
  %s386 = scalar_lea.vmem %s1, 4
  %v387 = vld [vmem:[%s386] sm:$0xf]
  %vm388 = vcmp.gt.f32.partialorder %v387, 0.0
  %v389 = vsel %vm388, 1, 0
  %390 = vset.pattern.permute.xlu0 0
  %391 = vperm.xlu0 %390, %v389
  %v392 = vpop.permute.xlu0 %391
  %vm393 = vcmp.eq.s32.totalorder %v392, 1
  %v394 = vsel %vm393, %v379, %v251
  %v395 = vsel %vm393, %v385, 0.0
  %397 = vrot.lane.b32.xlu0 %v395, 32
  %v398 = vpop.permute.xlu0 %397
  %s400 = scalar_lea.vmem [#allocation2], 2
  %401 = vst.msk [vmem:[%s400] sm:$0x3] %vm257, %v398
  %s402 = scalar_lea.vmem [#allocation3], 12
  %403 = vst.msk [vmem:[%s402 - $0x2] sm:$0xc] %vm260, %v398
  %405 = vrot.lane.b32.xlu0 %v385, 32
  %v406 = vpop.permute.xlu0 %405
  %408 = vrot.lane.b32.xlu0 %v385, 64
  %v409 = vpop.permute.xlu0 %408
  %v411 = vsel %vm269, %v406, %v409
  %vm412 = vmand %vm393, %vm66
  %v413 = vsel %vm412, %v411, %v272
  %v414 = vpack.c.bf16 %v413, %v413
  %v416 = vsel %vm108, %v414, 0
  %418 = vmatprep.subr.bf16.mxu0 0
  %419 = vmatpush1.bf16.msra.mxu0 %v100
  %420 = vmatprep.subr.bf16.mxu0 0
  %421 = vmatpush1.bf16.msra.mxu0 %v101
  %422 = vmatprep.subr.bf16.mxu0 0
  %423 = vmatpush1.bf16.msra.mxu0 %v102
  %424 = vmatprep.subr.bf16.mxu0 0
  %425 = vmatpush1.bf16.msra.mxu0 %v103
  %426 = vmatprep.subr.bf16.mxu0 0
  %427 = vmatpush1.bf16.msra.mxu0 0
  %428 = vmatprep.subr.bf16.mxu0 0
  %429 = vmatpush1.bf16.msra.mxu0 0
  %430 = vmatprep.subr.bf16.mxu0 0
  %431 = vmatpush1.bf16.msra.mxu0 0
  %432 = vmatprep.subr.bf16.mxu0 0
  %433 = vmatpush1.bf16.msra.mxu0 0
  %434 = vmatprep.subr.bf16.mxu0 0
  %435 = vmatpush1.bf16.msra.mxu0 0
  %436 = vmatprep.subr.bf16.mxu0 0
  %437 = vmatpush1.bf16.msra.mxu0 0
  %438 = vmatprep.subr.bf16.mxu0 0
  %439 = vmatpush1.bf16.msra.mxu0 0
  %440 = vmatprep.subr.bf16.mxu0 0
  %441 = vmatpush1.bf16.msra.mxu0 0
  %442 = vmatprep.subr.bf16.mxu0 0
  %443 = vmatpush1.bf16.msra.mxu0 0
  %444 = vmatprep.subr.bf16.mxu0 0
  %445 = vmatpush1.bf16.msra.mxu0 0
  %446 = vmatprep.subr.bf16.mxu0 0
  %447 = vmatpush1.bf16.msra.mxu0 0
  %448 = vmatprep.subr.bf16.mxu0 0
  %449 = vmatpush1.bf16.msra.mxu0 0
  %450 = vmatprep.mubr.bf16.mxu0 0
  %451 = vmatmul.mubr.bf16.gmra.mrb[0].mxu0 %v416
  %v452 = vpop.f32.mrb[0].mxu0
  %v453 = vadd.f32 0.0, %v452
  %v454 = vpop.f32.mrb[0].mxu0
  %v455 = vpop.f32.mrb[0].mxu0
  %v456 = vpop.f32.mrb[0].mxu0
  %457 = vdwg.mxu0
  %s458 = scalar_lea.vmem %s0, 4
  %v459 = vld [vmem:[%s458] sm:$0x3]
  %v461 = vsel %vm108, %v459, 0
  %463 = vmatprep.subr.bf16.mxu0 0
  %464 = vmatpush1.bf16.msra.mxu0 %v169
  %465 = vmatprep.subr.bf16.mxu0 0
  %466 = vmatpush1.bf16.msra.mxu0 %v170
  %467 = vmatprep.subr.bf16.mxu0 0
  %468 = vmatpush1.bf16.msra.mxu0 %v171
  %469 = vmatprep.subr.bf16.mxu0 0
  %470 = vmatpush1.bf16.msra.mxu0 %v172
  %471 = vmatprep.subr.bf16.mxu0 0
  %472 = vmatpush1.bf16.msra.mxu0 0
  %473 = vmatprep.subr.bf16.mxu0 0
  %474 = vmatpush1.bf16.msra.mxu0 0
  %475 = vmatprep.subr.bf16.mxu0 0
  %476 = vmatpush1.bf16.msra.mxu0 0
  %477 = vmatprep.subr.bf16.mxu0 0
  %478 = vmatpush1.bf16.msra.mxu0 0
  %479 = vmatprep.subr.bf16.mxu0 0
  %480 = vmatpush1.bf16.msra.mxu0 0
  %481 = vmatprep.subr.bf16.mxu0 0
  %482 = vmatpush1.bf16.msra.mxu0 0
  %483 = vmatprep.subr.bf16.mxu0 0
  %484 = vmatpush1.bf16.msra.mxu0 0
  %485 = vmatprep.subr.bf16.mxu0 0
  %486 = vmatpush1.bf16.msra.mxu0 0
  %487 = vmatprep.subr.bf16.mxu0 0
  %488 = vmatpush1.bf16.msra.mxu0 0
  %489 = vmatprep.subr.bf16.mxu0 0
  %490 = vmatpush1.bf16.msra.mxu0 0
  %491 = vmatprep.subr.bf16.mxu0 0
  %492 = vmatpush1.bf16.msra.mxu0 0
  %493 = vmatprep.subr.bf16.mxu0 0
  %494 = vmatpush1.bf16.msra.mxu0 0
  %495 = vmatprep.mubr.bf16.mxu0 0
  %496 = vmatmul.mubr.bf16.gmra.mrb[0].mxu0 %v461
  %v497 = vpop.f32.mrb[0].mxu0
  %v498 = vadd.f32 %v83, %v497
  %v499 = vpop.f32.mrb[0].mxu0
  %v500 = vpop.f32.mrb[0].mxu0
  %v501 = vpop.f32.mrb[0].mxu0
  %502 = vdwg.mxu0
  %v503 = vadd.f32 %v498, %v453
  %v504 = vmul.f32 %v503, 0.5
  %v505 = vtanh.pop %v504
  %v506 = vmul.f32 %v505, 0.5
  %v507 = vadd.f32 %v506, 0.5
  %v508 = vtanh.pop %v503
  %v509 = vsel %vm57, %v508, %v507
  %v510 = vmul.f32 %v509, %v394
  %512 = vrot.lane.b32.xlu0 %v509, 64
  %v513 = vpop.permute.xlu0 %512
  %v515 = vmul.f32 %v509, %v513
  %517 = vrot.lane.b32.xlu0 %v515, 32
  %v518 = vpop.permute.xlu0 %517
  %v520 = vadd.f32 %v510, %v518
  %v521 = vtanh.pop %v520
  %523 = vrot.lane.b32.xlu0 %v521, 64
  %v524 = vpop.permute.xlu0 %523
  %v526 = vmul.f32 %v509, %v524
  %s527 = scalar_lea.vmem %s1, 8
  %v528 = vld [vmem:[%s527] sm:$0xf]
  %vm529 = vcmp.gt.f32.partialorder %v528, 0.0
  %v530 = vsel %vm529, 1, 0
  %531 = vset.pattern.permute.xlu0 0
  %532 = vperm.xlu0 %531, %v530
  %v533 = vpop.permute.xlu0 %532
  %vm534 = vcmp.eq.s32.totalorder %v533, 1
  %v535 = vsel %vm534, %v520, %v394
  %v536 = vsel %vm534, %v526, 0.0
  %538 = vrot.lane.b32.xlu0 %v536, 32
  %v539 = vpop.permute.xlu0 %538
  %s541 = scalar_lea.vmem [#allocation2], 4
  %542 = vst.msk [vmem:[%s541] sm:$0x3] %vm257, %v539
  %s543 = scalar_lea.vmem [#allocation3], 10
  %544 = vst.msk [vmem:[%s543 - $0x2] sm:$0xc] %vm260, %v539
  %546 = vrot.lane.b32.xlu0 %v526, 32
  %v547 = vpop.permute.xlu0 %546
  %549 = vrot.lane.b32.xlu0 %v526, 64
  %v550 = vpop.permute.xlu0 %549
  %v552 = vsel %vm269, %v547, %v550
  %vm553 = vmand %vm534, %vm66
  %v554 = vsel %vm553, %v552, %v413
  %v555 = vpack.c.bf16 %v554, %v554
  %v557 = vsel %vm108, %v555, 0
  %559 = vmatprep.subr.bf16.mxu0 0
  %560 = vmatpush1.bf16.msra.mxu0 %v100
  %561 = vmatprep.subr.bf16.mxu0 0
  %562 = vmatpush1.bf16.msra.mxu0 %v101
  %563 = vmatprep.subr.bf16.mxu0 0
  %564 = vmatpush1.bf16.msra.mxu0 %v102
  %565 = vmatprep.subr.bf16.mxu0 0
  %566 = vmatpush1.bf16.msra.mxu0 %v103
  %567 = vmatprep.subr.bf16.mxu0 0
  %568 = vmatpush1.bf16.msra.mxu0 0
  %569 = vmatprep.subr.bf16.mxu0 0
  %570 = vmatpush1.bf16.msra.mxu0 0
  %571 = vmatprep.subr.bf16.mxu0 0
  %572 = vmatpush1.bf16.msra.mxu0 0
  %573 = vmatprep.subr.bf16.mxu0 0
  %574 = vmatpush1.bf16.msra.mxu0 0
  %575 = vmatprep.subr.bf16.mxu0 0
  %576 = vmatpush1.bf16.msra.mxu0 0
  %577 = vmatprep.subr.bf16.mxu0 0
  %578 = vmatpush1.bf16.msra.mxu0 0
  %579 = vmatprep.subr.bf16.mxu0 0
  %580 = vmatpush1.bf16.msra.mxu0 0
  %581 = vmatprep.subr.bf16.mxu0 0
  %582 = vmatpush1.bf16.msra.mxu0 0
  %583 = vmatprep.subr.bf16.mxu0 0
  %584 = vmatpush1.bf16.msra.mxu0 0
  %585 = vmatprep.subr.bf16.mxu0 0
  %586 = vmatpush1.bf16.msra.mxu0 0
  %587 = vmatprep.subr.bf16.mxu0 0
  %588 = vmatpush1.bf16.msra.mxu0 0
  %589 = vmatprep.subr.bf16.mxu0 0
  %590 = vmatpush1.bf16.msra.mxu0 0
  %591 = vmatprep.mubr.bf16.mxu0 0
  %592 = vmatmul.mubr.bf16.gmra.mrb[0].mxu0 %v557
  %v593 = vpop.f32.mrb[0].mxu0
  %v594 = vadd.f32 0.0, %v593
  %v595 = vpop.f32.mrb[0].mxu0
  %v596 = vpop.f32.mrb[0].mxu0
  %v597 = vpop.f32.mrb[0].mxu0
  %598 = vdwg.mxu0
  %s599 = scalar_lea.vmem %s0, 6
  %v600 = vld [vmem:[%s599] sm:$0x3]
  %v602 = vsel %vm108, %v600, 0
  %604 = vmatprep.subr.bf16.mxu0 0
  %605 = vmatpush1.bf16.msra.mxu0 %v169
  %606 = vmatprep.subr.bf16.mxu0 0
  %607 = vmatpush1.bf16.msra.mxu0 %v170
  %608 = vmatprep.subr.bf16.mxu0 0
  %609 = vmatpush1.bf16.msra.mxu0 %v171
  %610 = vmatprep.subr.bf16.mxu0 0
  %611 = vmatpush1.bf16.msra.mxu0 %v172
  %612 = vmatprep.subr.bf16.mxu0 0
  %613 = vmatpush1.bf16.msra.mxu0 0
  %614 = vmatprep.subr.bf16.mxu0 0
  %615 = vmatpush1.bf16.msra.mxu0 0
  %616 = vmatprep.subr.bf16.mxu0 0
  %617 = vmatpush1.bf16.msra.mxu0 0
  %618 = vmatprep.subr.bf16.mxu0 0
  %619 = vmatpush1.bf16.msra.mxu0 0
  %620 = vmatprep.subr.bf16.mxu0 0
  %621 = vmatpush1.bf16.msra.mxu0 0
  %622 = vmatprep.subr.bf16.mxu0 0
  %623 = vmatpush1.bf16.msra.mxu0 0
  %624 = vmatprep.subr.bf16.mxu0 0
  %625 = vmatpush1.bf16.msra.mxu0 0
  %626 = vmatprep.subr.bf16.mxu0 0
  %627 = vmatpush1.bf16.msra.mxu0 0
  %628 = vmatprep.subr.bf16.mxu0 0
  %629 = vmatpush1.bf16.msra.mxu0 0
  %630 = vmatprep.subr.bf16.mxu0 0
  %631 = vmatpush1.bf16.msra.mxu0 0
  %632 = vmatprep.subr.bf16.mxu0 0
  %633 = vmatpush1.bf16.msra.mxu0 0
  %634 = vmatprep.subr.bf16.mxu0 0
  %635 = vmatpush1.bf16.msra.mxu0 0
  %636 = vmatprep.mubr.bf16.mxu0 0
  %637 = vmatmul.mubr.bf16.gmra.mrb[0].mxu0 %v602
  %v638 = vpop.f32.mrb[0].mxu0
  %v639 = vadd.f32 %v83, %v638
  %v640 = vpop.f32.mrb[0].mxu0
  %v641 = vpop.f32.mrb[0].mxu0
  %v642 = vpop.f32.mrb[0].mxu0
  %643 = vdwg.mxu0
  %v644 = vadd.f32 %v639, %v594
  %v645 = vmul.f32 %v644, 0.5
  %v646 = vtanh.pop %v645
  %v647 = vmul.f32 %v646, 0.5
  %v648 = vadd.f32 %v647, 0.5
  %v649 = vtanh.pop %v644
  %v650 = vsel %vm57, %v649, %v648
  %v651 = vmul.f32 %v650, %v535
  %653 = vrot.lane.b32.xlu0 %v650, 64
  %v654 = vpop.permute.xlu0 %653
  %v656 = vmul.f32 %v650, %v654
  %658 = vrot.lane.b32.xlu0 %v656, 32
  %v659 = vpop.permute.xlu0 %658
  %v661 = vadd.f32 %v651, %v659
  %v662 = vtanh.pop %v661
  %664 = vrot.lane.b32.xlu0 %v662, 64
  %v665 = vpop.permute.xlu0 %664
  %v667 = vmul.f32 %v650, %v665
  %s668 = scalar_lea.vmem %s1, 12
  %v669 = vld [vmem:[%s668] sm:$0xf]
  %vm670 = vcmp.gt.f32.partialorder %v669, 0.0
  %v671 = vsel %vm670, 1, 0
  %672 = vset.pattern.permute.xlu0 0
  %673 = vperm.xlu0 %672, %v671
  %v674 = vpop.permute.xlu0 %673
  %vm675 = vcmp.eq.s32.totalorder %v674, 1
  %v676 = vsel %vm675, %v661, %v535
  %v677 = vsel %vm675, %v667, 0.0
  %679 = vrot.lane.b32.xlu0 %v677, 32
  %v680 = vpop.permute.xlu0 %679
  %s682 = scalar_lea.vmem [#allocation2], 6
  %683 = vst.msk [vmem:[%s682] sm:$0x3] %vm257, %v680
  %s684 = scalar_lea.vmem [#allocation3], 8
  %685 = vst.msk [vmem:[%s684 - $0x2] sm:$0xc] %vm260, %v680
  %687 = vrot.lane.b32.xlu0 %v667, 32
  %v688 = vpop.permute.xlu0 %687
  %690 = vrot.lane.b32.xlu0 %v667, 64
  %v691 = vpop.permute.xlu0 %690
  %v693 = vsel %vm269, %v688, %v691
  %vm694 = vmand %vm675, %vm66
  %v695 = vsel %vm694, %v693, %v554
  %v696 = vpack.c.bf16 %v695, %v695
  %v698 = vsel %vm108, %v696, 0
  %700 = vmatprep.subr.bf16.mxu0 0
  %701 = vmatpush1.bf16.msra.mxu0 %v100
  %702 = vmatprep.subr.bf16.mxu0 0
  %703 = vmatpush1.bf16.msra.mxu0 %v101
  %704 = vmatprep.subr.bf16.mxu0 0
  %705 = vmatpush1.bf16.msra.mxu0 %v102
  %706 = vmatprep.subr.bf16.mxu0 0
  %707 = vmatpush1.bf16.msra.mxu0 %v103
  %708 = vmatprep.subr.bf16.mxu0 0
  %709 = vmatpush1.bf16.msra.mxu0 0
  %710 = vmatprep.subr.bf16.mxu0 0
  %711 = vmatpush1.bf16.msra.mxu0 0
  %712 = vmatprep.subr.bf16.mxu0 0
  %713 = vmatpush1.bf16.msra.mxu0 0
  %714 = vmatprep.subr.bf16.mxu0 0
  %715 = vmatpush1.bf16.msra.mxu0 0
  %716 = vmatprep.subr.bf16.mxu0 0
  %717 = vmatpush1.bf16.msra.mxu0 0
  %718 = vmatprep.subr.bf16.mxu0 0
  %719 = vmatpush1.bf16.msra.mxu0 0
  %720 = vmatprep.subr.bf16.mxu0 0
  %721 = vmatpush1.bf16.msra.mxu0 0
  %722 = vmatprep.subr.bf16.mxu0 0
  %723 = vmatpush1.bf16.msra.mxu0 0
  %724 = vmatprep.subr.bf16.mxu0 0
  %725 = vmatpush1.bf16.msra.mxu0 0
  %726 = vmatprep.subr.bf16.mxu0 0
  %727 = vmatpush1.bf16.msra.mxu0 0
  %728 = vmatprep.subr.bf16.mxu0 0
  %729 = vmatpush1.bf16.msra.mxu0 0
  %730 = vmatprep.subr.bf16.mxu0 0
  %731 = vmatpush1.bf16.msra.mxu0 0
  %732 = vmatprep.mubr.bf16.mxu0 0
  %733 = vmatmul.mubr.bf16.gmra.mrb[0].mxu0 %v698
  %v734 = vpop.f32.mrb[0].mxu0
  %v735 = vadd.f32 0.0, %v734
  %v736 = vpop.f32.mrb[0].mxu0
  %v737 = vpop.f32.mrb[0].mxu0
  %v738 = vpop.f32.mrb[0].mxu0
  %739 = vdwg.mxu0
  %s740 = scalar_lea.vmem %s0, 8
  %v741 = vld [vmem:[%s740] sm:$0x3]
  %v743 = vsel %vm108, %v741, 0
  %745 = vmatprep.subr.bf16.mxu0 0
  %746 = vmatpush1.bf16.msra.mxu0 %v169
  %747 = vmatprep.subr.bf16.mxu0 0
  %748 = vmatpush1.bf16.msra.mxu0 %v170
  %749 = vmatprep.subr.bf16.mxu0 0
  %750 = vmatpush1.bf16.msra.mxu0 %v171
  %751 = vmatprep.subr.bf16.mxu0 0
  %752 = vmatpush1.bf16.msra.mxu0 %v172
  %753 = vmatprep.subr.bf16.mxu0 0
  %754 = vmatpush1.bf16.msra.mxu0 0
  %755 = vmatprep.subr.bf16.mxu0 0
  %756 = vmatpush1.bf16.msra.mxu0 0
  %757 = vmatprep.subr.bf16.mxu0 0
  %758 = vmatpush1.bf16.msra.mxu0 0
  %759 = vmatprep.subr.bf16.mxu0 0
  %760 = vmatpush1.bf16.msra.mxu0 0
  %761 = vmatprep.subr.bf16.mxu0 0
  %762 = vmatpush1.bf16.msra.mxu0 0
  %763 = vmatprep.subr.bf16.mxu0 0
  %764 = vmatpush1.bf16.msra.mxu0 0
  %765 = vmatprep.subr.bf16.mxu0 0
  %766 = vmatpush1.bf16.msra.mxu0 0
  %767 = vmatprep.subr.bf16.mxu0 0
  %768 = vmatpush1.bf16.msra.mxu0 0
  %769 = vmatprep.subr.bf16.mxu0 0
  %770 = vmatpush1.bf16.msra.mxu0 0
  %771 = vmatprep.subr.bf16.mxu0 0
  %772 = vmatpush1.bf16.msra.mxu0 0
  %773 = vmatprep.subr.bf16.mxu0 0
  %774 = vmatpush1.bf16.msra.mxu0 0
  %775 = vmatprep.subr.bf16.mxu0 0
  %776 = vmatpush1.bf16.msra.mxu0 0
  %777 = vmatprep.mubr.bf16.mxu0 0
  %778 = vmatmul.mubr.bf16.gmra.mrb[0].mxu0 %v743
  %v779 = vpop.f32.mrb[0].mxu0
  %v780 = vadd.f32 %v83, %v779
  %v781 = vpop.f32.mrb[0].mxu0
  %v782 = vpop.f32.mrb[0].mxu0
  %v783 = vpop.f32.mrb[0].mxu0
  %784 = vdwg.mxu0
  %v785 = vadd.f32 %v780, %v735
  %v786 = vmul.f32 %v785, 0.5
  %v787 = vtanh.pop %v786
  %v788 = vmul.f32 %v787, 0.5
  %v789 = vadd.f32 %v788, 0.5
  %v790 = vtanh.pop %v785
  %v791 = vsel %vm57, %v790, %v789
  %v792 = vmul.f32 %v791, %v676
  %794 = vrot.lane.b32.xlu0 %v791, 64
  %v795 = vpop.permute.xlu0 %794
  %v797 = vmul.f32 %v791, %v795
  %799 = vrot.lane.b32.xlu0 %v797, 32
  %v800 = vpop.permute.xlu0 %799
  %v802 = vadd.f32 %v792, %v800
  %v803 = vtanh.pop %v802
  %805 = vrot.lane.b32.xlu0 %v803, 64
  %v806 = vpop.permute.xlu0 %805
  %v808 = vmul.f32 %v791, %v806
  %s809 = scalar_lea.vmem %s1, 16
  %v810 = vld [vmem:[%s809] sm:$0xf]
  %vm811 = vcmp.gt.f32.partialorder %v810, 0.0
  %v812 = vsel %vm811, 1, 0
  %813 = vset.pattern.permute.xlu0 0
  %814 = vperm.xlu0 %813, %v812
  %v815 = vpop.permute.xlu0 %814
  %vm816 = vcmp.eq.s32.totalorder %v815, 1
  %v817 = vsel %vm816, %v802, %v676
  %v818 = vsel %vm816, %v808, 0.0
  %820 = vrot.lane.b32.xlu0 %v818, 32
  %v821 = vpop.permute.xlu0 %820
  %s823 = scalar_lea.vmem [#allocation2], 8
  %824 = vst.msk [vmem:[%s823] sm:$0x3] %vm257, %v821
  %s825 = scalar_lea.vmem [#allocation3], 6
  %826 = vst.msk [vmem:[%s825 - $0x2] sm:$0xc] %vm260, %v821
  %828 = vrot.lane.b32.xlu0 %v808, 32
  %v829 = vpop.permute.xlu0 %828
  %831 = vrot.lane.b32.xlu0 %v808, 64
  %v832 = vpop.permute.xlu0 %831
  %v834 = vsel %vm269, %v829, %v832
  %vm835 = vmand %vm816, %vm66
  %v836 = vsel %vm835, %v834, %v695
  %v837 = vpack.c.bf16 %v836, %v836
  %v839 = vsel %vm108, %v837, 0
  %841 = vmatprep.subr.bf16.mxu0 0
  %842 = vmatpush1.bf16.msra.mxu0 %v100
  %843 = vmatprep.subr.bf16.mxu0 0
  %844 = vmatpush1.bf16.msra.mxu0 %v101
  %845 = vmatprep.subr.bf16.mxu0 0
  %846 = vmatpush1.bf16.msra.mxu0 %v102
  %847 = vmatprep.subr.bf16.mxu0 0
  %848 = vmatpush1.bf16.msra.mxu0 %v103
  %849 = vmatprep.subr.bf16.mxu0 0
  %850 = vmatpush1.bf16.msra.mxu0 0
  %851 = vmatprep.subr.bf16.mxu0 0
  %852 = vmatpush1.bf16.msra.mxu0 0
  %853 = vmatprep.subr.bf16.mxu0 0
  %854 = vmatpush1.bf16.msra.mxu0 0
  %855 = vmatprep.subr.bf16.mxu0 0
  %856 = vmatpush1.bf16.msra.mxu0 0
  %857 = vmatprep.subr.bf16.mxu0 0
  %858 = vmatpush1.bf16.msra.mxu0 0
  %859 = vmatprep.subr.bf16.mxu0 0
  %860 = vmatpush1.bf16.msra.mxu0 0
  %861 = vmatprep.subr.bf16.mxu0 0
  %862 = vmatpush1.bf16.msra.mxu0 0
  %863 = vmatprep.subr.bf16.mxu0 0
  %864 = vmatpush1.bf16.msra.mxu0 0
  %865 = vmatprep.subr.bf16.mxu0 0
  %866 = vmatpush1.bf16.msra.mxu0 0
  %867 = vmatprep.subr.bf16.mxu0 0
  %868 = vmatpush1.bf16.msra.mxu0 0
  %869 = vmatprep.subr.bf16.mxu0 0
  %870 = vmatpush1.bf16.msra.mxu0 0
  %871 = vmatprep.subr.bf16.mxu0 0
  %872 = vmatpush1.bf16.msra.mxu0 0
  %873 = vmatprep.mubr.bf16.mxu0 0
  %874 = vmatmul.mubr.bf16.gmra.mrb[0].mxu0 %v839
  %v875 = vpop.f32.mrb[0].mxu0
  %v876 = vadd.f32 0.0, %v875
  %v877 = vpop.f32.mrb[0].mxu0
  %v878 = vpop.f32.mrb[0].mxu0
  %v879 = vpop.f32.mrb[0].mxu0
  %880 = vdwg.mxu0
  %s881 = scalar_lea.vmem %s0, 10
  %v882 = vld [vmem:[%s881] sm:$0x3]
  %v884 = vsel %vm108, %v882, 0
  %886 = vmatprep.subr.bf16.mxu0 0
  %887 = vmatpush1.bf16.msra.mxu0 %v169
  %888 = vmatprep.subr.bf16.mxu0 0
  %889 = vmatpush1.bf16.msra.mxu0 %v170
  %890 = vmatprep.subr.bf16.mxu0 0
  %891 = vmatpush1.bf16.msra.mxu0 %v171
  %892 = vmatprep.subr.bf16.mxu0 0
  %893 = vmatpush1.bf16.msra.mxu0 %v172
  %894 = vmatprep.subr.bf16.mxu0 0
  %895 = vmatpush1.bf16.msra.mxu0 0
  %896 = vmatprep.subr.bf16.mxu0 0
  %897 = vmatpush1.bf16.msra.mxu0 0
  %898 = vmatprep.subr.bf16.mxu0 0
  %899 = vmatpush1.bf16.msra.mxu0 0
  %900 = vmatprep.subr.bf16.mxu0 0
  %901 = vmatpush1.bf16.msra.mxu0 0
  %902 = vmatprep.subr.bf16.mxu0 0
  %903 = vmatpush1.bf16.msra.mxu0 0
  %904 = vmatprep.subr.bf16.mxu0 0
  %905 = vmatpush1.bf16.msra.mxu0 0
  %906 = vmatprep.subr.bf16.mxu0 0
  %907 = vmatpush1.bf16.msra.mxu0 0
  %908 = vmatprep.subr.bf16.mxu0 0
  %909 = vmatpush1.bf16.msra.mxu0 0
  %910 = vmatprep.subr.bf16.mxu0 0
  %911 = vmatpush1.bf16.msra.mxu0 0
  %912 = vmatprep.subr.bf16.mxu0 0
  %913 = vmatpush1.bf16.msra.mxu0 0
  %914 = vmatprep.subr.bf16.mxu0 0
  %915 = vmatpush1.bf16.msra.mxu0 0
  %916 = vmatprep.subr.bf16.mxu0 0
  %917 = vmatpush1.bf16.msra.mxu0 0
  %918 = vmatprep.mubr.bf16.mxu0 0
  %919 = vmatmul.mubr.bf16.gmra.mrb[0].mxu0 %v884
  %v920 = vpop.f32.mrb[0].mxu0
  %v921 = vadd.f32 %v83, %v920
  %v922 = vpop.f32.mrb[0].mxu0
  %v923 = vpop.f32.mrb[0].mxu0
  %v924 = vpop.f32.mrb[0].mxu0
  %925 = vdwg.mxu0
  %v926 = vadd.f32 %v921, %v876
  %v927 = vmul.f32 %v926, 0.5
  %v928 = vtanh.pop %v927
  %v929 = vmul.f32 %v928, 0.5
  %v930 = vadd.f32 %v929, 0.5
  %v931 = vtanh.pop %v926
  %v932 = vsel %vm57, %v931, %v930
  %v933 = vmul.f32 %v932, %v817
  %935 = vrot.lane.b32.xlu0 %v932, 64
  %v936 = vpop.permute.xlu0 %935
  %v938 = vmul.f32 %v932, %v936
  %940 = vrot.lane.b32.xlu0 %v938, 32
  %v941 = vpop.permute.xlu0 %940
  %v943 = vadd.f32 %v933, %v941
  %v944 = vtanh.pop %v943
  %946 = vrot.lane.b32.xlu0 %v944, 64
  %v947 = vpop.permute.xlu0 %946
  %v949 = vmul.f32 %v932, %v947
  %s950 = scalar_lea.vmem %s1, 20
  %v951 = vld [vmem:[%s950] sm:$0xf]
  %vm952 = vcmp.gt.f32.partialorder %v951, 0.0
  %v953 = vsel %vm952, 1, 0
  %954 = vset.pattern.permute.xlu0 0
  %955 = vperm.xlu0 %954, %v953
  %v956 = vpop.permute.xlu0 %955
  %vm957 = vcmp.eq.s32.totalorder %v956, 1
  %v958 = vsel %vm957, %v943, %v817
  %v959 = vsel %vm957, %v949, 0.0
  %961 = vrot.lane.b32.xlu0 %v959, 32
  %v962 = vpop.permute.xlu0 %961
  %s964 = scalar_lea.vmem [#allocation2], 10
  %965 = vst.msk [vmem:[%s964] sm:$0x3] %vm257, %v962
  %s966 = scalar_lea.vmem [#allocation3], 4
  %967 = vst.msk [vmem:[%s966 - $0x2] sm:$0xc] %vm260, %v962
  %969 = vrot.lane.b32.xlu0 %v949, 32
  %v970 = vpop.permute.xlu0 %969
  %972 = vrot.lane.b32.xlu0 %v949, 64
  %v973 = vpop.permute.xlu0 %972
  %v975 = vsel %vm269, %v970, %v973
  %vm976 = vmand %vm957, %vm66
  %v977 = vsel %vm976, %v975, %v836
  %v978 = vpack.c.bf16 %v977, %v977
  %v980 = vsel %vm108, %v978, 0
  %982 = vmatprep.subr.bf16.mxu0 0
  %983 = vmatpush1.bf16.msra.mxu0 %v100
  %984 = vmatprep.subr.bf16.mxu0 0
  %985 = vmatpush1.bf16.msra.mxu0 %v101
  %986 = vmatprep.subr.bf16.mxu0 0
  %987 = vmatpush1.bf16.msra.mxu0 %v102
  %988 = vmatprep.subr.bf16.mxu0 0
  %989 = vmatpush1.bf16.msra.mxu0 %v103
  %990 = vmatprep.subr.bf16.mxu0 0
  %991 = vmatpush1.bf16.msra.mxu0 0
  %992 = vmatprep.subr.bf16.mxu0 0
  %993 = vmatpush1.bf16.msra.mxu0 0
  %994 = vmatprep.subr.bf16.mxu0 0
  %995 = vmatpush1.bf16.msra.mxu0 0
  %996 = vmatprep.subr.bf16.mxu0 0
  %997 = vmatpush1.bf16.msra.mxu0 0
  %998 = vmatprep.subr.bf16.mxu0 0
  %999 = vmatpush1.bf16.msra.mxu0 0
  %1000 = vmatprep.subr.bf16.mxu0 0
  %1001 = vmatpush1.bf16.msra.mxu0 0
  %1002 = vmatprep.subr.bf16.mxu0 0
  %1003 = vmatpush1.bf16.msra.mxu0 0
  %1004 = vmatprep.subr.bf16.mxu0 0
  %1005 = vmatpush1.bf16.msra.mxu0 0
  %1006 = vmatprep.subr.bf16.mxu0 0
  %1007 = vmatpush1.bf16.msra.mxu0 0
  %1008 = vmatprep.subr.bf16.mxu0 0
  %1009 = vmatpush1.bf16.msra.mxu0 0
  %1010 = vmatprep.subr.bf16.mxu0 0
  %1011 = vmatpush1.bf16.msra.mxu0 0
  %1012 = vmatprep.subr.bf16.mxu0 0
  %1013 = vmatpush1.bf16.msra.mxu0 0
  %1014 = vmatprep.mubr.bf16.mxu0 0
  %1015 = vmatmul.mubr.bf16.gmra.mrb[0].mxu0 %v980
  %v1016 = vpop.f32.mrb[0].mxu0
  %v1017 = vadd.f32 0.0, %v1016
  %v1018 = vpop.f32.mrb[0].mxu0
  %v1019 = vpop.f32.mrb[0].mxu0
  %v1020 = vpop.f32.mrb[0].mxu0
  %1021 = vdwg.mxu0
  %s1022 = scalar_lea.vmem %s0, 12
  %v1023 = vld [vmem:[%s1022] sm:$0x3]
  %v1025 = vsel %vm108, %v1023, 0
  %1027 = vmatprep.subr.bf16.mxu0 0
  %1028 = vmatpush1.bf16.msra.mxu0 %v169
  %1029 = vmatprep.subr.bf16.mxu0 0
  %1030 = vmatpush1.bf16.msra.mxu0 %v170
  %1031 = vmatprep.subr.bf16.mxu0 0
  %1032 = vmatpush1.bf16.msra.mxu0 %v171
  %1033 = vmatprep.subr.bf16.mxu0 0
  %1034 = vmatpush1.bf16.msra.mxu0 %v172
  %1035 = vmatprep.subr.bf16.mxu0 0
  %1036 = vmatpush1.bf16.msra.mxu0 0
  %1037 = vmatprep.subr.bf16.mxu0 0
  %1038 = vmatpush1.bf16.msra.mxu0 0
  %1039 = vmatprep.subr.bf16.mxu0 0
  %1040 = vmatpush1.bf16.msra.mxu0 0
  %1041 = vmatprep.subr.bf16.mxu0 0
  %1042 = vmatpush1.bf16.msra.mxu0 0
  %1043 = vmatprep.subr.bf16.mxu0 0
  %1044 = vmatpush1.bf16.msra.mxu0 0
  %1045 = vmatprep.subr.bf16.mxu0 0
  %1046 = vmatpush1.bf16.msra.mxu0 0
  %1047 = vmatprep.subr.bf16.mxu0 0
  %1048 = vmatpush1.bf16.msra.mxu0 0
  %1049 = vmatprep.subr.bf16.mxu0 0
  %1050 = vmatpush1.bf16.msra.mxu0 0
  %1051 = vmatprep.subr.bf16.mxu0 0
  %1052 = vmatpush1.bf16.msra.mxu0 0
  %1053 = vmatprep.subr.bf16.mxu0 0
  %1054 = vmatpush1.bf16.msra.mxu0 0
  %1055 = vmatprep.subr.bf16.mxu0 0
  %1056 = vmatpush1.bf16.msra.mxu0 0
  %1057 = vmatprep.subr.bf16.mxu0 0
  %1058 = vmatpush1.bf16.msra.mxu0 0
  %1059 = vmatprep.mubr.bf16.mxu0 0
  %1060 = vmatmul.mubr.bf16.gmra.mrb[0].mxu0 %v1025
  %v1061 = vpop.f32.mrb[0].mxu0
  %v1062 = vadd.f32 %v83, %v1061
  %v1063 = vpop.f32.mrb[0].mxu0
  %v1064 = vpop.f32.mrb[0].mxu0
  %v1065 = vpop.f32.mrb[0].mxu0
  %1066 = vdwg.mxu0
  %v1067 = vadd.f32 %v1062, %v1017
  %v1068 = vmul.f32 %v1067, 0.5
  %v1069 = vtanh.pop %v1068
  %v1070 = vmul.f32 %v1069, 0.5
  %v1071 = vadd.f32 %v1070, 0.5
  %v1072 = vtanh.pop %v1067
  %v1073 = vsel %vm57, %v1072, %v1071
  %v1074 = vmul.f32 %v1073, %v958
  %1076 = vrot.lane.b32.xlu0 %v1073, 64
  %v1077 = vpop.permute.xlu0 %1076
  %v1079 = vmul.f32 %v1073, %v1077
  %1081 = vrot.lane.b32.xlu0 %v1079, 32
  %v1082 = vpop.permute.xlu0 %1081
  %v1084 = vadd.f32 %v1074, %v1082
  %v1085 = vtanh.pop %v1084
  %1087 = vrot.lane.b32.xlu0 %v1085, 64
  %v1088 = vpop.permute.xlu0 %1087
  %v1090 = vmul.f32 %v1073, %v1088
  %s1091 = scalar_lea.vmem %s1, 24
  %v1092 = vld [vmem:[%s1091] sm:$0xf]
  %vm1093 = vcmp.gt.f32.partialorder %v1092, 0.0
  %v1094 = vsel %vm1093, 1, 0
  %1095 = vset.pattern.permute.xlu0 0
  %1096 = vperm.xlu0 %1095, %v1094
  %v1097 = vpop.permute.xlu0 %1096
  %vm1098 = vcmp.eq.s32.totalorder %v1097, 1
  %v1099 = vsel %vm1098, %v1084, %v958
  %v1100 = vsel %vm1098, %v1090, 0.0
  %1102 = vrot.lane.b32.xlu0 %v1100, 32
  %v1103 = vpop.permute.xlu0 %1102
  %s1105 = scalar_lea.vmem [#allocation2], 12
  %1106 = vst.msk [vmem:[%s1105] sm:$0x3] %vm257, %v1103
  %s1107 = scalar_lea.vmem [#allocation3], 2
  %1108 = vst.msk [vmem:[%s1107 - $0x2] sm:$0xc] %vm260, %v1103
  %1110 = vrot.lane.b32.xlu0 %v1090, 32
  %v1111 = vpop.permute.xlu0 %1110
  %1113 = vrot.lane.b32.xlu0 %v1090, 64
  %v1114 = vpop.permute.xlu0 %1113
  %v1116 = vsel %vm269, %v1111, %v1114
  %vm1117 = vmand %vm1098, %vm66
  %v1118 = vsel %vm1117, %v1116, %v977
  %v1119 = vpack.c.bf16 %v1118, %v1118
  %v1121 = vsel %vm108, %v1119, 0
  %1123 = vmatprep.subr.bf16.mxu0 0
  %1124 = vmatpush1.bf16.msra.mxu0 %v100
  %1125 = vmatprep.subr.bf16.mxu0 0
  %1126 = vmatpush1.bf16.msra.mxu0 %v101
  %1127 = vmatprep.subr.bf16.mxu0 0
  %1128 = vmatpush1.bf16.msra.mxu0 %v102
  %1129 = vmatprep.subr.bf16.mxu0 0
  %1130 = vmatpush1.bf16.msra.mxu0 %v103
  %1131 = vmatprep.subr.bf16.mxu0 0
  %1132 = vmatpush1.bf16.msra.mxu0 0
  %1133 = vmatprep.subr.bf16.mxu0 0
  %1134 = vmatpush1.bf16.msra.mxu0 0
  %1135 = vmatprep.subr.bf16.mxu0 0
  %1136 = vmatpush1.bf16.msra.mxu0 0
  %1137 = vmatprep.subr.bf16.mxu0 0
  %1138 = vmatpush1.bf16.msra.mxu0 0
  %1139 = vmatprep.subr.bf16.mxu0 0
  %1140 = vmatpush1.bf16.msra.mxu0 0
  %1141 = vmatprep.subr.bf16.mxu0 0
  %1142 = vmatpush1.bf16.msra.mxu0 0
  %1143 = vmatprep.subr.bf16.mxu0 0
  %1144 = vmatpush1.bf16.msra.mxu0 0
  %1145 = vmatprep.subr.bf16.mxu0 0
  %1146 = vmatpush1.bf16.msra.mxu0 0
  %1147 = vmatprep.subr.bf16.mxu0 0
  %1148 = vmatpush1.bf16.msra.mxu0 0
  %1149 = vmatprep.subr.bf16.mxu0 0
  %1150 = vmatpush1.bf16.msra.mxu0 0
  %1151 = vmatprep.subr.bf16.mxu0 0
  %1152 = vmatpush1.bf16.msra.mxu0 0
  %1153 = vmatprep.subr.bf16.mxu0 0
  %1154 = vmatpush1.bf16.msra.mxu0 0
  %1155 = vmatprep.mubr.bf16.mxu0 0
  %1156 = vmatmul.mubr.bf16.gmra.mrb[0].mxu0 %v1121
  %v1157 = vpop.f32.mrb[0].mxu0
  %v1158 = vadd.f32 0.0, %v1157
  %v1159 = vpop.f32.mrb[0].mxu0
  %v1160 = vpop.f32.mrb[0].mxu0
  %v1161 = vpop.f32.mrb[0].mxu0
  %1162 = vdwg.mxu0
  %s1163 = scalar_lea.vmem %s0, 14
  %v1164 = vld [vmem:[%s1163] sm:$0x3]
  %v1166 = vsel %vm108, %v1164, 0
  %1168 = vmatprep.subr.bf16.mxu0 0
  %1169 = vmatpush1.bf16.msra.mxu0 %v169
  %1170 = vmatprep.subr.bf16.mxu0 0
  %1171 = vmatpush1.bf16.msra.mxu0 %v170
  %1172 = vmatprep.subr.bf16.mxu0 0
  %1173 = vmatpush1.bf16.msra.mxu0 %v171
  %1174 = vmatprep.subr.bf16.mxu0 0
  %1175 = vmatpush1.bf16.msra.mxu0 %v172
  %1176 = vmatprep.subr.bf16.mxu0 0
  %1177 = vmatpush1.bf16.msra.mxu0 0
  %1178 = vmatprep.subr.bf16.mxu0 0
  %1179 = vmatpush1.bf16.msra.mxu0 0
  %1180 = vmatprep.subr.bf16.mxu0 0
  %1181 = vmatpush1.bf16.msra.mxu0 0
  %1182 = vmatprep.subr.bf16.mxu0 0
  %1183 = vmatpush1.bf16.msra.mxu0 0
  %1184 = vmatprep.subr.bf16.mxu0 0
  %1185 = vmatpush1.bf16.msra.mxu0 0
  %1186 = vmatprep.subr.bf16.mxu0 0
  %1187 = vmatpush1.bf16.msra.mxu0 0
  %1188 = vmatprep.subr.bf16.mxu0 0
  %1189 = vmatpush1.bf16.msra.mxu0 0
  %1190 = vmatprep.subr.bf16.mxu0 0
  %1191 = vmatpush1.bf16.msra.mxu0 0
  %1192 = vmatprep.subr.bf16.mxu0 0
  %1193 = vmatpush1.bf16.msra.mxu0 0
  %1194 = vmatprep.subr.bf16.mxu0 0
  %1195 = vmatpush1.bf16.msra.mxu0 0
  %1196 = vmatprep.subr.bf16.mxu0 0
  %1197 = vmatpush1.bf16.msra.mxu0 0
  %1198 = vmatprep.subr.bf16.mxu0 0
  %1199 = vmatpush1.bf16.msra.mxu0 0
  %1200 = vmatprep.mubr.bf16.mxu0 0
  %1201 = vmatmul.mubr.bf16.gmra.mrb[0].mxu0 %v1166
  %v1202 = vpop.f32.mrb[0].mxu0
  %v1203 = vadd.f32 %v83, %v1202
  %v1204 = vpop.f32.mrb[0].mxu0
  %v1205 = vpop.f32.mrb[0].mxu0
  %v1206 = vpop.f32.mrb[0].mxu0
  %1207 = vdwg.mxu0
  %v1208 = vadd.f32 %v1203, %v1158
  %v1209 = vmul.f32 %v1208, 0.5
  %v1210 = vtanh.pop %v1209
  %v1211 = vmul.f32 %v1210, 0.5
  %v1212 = vadd.f32 %v1211, 0.5
  %v1213 = vtanh.pop %v1208
  %v1214 = vsel %vm57, %v1213, %v1212
  %v1215 = vmul.f32 %v1214, %v1099
  %1217 = vrot.lane.b32.xlu0 %v1214, 64
  %v1218 = vpop.permute.xlu0 %1217
  %v1220 = vmul.f32 %v1214, %v1218
  %1222 = vrot.lane.b32.xlu0 %v1220, 32
  %v1223 = vpop.permute.xlu0 %1222
  %v1225 = vadd.f32 %v1215, %v1223
  %v1226 = vtanh.pop %v1225
  %1228 = vrot.lane.b32.xlu0 %v1226, 64
  %v1229 = vpop.permute.xlu0 %1228
  %v1231 = vmul.f32 %v1214, %v1229
  %s1232 = scalar_lea.vmem %s1, 28
  %v1233 = vld [vmem:[%s1232] sm:$0xf]
  %vm1234 = vcmp.gt.f32.partialorder %v1233, 0.0
  %v1235 = vsel %vm1234, 1, 0
  %1236 = vset.pattern.permute.xlu0 0
  %1237 = vperm.xlu0 %1236, %v1235
  %v1238 = vpop.permute.xlu0 %1237
  %vm1239 = vcmp.eq.s32.totalorder %v1238, 1
  %v1240 = vsel %vm1239, %v1231, 0.0
  %1242 = vrot.lane.b32.xlu0 %v1240, 32
  %v1243 = vpop.permute.xlu0 %1242
  %s1245 = scalar_lea.vmem [#allocation2], 14
  %1246 = vst.msk [vmem:[%s1245] sm:$0x3] %vm257, %v1243
  %1247 = vst.msk [vmem:[#allocation3 - $0x2] sm:$0xc] %vm260, %v1243
  %v1248 = vld [vmem:[%s7] sm:$0xf]
  %v1249 = vld [vmem:[%s7 + $0x4] sm:$0xf]
  %v1250 = vld [vmem:[%s7 + $0x8] sm:$0xf]
  %v1251 = vld [vmem:[%s7 + $0xc] sm:$0xf]
  %v1252 = vld [vmem:[%s7 + $0x10] sm:$0xf]
  %v1253 = vld [vmem:[%s7 + $0x14] sm:$0xf]
  %v1254 = vld [vmem:[%s7 + $0x18] sm:$0xf]
  %v1255 = vld [vmem:[%s7 + $0x1c] sm:$0xf]
  %v1256 = vld [vmem:[%s8] sm:$0xf]
  %v1257 = vld [vmem:[%s8 + $0x4] sm:$0xf]
  %v1258 = vld [vmem:[%s8 + $0x8] sm:$0xf]
  %v1259 = vld [vmem:[%s8 + $0xc] sm:$0xf]
  %v1260 = vld [vmem:[%s8 + $0x10] sm:$0xf]
  %v1261 = vld [vmem:[%s8 + $0x14] sm:$0xf]
  %v1262 = vld [vmem:[%s8 + $0x18] sm:$0xf]
  %v1263 = vld [vmem:[%s8 + $0x1c] sm:$0xf]
  %v1264 = vld [vmem:[%s10] sm:$0xf]
  %v1265 = vld [vmem:[%s10 + $0x4] sm:$0xf]
  %v1266 = vld [vmem:[%s10 + $0x8] sm:$0xf]
  %v1267 = vld [vmem:[%s10 + $0xc] sm:$0xf]
  %v1268 = vld [vmem:[%s10 + $0x10] sm:$0xf]
  %v1269 = vld [vmem:[%s10 + $0x14] sm:$0xf]
  %v1270 = vld [vmem:[%s10 + $0x18] sm:$0xf]
  %v1271 = vld [vmem:[%s10 + $0x1c] sm:$0xf]
  %v1272 = vld [vmem:[%s9] sm:$0xf]
  %v1281 = vunpack.c.l.b16 %v1264
  %v1282 = vunpack.c.l.b16 %v1265
  %v1283 = vunpack.c.l.b16 %v1266
  %v1284 = vunpack.c.l.b16 %v1267
  %v1285 = vunpack.c.l.b16 %v1268
  %v1286 = vunpack.c.l.b16 %v1269
  %v1287 = vunpack.c.l.b16 %v1270
  %v1288 = vunpack.c.l.b16 %v1271
  %v1289 = vpack.c.b16 %v1282, %v1281
  %v1290 = vpack.c.b16 %v1284, %v1283
  %v1291 = vpack.c.b16 %v1286, %v1285
  %v1292 = vpack.c.b16 %v1288, %v1287
  %1297 = vmatprep.subr.bf16.mxu0 0
  %1298 = vmatpush1.bf16.msra.mxu0 %v1289
  %1299 = vmatprep.subr.bf16.mxu0 0
  %1300 = vmatpush1.bf16.msra.mxu0 %v1290
  %1301 = vmatprep.subr.bf16.mxu0 0
  %1302 = vmatpush1.bf16.msra.mxu0 %v1291
  %1303 = vmatprep.subr.bf16.mxu0 0
  %1304 = vmatpush1.bf16.msra.mxu0 %v1292
  %1305 = vmatprep.subr.bf16.mxu0 0
  %1306 = vmatpush1.bf16.msra.mxu0 0
  %1307 = vmatprep.subr.bf16.mxu0 0
  %1308 = vmatpush1.bf16.msra.mxu0 0
  %1309 = vmatprep.subr.bf16.mxu0 0
  %1310 = vmatpush1.bf16.msra.mxu0 0
  %1311 = vmatprep.subr.bf16.mxu0 0
  %1312 = vmatpush1.bf16.msra.mxu0 0
  %1313 = vmatprep.subr.bf16.mxu0 0
  %1314 = vmatpush1.bf16.msra.mxu0 0
  %1315 = vmatprep.subr.bf16.mxu0 0
  %1316 = vmatpush1.bf16.msra.mxu0 0
  %1317 = vmatprep.subr.bf16.mxu0 0
  %1318 = vmatpush1.bf16.msra.mxu0 0
  %1319 = vmatprep.subr.bf16.mxu0 0
  %1320 = vmatpush1.bf16.msra.mxu0 0
  %1321 = vmatprep.subr.bf16.mxu0 0
  %1322 = vmatpush1.bf16.msra.mxu0 0
  %1323 = vmatprep.subr.bf16.mxu0 0
  %1324 = vmatpush1.bf16.msra.mxu0 0
  %1325 = vmatprep.subr.bf16.mxu0 0
  %1326 = vmatpush1.bf16.msra.mxu0 0
  %1327 = vmatprep.subr.bf16.mxu0 0
  %1328 = vmatpush1.bf16.msra.mxu0 0
  %1329 = vmatprep.mubr.bf16.mxu0 0
  %1330 = vmatmul.mubr.bf16.gmra.mrb[0].mxu0 %v110
  %v1331 = vpop.f32.mrb[0].mxu0
  %v1332 = vadd.f32 0.0, %v1331
  %v1333 = vpop.f32.mrb[0].mxu0
  %v1334 = vpop.f32.mrb[0].mxu0
  %v1335 = vpop.f32.mrb[0].mxu0
  %1336 = vdwg.mxu0
  %v1337 = vld [vmem:[#allocation2] sm:$0x3]
  %v1338 = vld [vmem:[#allocation3] sm:$0x3]
  %1340 = vrot.lane.b32.xlu0 %v1338, 32
  %v1341 = vpop.permute.xlu0 %1340
  %v1343 = vsel %vm269, %v1337, %v1341
  %v1344 = vpack.c.bf16 %v1343, %v1343
  %v1345 = vld [vmem:[%s1245] sm:$0x3]
  %v1346 = vld [vmem:[%s259] sm:$0x3]
  %1348 = vrot.lane.b32.xlu0 %v1346, 32
  %v1349 = vpop.permute.xlu0 %1348
  %v1351 = vsel %vm269, %v1345, %v1349
  %v1352 = vpack.c.bf16 %v1351, %v1351
  %v1361 = vunpack.c.l.b16 %v1248
  %v1362 = vunpack.c.l.b16 %v1249
  %v1363 = vunpack.c.l.b16 %v1250
  %v1364 = vunpack.c.l.b16 %v1251
  %v1365 = vunpack.c.l.b16 %v1252
  %v1366 = vunpack.c.l.b16 %v1253
  %v1367 = vunpack.c.l.b16 %v1254
  %v1368 = vunpack.c.l.b16 %v1255
  %v1369 = vpack.c.b16 %v1362, %v1361
  %v1370 = vpack.c.b16 %v1364, %v1363
  %v1371 = vpack.c.b16 %v1366, %v1365
  %v1372 = vpack.c.b16 %v1368, %v1367
  %v1378 = vsel %vm108, %v1344, 0
  %1380 = vmatprep.subr.bf16.mxu0 0
  %1381 = vmatpush1.bf16.msra.mxu0 %v1369
  %1382 = vmatprep.subr.bf16.mxu0 0
  %1383 = vmatpush1.bf16.msra.mxu0 %v1370
  %1384 = vmatprep.subr.bf16.mxu0 0
  %1385 = vmatpush1.bf16.msra.mxu0 %v1371
  %1386 = vmatprep.subr.bf16.mxu0 0
  %1387 = vmatpush1.bf16.msra.mxu0 %v1372
  %1388 = vmatprep.subr.bf16.mxu0 0
  %1389 = vmatpush1.bf16.msra.mxu0 0
  %1390 = vmatprep.subr.bf16.mxu0 0
  %1391 = vmatpush1.bf16.msra.mxu0 0
  %1392 = vmatprep.subr.bf16.mxu0 0
  %1393 = vmatpush1.bf16.msra.mxu0 0
  %1394 = vmatprep.subr.bf16.mxu0 0
  %1395 = vmatpush1.bf16.msra.mxu0 0
  %1396 = vmatprep.subr.bf16.mxu0 0
  %1397 = vmatpush1.bf16.msra.mxu0 0
  %1398 = vmatprep.subr.bf16.mxu0 0
  %1399 = vmatpush1.bf16.msra.mxu0 0
  %1400 = vmatprep.subr.bf16.mxu0 0
  %1401 = vmatpush1.bf16.msra.mxu0 0
  %1402 = vmatprep.subr.bf16.mxu0 0
  %1403 = vmatpush1.bf16.msra.mxu0 0
  %1404 = vmatprep.subr.bf16.mxu0 0
  %1405 = vmatpush1.bf16.msra.mxu0 0
  %1406 = vmatprep.subr.bf16.mxu0 0
  %1407 = vmatpush1.bf16.msra.mxu0 0
  %1408 = vmatprep.subr.bf16.mxu0 0
  %1409 = vmatpush1.bf16.msra.mxu0 0
  %1410 = vmatprep.subr.bf16.mxu0 0
  %1411 = vmatpush1.bf16.msra.mxu0 0
  %1412 = vmatprep.mubr.bf16.mxu0 0
  %1413 = vmatmul.mubr.bf16.gmra.mrb[0].mxu0 %v1378
  %v1414 = vpop.f32.mrb[0].mxu0
  %v1415 = vadd.f32 0.0, %v1414
  %v1416 = vpop.f32.mrb[0].mxu0
  %v1417 = vpop.f32.mrb[0].mxu0
  %v1418 = vpop.f32.mrb[0].mxu0
  %1419 = vdwg.mxu0
  %v1428 = vunpack.c.l.b16 %v1256
  %v1429 = vunpack.c.l.b16 %v1257
  %v1430 = vunpack.c.l.b16 %v1258
  %v1431 = vunpack.c.l.b16 %v1259
  %v1432 = vunpack.c.l.b16 %v1260
  %v1433 = vunpack.c.l.b16 %v1261
  %v1434 = vunpack.c.l.b16 %v1262
  %v1435 = vunpack.c.l.b16 %v1263
  %v1436 = vpack.c.b16 %v1429, %v1428
  %v1437 = vpack.c.b16 %v1431, %v1430
  %v1438 = vpack.c.b16 %v1433, %v1432
  %v1439 = vpack.c.b16 %v1435, %v1434
  %v1445 = vsel %vm108, %v1352, 0
  %1447 = vmatprep.subr.bf16.mxu0 0
  %1448 = vmatpush1.bf16.msra.mxu0 %v1436
  %1449 = vmatprep.subr.bf16.mxu0 0
  %1450 = vmatpush1.bf16.msra.mxu0 %v1437
  %1451 = vmatprep.subr.bf16.mxu0 0
  %1452 = vmatpush1.bf16.msra.mxu0 %v1438
  %1453 = vmatprep.subr.bf16.mxu0 0
  %1454 = vmatpush1.bf16.msra.mxu0 %v1439
  %1455 = vmatprep.subr.bf16.mxu0 0
  %1456 = vmatpush1.bf16.msra.mxu0 0
  %1457 = vmatprep.subr.bf16.mxu0 0
  %1458 = vmatpush1.bf16.msra.mxu0 0
  %1459 = vmatprep.subr.bf16.mxu0 0
  %1460 = vmatpush1.bf16.msra.mxu0 0
  %1461 = vmatprep.subr.bf16.mxu0 0
  %1462 = vmatpush1.bf16.msra.mxu0 0
  %1463 = vmatprep.subr.bf16.mxu0 0
  %1464 = vmatpush1.bf16.msra.mxu0 0
  %1465 = vmatprep.subr.bf16.mxu0 0
  %1466 = vmatpush1.bf16.msra.mxu0 0
  %1467 = vmatprep.subr.bf16.mxu0 0
  %1468 = vmatpush1.bf16.msra.mxu0 0
  %1469 = vmatprep.subr.bf16.mxu0 0
  %1470 = vmatpush1.bf16.msra.mxu0 0
  %1471 = vmatprep.subr.bf16.mxu0 0
  %1472 = vmatpush1.bf16.msra.mxu0 0
  %1473 = vmatprep.subr.bf16.mxu0 0
  %1474 = vmatpush1.bf16.msra.mxu0 0
  %1475 = vmatprep.subr.bf16.mxu0 0
  %1476 = vmatpush1.bf16.msra.mxu0 0
  %1477 = vmatprep.subr.bf16.mxu0 0
  %1478 = vmatpush1.bf16.msra.mxu0 0
  %1479 = vmatprep.mubr.bf16.mxu0 0
  %1480 = vmatmul.mubr.bf16.gmra.mrb[0].mxu0 %v1445
  %v1481 = vpop.f32.mrb[0].mxu0
  %v1482 = vadd.f32 0.0, %v1481
  %v1483 = vpop.f32.mrb[0].mxu0
  %v1484 = vpop.f32.mrb[0].mxu0
  %v1485 = vpop.f32.mrb[0].mxu0
  %1486 = vdwg.mxu0
  %v1488 = vrot.slane %v1482, 6
  %vm1490 = vcmask 1041408
  %v1491 = vsel %vm1490, %v1415, %v1488
  %v1492 = vadd.f32 %v1491, %v1272
  %v1493 = vadd.f32 %v1492, %v1332
  %v1494 = vmul.f32 %v1493, 0.5
  %v1495 = vtanh.pop %v1494
  %v1496 = vmul.f32 %v1495, 0.5
  %v1497 = vadd.f32 %v1496, 0.5
  %v1498 = vtanh.pop %v1493
  %v1499 = vsel %vm57, %v1498, %v1497
  %v1500 = vmul.f32 %v1499, 0.0
  %1502 = vrot.lane.b32.xlu0 %v1499, 64
  %v1503 = vpop.permute.xlu0 %1502
  %v1505 = vmul.f32 %v1499, %v1503
  %1507 = vrot.lane.b32.xlu0 %v1505, 32
  %v1508 = vpop.permute.xlu0 %1507
  %v1510 = vadd.f32 %v1500, %v1508
  %v1511 = vtanh.pop %v1510
  %1513 = vrot.lane.b32.xlu0 %v1511, 64
  %v1514 = vpop.permute.xlu0 %1513
  %v1516 = vmul.f32 %v1499, %v1514
  %v1517 = vld [vmem:[%s1] sm:$0xf]
  %vm1518 = vcmp.gt.f32.partialorder %v1517, 0.0
  %v1519 = vsel %vm1518, 1, 0
  %1520 = vset.pattern.permute.xlu0 0
  %1521 = vperm.xlu0 %1520, %v1519
  %v1522 = vpop.permute.xlu0 %1521
  %vm1523 = vcmp.eq.s32.totalorder %v1522, 1
  %v1524 = vsel %vm1523, %v1510, 0.0
  %v1525 = vsel %vm1523, %v1516, 0.0
  %1527 = vrot.lane.b32.xlu0 %v1525, 32
  %v1528 = vpop.permute.xlu0 %1527
  %1530 = vst.msk [vmem:[#allocation4] sm:$0x3] %vm257, %v1528
  %s1531 = scalar_lea.vmem [#allocation5], 14
  %1532 = vst.msk [vmem:[%s1531 - $0x2] sm:$0xc] %vm260, %v1528
  %1534 = vrot.lane.b32.xlu0 %v1516, 32
  %v1535 = vpop.permute.xlu0 %1534
  %1537 = vrot.lane.b32.xlu0 %v1516, 64
  %v1538 = vpop.permute.xlu0 %1537
  %v1540 = vsel %vm269, %v1535, %v1538
  %vm1541 = vmand %vm1523, %vm66
  %v1542 = vsel %vm1541, %v1540, 0.0
  %v1543 = vpack.c.bf16 %v1542, %v1542
  %v1545 = vsel %vm108, %v1543, 0
  %1547 = vmatprep.subr.bf16.mxu0 0
  %1548 = vmatpush1.bf16.msra.mxu0 %v1289
  %1549 = vmatprep.subr.bf16.mxu0 0
  %1550 = vmatpush1.bf16.msra.mxu0 %v1290
  %1551 = vmatprep.subr.bf16.mxu0 0
  %1552 = vmatpush1.bf16.msra.mxu0 %v1291
  %1553 = vmatprep.subr.bf16.mxu0 0
  %1554 = vmatpush1.bf16.msra.mxu0 %v1292
  %1555 = vmatprep.subr.bf16.mxu0 0
  %1556 = vmatpush1.bf16.msra.mxu0 0
  %1557 = vmatprep.subr.bf16.mxu0 0
  %1558 = vmatpush1.bf16.msra.mxu0 0
  %1559 = vmatprep.subr.bf16.mxu0 0
  %1560 = vmatpush1.bf16.msra.mxu0 0
  %1561 = vmatprep.subr.bf16.mxu0 0
  %1562 = vmatpush1.bf16.msra.mxu0 0
  %1563 = vmatprep.subr.bf16.mxu0 0
  %1564 = vmatpush1.bf16.msra.mxu0 0
  %1565 = vmatprep.subr.bf16.mxu0 0
  %1566 = vmatpush1.bf16.msra.mxu0 0
  %1567 = vmatprep.subr.bf16.mxu0 0
  %1568 = vmatpush1.bf16.msra.mxu0 0
  %1569 = vmatprep.subr.bf16.mxu0 0
  %1570 = vmatpush1.bf16.msra.mxu0 0
  %1571 = vmatprep.subr.bf16.mxu0 0
  %1572 = vmatpush1.bf16.msra.mxu0 0
  %1573 = vmatprep.subr.bf16.mxu0 0
  %1574 = vmatpush1.bf16.msra.mxu0 0
  %1575 = vmatprep.subr.bf16.mxu0 0
  %1576 = vmatpush1.bf16.msra.mxu0 0
  %1577 = vmatprep.subr.bf16.mxu0 0
  %1578 = vmatpush1.bf16.msra.mxu0 0
  %1579 = vmatprep.mubr.bf16.mxu0 0
  %1580 = vmatmul.mubr.bf16.gmra.mrb[0].mxu0 %v1545
  %v1581 = vpop.f32.mrb[0].mxu0
  %v1582 = vadd.f32 0.0, %v1581
  %v1583 = vpop.f32.mrb[0].mxu0
  %v1584 = vpop.f32.mrb[0].mxu0
  %v1585 = vpop.f32.mrb[0].mxu0
  %1586 = vdwg.mxu0
  %v1587 = vld [vmem:[%s400] sm:$0x3]
  %v1588 = vld [vmem:[%s1107] sm:$0x3]
  %1590 = vrot.lane.b32.xlu0 %v1588, 32
  %v1591 = vpop.permute.xlu0 %1590
  %v1593 = vsel %vm269, %v1587, %v1591
  %v1594 = vpack.c.bf16 %v1593, %v1593
  %v1595 = vld [vmem:[%s1105] sm:$0x3]
  %v1596 = vld [vmem:[%s402] sm:$0x3]
  %1598 = vrot.lane.b32.xlu0 %v1596, 32
  %v1599 = vpop.permute.xlu0 %1598
  %v1601 = vsel %vm269, %v1595, %v1599
  %v1602 = vpack.c.bf16 %v1601, %v1601
  %v1604 = vsel %vm108, %v1594, 0
  %1606 = vmatprep.subr.bf16.mxu0 0
  %1607 = vmatpush1.bf16.msra.mxu0 %v1369
  %1608 = vmatprep.subr.bf16.mxu0 0
  %1609 = vmatpush1.bf16.msra.mxu0 %v1370
  %1610 = vmatprep.subr.bf16.mxu0 0
  %1611 = vmatpush1.bf16.msra.mxu0 %v1371
  %1612 = vmatprep.subr.bf16.mxu0 0
  %1613 = vmatpush1.bf16.msra.mxu0 %v1372
  %1614 = vmatprep.subr.bf16.mxu0 0
  %1615 = vmatpush1.bf16.msra.mxu0 0
  %1616 = vmatprep.subr.bf16.mxu0 0
  %1617 = vmatpush1.bf16.msra.mxu0 0
  %1618 = vmatprep.subr.bf16.mxu0 0
  %1619 = vmatpush1.bf16.msra.mxu0 0
  %1620 = vmatprep.subr.bf16.mxu0 0
  %1621 = vmatpush1.bf16.msra.mxu0 0
  %1622 = vmatprep.subr.bf16.mxu0 0
  %1623 = vmatpush1.bf16.msra.mxu0 0
  %1624 = vmatprep.subr.bf16.mxu0 0
  %1625 = vmatpush1.bf16.msra.mxu0 0
  %1626 = vmatprep.subr.bf16.mxu0 0
  %1627 = vmatpush1.bf16.msra.mxu0 0
  %1628 = vmatprep.subr.bf16.mxu0 0
  %1629 = vmatpush1.bf16.msra.mxu0 0
  %1630 = vmatprep.subr.bf16.mxu0 0
  %1631 = vmatpush1.bf16.msra.mxu0 0
  %1632 = vmatprep.subr.bf16.mxu0 0
  %1633 = vmatpush1.bf16.msra.mxu0 0
  %1634 = vmatprep.subr.bf16.mxu0 0
  %1635 = vmatpush1.bf16.msra.mxu0 0
  %1636 = vmatprep.subr.bf16.mxu0 0
  %1637 = vmatpush1.bf16.msra.mxu0 0
  %1638 = vmatprep.mubr.bf16.mxu0 0
  %1639 = vmatmul.mubr.bf16.gmra.mrb[0].mxu0 %v1604
  %v1640 = vpop.f32.mrb[0].mxu0
  %v1641 = vadd.f32 0.0, %v1640
  %v1642 = vpop.f32.mrb[0].mxu0
  %v1643 = vpop.f32.mrb[0].mxu0
  %v1644 = vpop.f32.mrb[0].mxu0
  %1645 = vdwg.mxu0
  %v1647 = vsel %vm108, %v1602, 0
  %1649 = vmatprep.subr.bf16.mxu0 0
  %1650 = vmatpush1.bf16.msra.mxu0 %v1436
  %1651 = vmatprep.subr.bf16.mxu0 0
  %1652 = vmatpush1.bf16.msra.mxu0 %v1437
  %1653 = vmatprep.subr.bf16.mxu0 0
  %1654 = vmatpush1.bf16.msra.mxu0 %v1438
  %1655 = vmatprep.subr.bf16.mxu0 0
  %1656 = vmatpush1.bf16.msra.mxu0 %v1439
  %1657 = vmatprep.subr.bf16.mxu0 0
  %1658 = vmatpush1.bf16.msra.mxu0 0
  %1659 = vmatprep.subr.bf16.mxu0 0
  %1660 = vmatpush1.bf16.msra.mxu0 0
  %1661 = vmatprep.subr.bf16.mxu0 0
  %1662 = vmatpush1.bf16.msra.mxu0 0
  %1663 = vmatprep.subr.bf16.mxu0 0
  %1664 = vmatpush1.bf16.msra.mxu0 0
  %1665 = vmatprep.subr.bf16.mxu0 0
  %1666 = vmatpush1.bf16.msra.mxu0 0
  %1667 = vmatprep.subr.bf16.mxu0 0
  %1668 = vmatpush1.bf16.msra.mxu0 0
  %1669 = vmatprep.subr.bf16.mxu0 0
  %1670 = vmatpush1.bf16.msra.mxu0 0
  %1671 = vmatprep.subr.bf16.mxu0 0
  %1672 = vmatpush1.bf16.msra.mxu0 0
  %1673 = vmatprep.subr.bf16.mxu0 0
  %1674 = vmatpush1.bf16.msra.mxu0 0
  %1675 = vmatprep.subr.bf16.mxu0 0
  %1676 = vmatpush1.bf16.msra.mxu0 0
  %1677 = vmatprep.subr.bf16.mxu0 0
  %1678 = vmatpush1.bf16.msra.mxu0 0
  %1679 = vmatprep.subr.bf16.mxu0 0
  %1680 = vmatpush1.bf16.msra.mxu0 0
  %1681 = vmatprep.mubr.bf16.mxu0 0
  %1682 = vmatmul.mubr.bf16.gmra.mrb[0].mxu0 %v1647
  %v1683 = vpop.f32.mrb[0].mxu0
  %v1684 = vadd.f32 0.0, %v1683
  %v1685 = vpop.f32.mrb[0].mxu0
  %v1686 = vpop.f32.mrb[0].mxu0
  %v1687 = vpop.f32.mrb[0].mxu0
  %1688 = vdwg.mxu0
  %v1690 = vrot.slane %v1684, 6
  %v1692 = vsel %vm1490, %v1641, %v1690
  %v1693 = vadd.f32 %v1692, %v1272
  %v1694 = vadd.f32 %v1693, %v1582
  %v1695 = vmul.f32 %v1694, 0.5
  %v1696 = vtanh.pop %v1695
  %v1697 = vmul.f32 %v1696, 0.5
  %v1698 = vadd.f32 %v1697, 0.5
  %v1699 = vtanh.pop %v1694
  %v1700 = vsel %vm57, %v1699, %v1698
  %v1701 = vmul.f32 %v1700, %v1524
  %1703 = vrot.lane.b32.xlu0 %v1700, 64
  %v1704 = vpop.permute.xlu0 %1703
  %v1706 = vmul.f32 %v1700, %v1704
  %1708 = vrot.lane.b32.xlu0 %v1706, 32
  %v1709 = vpop.permute.xlu0 %1708
  %v1711 = vadd.f32 %v1701, %v1709
  %v1712 = vtanh.pop %v1711
  %1714 = vrot.lane.b32.xlu0 %v1712, 64
  %v1715 = vpop.permute.xlu0 %1714
  %v1717 = vmul.f32 %v1700, %v1715
  %v1718 = vld [vmem:[%s386] sm:$0xf]
  %vm1719 = vcmp.gt.f32.partialorder %v1718, 0.0
  %v1720 = vsel %vm1719, 1, 0
  %1721 = vset.pattern.permute.xlu0 0
  %1722 = vperm.xlu0 %1721, %v1720
  %v1723 = vpop.permute.xlu0 %1722
  %vm1724 = vcmp.eq.s32.totalorder %v1723, 1
  %v1725 = vsel %vm1724, %v1711, %v1524
  %v1726 = vsel %vm1724, %v1717, 0.0
  %1728 = vrot.lane.b32.xlu0 %v1726, 32
  %v1729 = vpop.permute.xlu0 %1728
  %s1731 = scalar_lea.vmem [#allocation4], 2
  %1732 = vst.msk [vmem:[%s1731] sm:$0x3] %vm257, %v1729
  %s1733 = scalar_lea.vmem [#allocation5], 12
  %1734 = vst.msk [vmem:[%s1733 - $0x2] sm:$0xc] %vm260, %v1729
  %1736 = vrot.lane.b32.xlu0 %v1717, 32
  %v1737 = vpop.permute.xlu0 %1736
  %1739 = vrot.lane.b32.xlu0 %v1717, 64
  %v1740 = vpop.permute.xlu0 %1739
  %v1742 = vsel %vm269, %v1737, %v1740
  %vm1743 = vmand %vm1724, %vm66
  %v1744 = vsel %vm1743, %v1742, %v1542
  %v1745 = vpack.c.bf16 %v1744, %v1744
  %v1747 = vsel %vm108, %v1745, 0
  %1749 = vmatprep.subr.bf16.mxu0 0
  %1750 = vmatpush1.bf16.msra.mxu0 %v1289
  %1751 = vmatprep.subr.bf16.mxu0 0
  %1752 = vmatpush1.bf16.msra.mxu0 %v1290
  %1753 = vmatprep.subr.bf16.mxu0 0
  %1754 = vmatpush1.bf16.msra.mxu0 %v1291
  %1755 = vmatprep.subr.bf16.mxu0 0
  %1756 = vmatpush1.bf16.msra.mxu0 %v1292
  %1757 = vmatprep.subr.bf16.mxu0 0
  %1758 = vmatpush1.bf16.msra.mxu0 0
  %1759 = vmatprep.subr.bf16.mxu0 0
  %1760 = vmatpush1.bf16.msra.mxu0 0
  %1761 = vmatprep.subr.bf16.mxu0 0
  %1762 = vmatpush1.bf16.msra.mxu0 0
  %1763 = vmatprep.subr.bf16.mxu0 0
  %1764 = vmatpush1.bf16.msra.mxu0 0
  %1765 = vmatprep.subr.bf16.mxu0 0
  %1766 = vmatpush1.bf16.msra.mxu0 0
  %1767 = vmatprep.subr.bf16.mxu0 0
  %1768 = vmatpush1.bf16.msra.mxu0 0
  %1769 = vmatprep.subr.bf16.mxu0 0
  %1770 = vmatpush1.bf16.msra.mxu0 0
  %1771 = vmatprep.subr.bf16.mxu0 0
  %1772 = vmatpush1.bf16.msra.mxu0 0
  %1773 = vmatprep.subr.bf16.mxu0 0
  %1774 = vmatpush1.bf16.msra.mxu0 0
  %1775 = vmatprep.subr.bf16.mxu0 0
  %1776 = vmatpush1.bf16.msra.mxu0 0
  %1777 = vmatprep.subr.bf16.mxu0 0
  %1778 = vmatpush1.bf16.msra.mxu0 0
  %1779 = vmatprep.subr.bf16.mxu0 0
  %1780 = vmatpush1.bf16.msra.mxu0 0
  %1781 = vmatprep.mubr.bf16.mxu0 0
  %1782 = vmatmul.mubr.bf16.gmra.mrb[0].mxu0 %v1747
  %v1783 = vpop.f32.mrb[0].mxu0
  %v1784 = vadd.f32 0.0, %v1783
  %v1785 = vpop.f32.mrb[0].mxu0
  %v1786 = vpop.f32.mrb[0].mxu0
  %v1787 = vpop.f32.mrb[0].mxu0
  %1788 = vdwg.mxu0
  %v1789 = vld [vmem:[%s541] sm:$0x3]
  %v1790 = vld [vmem:[%s966] sm:$0x3]
  %1792 = vrot.lane.b32.xlu0 %v1790, 32
  %v1793 = vpop.permute.xlu0 %1792
  %v1795 = vsel %vm269, %v1789, %v1793
  %v1796 = vpack.c.bf16 %v1795, %v1795
  %v1797 = vld [vmem:[%s964] sm:$0x3]
  %v1798 = vld [vmem:[%s543] sm:$0x3]
  %1800 = vrot.lane.b32.xlu0 %v1798, 32
  %v1801 = vpop.permute.xlu0 %1800
  %v1803 = vsel %vm269, %v1797, %v1801
  %v1804 = vpack.c.bf16 %v1803, %v1803
  %v1806 = vsel %vm108, %v1796, 0
  %1808 = vmatprep.subr.bf16.mxu0 0
  %1809 = vmatpush1.bf16.msra.mxu0 %v1369
  %1810 = vmatprep.subr.bf16.mxu0 0
  %1811 = vmatpush1.bf16.msra.mxu0 %v1370
  %1812 = vmatprep.subr.bf16.mxu0 0
  %1813 = vmatpush1.bf16.msra.mxu0 %v1371
  %1814 = vmatprep.subr.bf16.mxu0 0
  %1815 = vmatpush1.bf16.msra.mxu0 %v1372
  %1816 = vmatprep.subr.bf16.mxu0 0
  %1817 = vmatpush1.bf16.msra.mxu0 0
  %1818 = vmatprep.subr.bf16.mxu0 0
  %1819 = vmatpush1.bf16.msra.mxu0 0
  %1820 = vmatprep.subr.bf16.mxu0 0
  %1821 = vmatpush1.bf16.msra.mxu0 0
  %1822 = vmatprep.subr.bf16.mxu0 0
  %1823 = vmatpush1.bf16.msra.mxu0 0
  %1824 = vmatprep.subr.bf16.mxu0 0
  %1825 = vmatpush1.bf16.msra.mxu0 0
  %1826 = vmatprep.subr.bf16.mxu0 0
  %1827 = vmatpush1.bf16.msra.mxu0 0
  %1828 = vmatprep.subr.bf16.mxu0 0
  %1829 = vmatpush1.bf16.msra.mxu0 0
  %1830 = vmatprep.subr.bf16.mxu0 0
  %1831 = vmatpush1.bf16.msra.mxu0 0
  %1832 = vmatprep.subr.bf16.mxu0 0
  %1833 = vmatpush1.bf16.msra.mxu0 0
  %1834 = vmatprep.subr.bf16.mxu0 0
  %1835 = vmatpush1.bf16.msra.mxu0 0
  %1836 = vmatprep.subr.bf16.mxu0 0
  %1837 = vmatpush1.bf16.msra.mxu0 0
  %1838 = vmatprep.subr.bf16.mxu0 0
  %1839 = vmatpush1.bf16.msra.mxu0 0
  %1840 = vmatprep.mubr.bf16.mxu0 0
  %1841 = vmatmul.mubr.bf16.gmra.mrb[0].mxu0 %v1806
  %v1842 = vpop.f32.mrb[0].mxu0
  %v1843 = vadd.f32 0.0, %v1842
  %v1844 = vpop.f32.mrb[0].mxu0
  %v1845 = vpop.f32.mrb[0].mxu0
  %v1846 = vpop.f32.mrb[0].mxu0
  %1847 = vdwg.mxu0
  %v1849 = vsel %vm108, %v1804, 0
  %1851 = vmatprep.subr.bf16.mxu0 0
  %1852 = vmatpush1.bf16.msra.mxu0 %v1436
  %1853 = vmatprep.subr.bf16.mxu0 0
  %1854 = vmatpush1.bf16.msra.mxu0 %v1437
  %1855 = vmatprep.subr.bf16.mxu0 0
  %1856 = vmatpush1.bf16.msra.mxu0 %v1438
  %1857 = vmatprep.subr.bf16.mxu0 0
  %1858 = vmatpush1.bf16.msra.mxu0 %v1439
  %1859 = vmatprep.subr.bf16.mxu0 0
  %1860 = vmatpush1.bf16.msra.mxu0 0
  %1861 = vmatprep.subr.bf16.mxu0 0
  %1862 = vmatpush1.bf16.msra.mxu0 0
  %1863 = vmatprep.subr.bf16.mxu0 0
  %1864 = vmatpush1.bf16.msra.mxu0 0
  %1865 = vmatprep.subr.bf16.mxu0 0
  %1866 = vmatpush1.bf16.msra.mxu0 0
  %1867 = vmatprep.subr.bf16.mxu0 0
  %1868 = vmatpush1.bf16.msra.mxu0 0
  %1869 = vmatprep.subr.bf16.mxu0 0
  %1870 = vmatpush1.bf16.msra.mxu0 0
  %1871 = vmatprep.subr.bf16.mxu0 0
  %1872 = vmatpush1.bf16.msra.mxu0 0
  %1873 = vmatprep.subr.bf16.mxu0 0
  %1874 = vmatpush1.bf16.msra.mxu0 0
  %1875 = vmatprep.subr.bf16.mxu0 0
  %1876 = vmatpush1.bf16.msra.mxu0 0
  %1877 = vmatprep.subr.bf16.mxu0 0
  %1878 = vmatpush1.bf16.msra.mxu0 0
  %1879 = vmatprep.subr.bf16.mxu0 0
  %1880 = vmatpush1.bf16.msra.mxu0 0
  %1881 = vmatprep.subr.bf16.mxu0 0
  %1882 = vmatpush1.bf16.msra.mxu0 0
  %1883 = vmatprep.mubr.bf16.mxu0 0
  %1884 = vmatmul.mubr.bf16.gmra.mrb[0].mxu0 %v1849
  %v1885 = vpop.f32.mrb[0].mxu0
  %v1886 = vadd.f32 0.0, %v1885
  %v1887 = vpop.f32.mrb[0].mxu0
  %v1888 = vpop.f32.mrb[0].mxu0
  %v1889 = vpop.f32.mrb[0].mxu0
  %1890 = vdwg.mxu0
  %v1892 = vrot.slane %v1886, 6
  %v1894 = vsel %vm1490, %v1843, %v1892
  %v1895 = vadd.f32 %v1894, %v1272
  %v1896 = vadd.f32 %v1895, %v1784
  %v1897 = vmul.f32 %v1896, 0.5
  %v1898 = vtanh.pop %v1897
  %v1899 = vmul.f32 %v1898, 0.5
  %v1900 = vadd.f32 %v1899, 0.5
  %v1901 = vtanh.pop %v1896
  %v1902 = vsel %vm57, %v1901, %v1900
  %v1903 = vmul.f32 %v1902, %v1725
  %1905 = vrot.lane.b32.xlu0 %v1902, 64
  %v1906 = vpop.permute.xlu0 %1905
  %v1908 = vmul.f32 %v1902, %v1906
  %1910 = vrot.lane.b32.xlu0 %v1908, 32
  %v1911 = vpop.permute.xlu0 %1910
  %v1913 = vadd.f32 %v1903, %v1911
  %v1914 = vtanh.pop %v1913
  %1916 = vrot.lane.b32.xlu0 %v1914, 64
  %v1917 = vpop.permute.xlu0 %1916
  %v1919 = vmul.f32 %v1902, %v1917
  %v1920 = vld [vmem:[%s527] sm:$0xf]
  %vm1921 = vcmp.gt.f32.partialorder %v1920, 0.0
  %v1922 = vsel %vm1921, 1, 0
  %1923 = vset.pattern.permute.xlu0 0
  %1924 = vperm.xlu0 %1923, %v1922
  %v1925 = vpop.permute.xlu0 %1924
  %vm1926 = vcmp.eq.s32.totalorder %v1925, 1
  %v1927 = vsel %vm1926, %v1913, %v1725
  %v1928 = vsel %vm1926, %v1919, 0.0
  %1930 = vrot.lane.b32.xlu0 %v1928, 32
  %v1931 = vpop.permute.xlu0 %1930
  %s1933 = scalar_lea.vmem [#allocation4], 4
  %1934 = vst.msk [vmem:[%s1933] sm:$0x3] %vm257, %v1931
  %s1935 = scalar_lea.vmem [#allocation5], 10
  %1936 = vst.msk [vmem:[%s1935 - $0x2] sm:$0xc] %vm260, %v1931
  %1938 = vrot.lane.b32.xlu0 %v1919, 32
  %v1939 = vpop.permute.xlu0 %1938
  %1941 = vrot.lane.b32.xlu0 %v1919, 64
  %v1942 = vpop.permute.xlu0 %1941
  %v1944 = vsel %vm269, %v1939, %v1942
  %vm1945 = vmand %vm1926, %vm66
  %v1946 = vsel %vm1945, %v1944, %v1744
  %v1947 = vpack.c.bf16 %v1946, %v1946
  %v1949 = vsel %vm108, %v1947, 0
  %1951 = vmatprep.subr.bf16.mxu0 0
  %1952 = vmatpush1.bf16.msra.mxu0 %v1289
  %1953 = vmatprep.subr.bf16.mxu0 0
  %1954 = vmatpush1.bf16.msra.mxu0 %v1290
  %1955 = vmatprep.subr.bf16.mxu0 0
  %1956 = vmatpush1.bf16.msra.mxu0 %v1291
  %1957 = vmatprep.subr.bf16.mxu0 0
  %1958 = vmatpush1.bf16.msra.mxu0 %v1292
  %1959 = vmatprep.subr.bf16.mxu0 0
  %1960 = vmatpush1.bf16.msra.mxu0 0
  %1961 = vmatprep.subr.bf16.mxu0 0
  %1962 = vmatpush1.bf16.msra.mxu0 0
  %1963 = vmatprep.subr.bf16.mxu0 0
  %1964 = vmatpush1.bf16.msra.mxu0 0
  %1965 = vmatprep.subr.bf16.mxu0 0
  %1966 = vmatpush1.bf16.msra.mxu0 0
  %1967 = vmatprep.subr.bf16.mxu0 0
  %1968 = vmatpush1.bf16.msra.mxu0 0
  %1969 = vmatprep.subr.bf16.mxu0 0
  %1970 = vmatpush1.bf16.msra.mxu0 0
  %1971 = vmatprep.subr.bf16.mxu0 0
  %1972 = vmatpush1.bf16.msra.mxu0 0
  %1973 = vmatprep.subr.bf16.mxu0 0
  %1974 = vmatpush1.bf16.msra.mxu0 0
  %1975 = vmatprep.subr.bf16.mxu0 0
  %1976 = vmatpush1.bf16.msra.mxu0 0
  %1977 = vmatprep.subr.bf16.mxu0 0
  %1978 = vmatpush1.bf16.msra.mxu0 0
  %1979 = vmatprep.subr.bf16.mxu0 0
  %1980 = vmatpush1.bf16.msra.mxu0 0
  %1981 = vmatprep.subr.bf16.mxu0 0
  %1982 = vmatpush1.bf16.msra.mxu0 0
  %1983 = vmatprep.mubr.bf16.mxu0 0
  %1984 = vmatmul.mubr.bf16.gmra.mrb[0].mxu0 %v1949
  %v1985 = vpop.f32.mrb[0].mxu0
  %v1986 = vadd.f32 0.0, %v1985
  %v1987 = vpop.f32.mrb[0].mxu0
  %v1988 = vpop.f32.mrb[0].mxu0
  %v1989 = vpop.f32.mrb[0].mxu0
  %1990 = vdwg.mxu0
  %v1991 = vld [vmem:[%s682] sm:$0x3]
  %v1992 = vld [vmem:[%s825] sm:$0x3]
  %1994 = vrot.lane.b32.xlu0 %v1992, 32
  %v1995 = vpop.permute.xlu0 %1994
  %v1997 = vsel %vm269, %v1991, %v1995
  %v1998 = vpack.c.bf16 %v1997, %v1997
  %v1999 = vld [vmem:[%s823] sm:$0x3]
  %v2000 = vld [vmem:[%s684] sm:$0x3]
  %2002 = vrot.lane.b32.xlu0 %v2000, 32
  %v2003 = vpop.permute.xlu0 %2002
  %v2005 = vsel %vm269, %v1999, %v2003
  %v2006 = vpack.c.bf16 %v2005, %v2005
  %v2008 = vsel %vm108, %v1998, 0
  %2010 = vmatprep.subr.bf16.mxu0 0
  %2011 = vmatpush1.bf16.msra.mxu0 %v1369
  %2012 = vmatprep.subr.bf16.mxu0 0
  %2013 = vmatpush1.bf16.msra.mxu0 %v1370
  %2014 = vmatprep.subr.bf16.mxu0 0
  %2015 = vmatpush1.bf16.msra.mxu0 %v1371
  %2016 = vmatprep.subr.bf16.mxu0 0
  %2017 = vmatpush1.bf16.msra.mxu0 %v1372
  %2018 = vmatprep.subr.bf16.mxu0 0
  %2019 = vmatpush1.bf16.msra.mxu0 0
  %2020 = vmatprep.subr.bf16.mxu0 0
  %2021 = vmatpush1.bf16.msra.mxu0 0
  %2022 = vmatprep.subr.bf16.mxu0 0
  %2023 = vmatpush1.bf16.msra.mxu0 0
  %2024 = vmatprep.subr.bf16.mxu0 0
  %2025 = vmatpush1.bf16.msra.mxu0 0
  %2026 = vmatprep.subr.bf16.mxu0 0
  %2027 = vmatpush1.bf16.msra.mxu0 0
  %2028 = vmatprep.subr.bf16.mxu0 0
  %2029 = vmatpush1.bf16.msra.mxu0 0
  %2030 = vmatprep.subr.bf16.mxu0 0
  %2031 = vmatpush1.bf16.msra.mxu0 0
  %2032 = vmatprep.subr.bf16.mxu0 0
  %2033 = vmatpush1.bf16.msra.mxu0 0
  %2034 = vmatprep.subr.bf16.mxu0 0
  %2035 = vmatpush1.bf16.msra.mxu0 0
  %2036 = vmatprep.subr.bf16.mxu0 0
  %2037 = vmatpush1.bf16.msra.mxu0 0
  %2038 = vmatprep.subr.bf16.mxu0 0
  %2039 = vmatpush1.bf16.msra.mxu0 0
  %2040 = vmatprep.subr.bf16.mxu0 0
  %2041 = vmatpush1.bf16.msra.mxu0 0
  %2042 = vmatprep.mubr.bf16.mxu0 0
  %2043 = vmatmul.mubr.bf16.gmra.mrb[0].mxu0 %v2008
  %v2044 = vpop.f32.mrb[0].mxu0
  %v2045 = vadd.f32 0.0, %v2044
  %v2046 = vpop.f32.mrb[0].mxu0
  %v2047 = vpop.f32.mrb[0].mxu0
  %v2048 = vpop.f32.mrb[0].mxu0
  %2049 = vdwg.mxu0
  %v2051 = vsel %vm108, %v2006, 0
  %2053 = vmatprep.subr.bf16.mxu0 0
  %2054 = vmatpush1.bf16.msra.mxu0 %v1436
  %2055 = vmatprep.subr.bf16.mxu0 0
  %2056 = vmatpush1.bf16.msra.mxu0 %v1437
  %2057 = vmatprep.subr.bf16.mxu0 0
  %2058 = vmatpush1.bf16.msra.mxu0 %v1438
  %2059 = vmatprep.subr.bf16.mxu0 0
  %2060 = vmatpush1.bf16.msra.mxu0 %v1439
  %2061 = vmatprep.subr.bf16.mxu0 0
  %2062 = vmatpush1.bf16.msra.mxu0 0
  %2063 = vmatprep.subr.bf16.mxu0 0
  %2064 = vmatpush1.bf16.msra.mxu0 0
  %2065 = vmatprep.subr.bf16.mxu0 0
  %2066 = vmatpush1.bf16.msra.mxu0 0
  %2067 = vmatprep.subr.bf16.mxu0 0
  %2068 = vmatpush1.bf16.msra.mxu0 0
  %2069 = vmatprep.subr.bf16.mxu0 0
  %2070 = vmatpush1.bf16.msra.mxu0 0
  %2071 = vmatprep.subr.bf16.mxu0 0
  %2072 = vmatpush1.bf16.msra.mxu0 0
  %2073 = vmatprep.subr.bf16.mxu0 0
  %2074 = vmatpush1.bf16.msra.mxu0 0
  %2075 = vmatprep.subr.bf16.mxu0 0
  %2076 = vmatpush1.bf16.msra.mxu0 0
  %2077 = vmatprep.subr.bf16.mxu0 0
  %2078 = vmatpush1.bf16.msra.mxu0 0
  %2079 = vmatprep.subr.bf16.mxu0 0
  %2080 = vmatpush1.bf16.msra.mxu0 0
  %2081 = vmatprep.subr.bf16.mxu0 0
  %2082 = vmatpush1.bf16.msra.mxu0 0
  %2083 = vmatprep.subr.bf16.mxu0 0
  %2084 = vmatpush1.bf16.msra.mxu0 0
  %2085 = vmatprep.mubr.bf16.mxu0 0
  %2086 = vmatmul.mubr.bf16.gmra.mrb[0].mxu0 %v2051
  %v2087 = vpop.f32.mrb[0].mxu0
  %v2088 = vadd.f32 0.0, %v2087
  %v2089 = vpop.f32.mrb[0].mxu0
  %v2090 = vpop.f32.mrb[0].mxu0
  %v2091 = vpop.f32.mrb[0].mxu0
  %2092 = vdwg.mxu0
  %v2094 = vrot.slane %v2088, 6
  %v2096 = vsel %vm1490, %v2045, %v2094
  %v2097 = vadd.f32 %v2096, %v1272
  %v2098 = vadd.f32 %v2097, %v1986
  %v2099 = vmul.f32 %v2098, 0.5
  %v2100 = vtanh.pop %v2099
  %v2101 = vmul.f32 %v2100, 0.5
  %v2102 = vadd.f32 %v2101, 0.5
  %v2103 = vtanh.pop %v2098
  %v2104 = vsel %vm57, %v2103, %v2102
  %v2105 = vmul.f32 %v2104, %v1927
  %2107 = vrot.lane.b32.xlu0 %v2104, 64
  %v2108 = vpop.permute.xlu0 %2107
  %v2110 = vmul.f32 %v2104, %v2108
  %2112 = vrot.lane.b32.xlu0 %v2110, 32
  %v2113 = vpop.permute.xlu0 %2112
  %v2115 = vadd.f32 %v2105, %v2113
  %v2116 = vtanh.pop %v2115
  %2118 = vrot.lane.b32.xlu0 %v2116, 64
  %v2119 = vpop.permute.xlu0 %2118
  %v2121 = vmul.f32 %v2104, %v2119
  %v2122 = vld [vmem:[%s668] sm:$0xf]
  %vm2123 = vcmp.gt.f32.partialorder %v2122, 0.0
  %v2124 = vsel %vm2123, 1, 0
  %2125 = vset.pattern.permute.xlu0 0
  %2126 = vperm.xlu0 %2125, %v2124
  %v2127 = vpop.permute.xlu0 %2126
  %vm2128 = vcmp.eq.s32.totalorder %v2127, 1
  %v2129 = vsel %vm2128, %v2115, %v1927
  %v2130 = vsel %vm2128, %v2121, 0.0
  %2132 = vrot.lane.b32.xlu0 %v2130, 32
  %v2133 = vpop.permute.xlu0 %2132
  %s2135 = scalar_lea.vmem [#allocation4], 6
  %2136 = vst.msk [vmem:[%s2135] sm:$0x3] %vm257, %v2133
  %s2137 = scalar_lea.vmem [#allocation5], 8
  %2138 = vst.msk [vmem:[%s2137 - $0x2] sm:$0xc] %vm260, %v2133
  %2140 = vrot.lane.b32.xlu0 %v2121, 32
  %v2141 = vpop.permute.xlu0 %2140
  %2143 = vrot.lane.b32.xlu0 %v2121, 64
  %v2144 = vpop.permute.xlu0 %2143
  %v2146 = vsel %vm269, %v2141, %v2144
  %vm2147 = vmand %vm2128, %vm66
  %v2148 = vsel %vm2147, %v2146, %v1946
  %v2149 = vpack.c.bf16 %v2148, %v2148
  %v2151 = vsel %vm108, %v2149, 0
  %2153 = vmatprep.subr.bf16.mxu0 0
  %2154 = vmatpush1.bf16.msra.mxu0 %v1289
  %2155 = vmatprep.subr.bf16.mxu0 0
  %2156 = vmatpush1.bf16.msra.mxu0 %v1290
  %2157 = vmatprep.subr.bf16.mxu0 0
  %2158 = vmatpush1.bf16.msra.mxu0 %v1291
  %2159 = vmatprep.subr.bf16.mxu0 0
  %2160 = vmatpush1.bf16.msra.mxu0 %v1292
  %2161 = vmatprep.subr.bf16.mxu0 0
  %2162 = vmatpush1.bf16.msra.mxu0 0
  %2163 = vmatprep.subr.bf16.mxu0 0
  %2164 = vmatpush1.bf16.msra.mxu0 0
  %2165 = vmatprep.subr.bf16.mxu0 0
  %2166 = vmatpush1.bf16.msra.mxu0 0
  %2167 = vmatprep.subr.bf16.mxu0 0
  %2168 = vmatpush1.bf16.msra.mxu0 0
  %2169 = vmatprep.subr.bf16.mxu0 0
  %2170 = vmatpush1.bf16.msra.mxu0 0
  %2171 = vmatprep.subr.bf16.mxu0 0
  %2172 = vmatpush1.bf16.msra.mxu0 0
  %2173 = vmatprep.subr.bf16.mxu0 0
  %2174 = vmatpush1.bf16.msra.mxu0 0
  %2175 = vmatprep.subr.bf16.mxu0 0
  %2176 = vmatpush1.bf16.msra.mxu0 0
  %2177 = vmatprep.subr.bf16.mxu0 0
  %2178 = vmatpush1.bf16.msra.mxu0 0
  %2179 = vmatprep.subr.bf16.mxu0 0
  %2180 = vmatpush1.bf16.msra.mxu0 0
  %2181 = vmatprep.subr.bf16.mxu0 0
  %2182 = vmatpush1.bf16.msra.mxu0 0
  %2183 = vmatprep.subr.bf16.mxu0 0
  %2184 = vmatpush1.bf16.msra.mxu0 0
  %2185 = vmatprep.mubr.bf16.mxu0 0
  %2186 = vmatmul.mubr.bf16.gmra.mrb[0].mxu0 %v2151
  %v2187 = vpop.f32.mrb[0].mxu0
  %v2188 = vadd.f32 0.0, %v2187
  %v2189 = vpop.f32.mrb[0].mxu0
  %v2190 = vpop.f32.mrb[0].mxu0
  %v2191 = vpop.f32.mrb[0].mxu0
  %2192 = vdwg.mxu0
  %v2193 = vld [vmem:[%s823] sm:$0x3]
  %v2194 = vld [vmem:[%s684] sm:$0x3]
  %2196 = vrot.lane.b32.xlu0 %v2194, 32
  %v2197 = vpop.permute.xlu0 %2196
  %v2199 = vsel %vm269, %v2193, %v2197
  %v2200 = vpack.c.bf16 %v2199, %v2199
  %v2201 = vld [vmem:[%s682] sm:$0x3]
  %v2202 = vld [vmem:[%s825] sm:$0x3]
  %2204 = vrot.lane.b32.xlu0 %v2202, 32
  %v2205 = vpop.permute.xlu0 %2204
  %v2207 = vsel %vm269, %v2201, %v2205
  %v2208 = vpack.c.bf16 %v2207, %v2207
  %v2210 = vsel %vm108, %v2200, 0
  %2212 = vmatprep.subr.bf16.mxu0 0
  %2213 = vmatpush1.bf16.msra.mxu0 %v1369
  %2214 = vmatprep.subr.bf16.mxu0 0
  %2215 = vmatpush1.bf16.msra.mxu0 %v1370
  %2216 = vmatprep.subr.bf16.mxu0 0
  %2217 = vmatpush1.bf16.msra.mxu0 %v1371
  %2218 = vmatprep.subr.bf16.mxu0 0
  %2219 = vmatpush1.bf16.msra.mxu0 %v1372
  %2220 = vmatprep.subr.bf16.mxu0 0
  %2221 = vmatpush1.bf16.msra.mxu0 0
  %2222 = vmatprep.subr.bf16.mxu0 0
  %2223 = vmatpush1.bf16.msra.mxu0 0
  %2224 = vmatprep.subr.bf16.mxu0 0
  %2225 = vmatpush1.bf16.msra.mxu0 0
  %2226 = vmatprep.subr.bf16.mxu0 0
  %2227 = vmatpush1.bf16.msra.mxu0 0
  %2228 = vmatprep.subr.bf16.mxu0 0
  %2229 = vmatpush1.bf16.msra.mxu0 0
  %2230 = vmatprep.subr.bf16.mxu0 0
  %2231 = vmatpush1.bf16.msra.mxu0 0
  %2232 = vmatprep.subr.bf16.mxu0 0
  %2233 = vmatpush1.bf16.msra.mxu0 0
  %2234 = vmatprep.subr.bf16.mxu0 0
  %2235 = vmatpush1.bf16.msra.mxu0 0
  %2236 = vmatprep.subr.bf16.mxu0 0
  %2237 = vmatpush1.bf16.msra.mxu0 0
  %2238 = vmatprep.subr.bf16.mxu0 0
  %2239 = vmatpush1.bf16.msra.mxu0 0
  %2240 = vmatprep.subr.bf16.mxu0 0
  %2241 = vmatpush1.bf16.msra.mxu0 0
  %2242 = vmatprep.subr.bf16.mxu0 0
  %2243 = vmatpush1.bf16.msra.mxu0 0
  %2244 = vmatprep.mubr.bf16.mxu0 0
  %2245 = vmatmul.mubr.bf16.gmra.mrb[0].mxu0 %v2210
  %v2246 = vpop.f32.mrb[0].mxu0
  %v2247 = vadd.f32 0.0, %v2246
  %v2248 = vpop.f32.mrb[0].mxu0
  %v2249 = vpop.f32.mrb[0].mxu0
  %v2250 = vpop.f32.mrb[0].mxu0
  %2251 = vdwg.mxu0
  %v2253 = vsel %vm108, %v2208, 0
  %2255 = vmatprep.subr.bf16.mxu0 0
  %2256 = vmatpush1.bf16.msra.mxu0 %v1436
  %2257 = vmatprep.subr.bf16.mxu0 0
  %2258 = vmatpush1.bf16.msra.mxu0 %v1437
  %2259 = vmatprep.subr.bf16.mxu0 0
  %2260 = vmatpush1.bf16.msra.mxu0 %v1438
  %2261 = vmatprep.subr.bf16.mxu0 0
  %2262 = vmatpush1.bf16.msra.mxu0 %v1439
  %2263 = vmatprep.subr.bf16.mxu0 0
  %2264 = vmatpush1.bf16.msra.mxu0 0
  %2265 = vmatprep.subr.bf16.mxu0 0
  %2266 = vmatpush1.bf16.msra.mxu0 0
  %2267 = vmatprep.subr.bf16.mxu0 0
  %2268 = vmatpush1.bf16.msra.mxu0 0
  %2269 = vmatprep.subr.bf16.mxu0 0
  %2270 = vmatpush1.bf16.msra.mxu0 0
  %2271 = vmatprep.subr.bf16.mxu0 0
  %2272 = vmatpush1.bf16.msra.mxu0 0
  %2273 = vmatprep.subr.bf16.mxu0 0
  %2274 = vmatpush1.bf16.msra.mxu0 0
  %2275 = vmatprep.subr.bf16.mxu0 0
  %2276 = vmatpush1.bf16.msra.mxu0 0
  %2277 = vmatprep.subr.bf16.mxu0 0
  %2278 = vmatpush1.bf16.msra.mxu0 0
  %2279 = vmatprep.subr.bf16.mxu0 0
  %2280 = vmatpush1.bf16.msra.mxu0 0
  %2281 = vmatprep.subr.bf16.mxu0 0
  %2282 = vmatpush1.bf16.msra.mxu0 0
  %2283 = vmatprep.subr.bf16.mxu0 0
  %2284 = vmatpush1.bf16.msra.mxu0 0
  %2285 = vmatprep.subr.bf16.mxu0 0
  %2286 = vmatpush1.bf16.msra.mxu0 0
  %2287 = vmatprep.mubr.bf16.mxu0 0
  %2288 = vmatmul.mubr.bf16.gmra.mrb[0].mxu0 %v2253
  %v2289 = vpop.f32.mrb[0].mxu0
  %v2290 = vadd.f32 0.0, %v2289
  %v2291 = vpop.f32.mrb[0].mxu0
  %v2292 = vpop.f32.mrb[0].mxu0
  %v2293 = vpop.f32.mrb[0].mxu0
  %2294 = vdwg.mxu0
  %v2296 = vrot.slane %v2290, 6
  %v2298 = vsel %vm1490, %v2247, %v2296
  %v2299 = vadd.f32 %v2298, %v1272
  %v2300 = vadd.f32 %v2299, %v2188
  %v2301 = vmul.f32 %v2300, 0.5
  %v2302 = vtanh.pop %v2301
  %v2303 = vmul.f32 %v2302, 0.5
  %v2304 = vadd.f32 %v2303, 0.5
  %v2305 = vtanh.pop %v2300
  %v2306 = vsel %vm57, %v2305, %v2304
  %v2307 = vmul.f32 %v2306, %v2129
  %2309 = vrot.lane.b32.xlu0 %v2306, 64
  %v2310 = vpop.permute.xlu0 %2309
  %v2312 = vmul.f32 %v2306, %v2310
  %2314 = vrot.lane.b32.xlu0 %v2312, 32
  %v2315 = vpop.permute.xlu0 %2314
  %v2317 = vadd.f32 %v2307, %v2315
  %v2318 = vtanh.pop %v2317
  %2320 = vrot.lane.b32.xlu0 %v2318, 64
  %v2321 = vpop.permute.xlu0 %2320
  %v2323 = vmul.f32 %v2306, %v2321
  %v2324 = vld [vmem:[%s809] sm:$0xf]
  %vm2325 = vcmp.gt.f32.partialorder %v2324, 0.0
  %v2326 = vsel %vm2325, 1, 0
  %2327 = vset.pattern.permute.xlu0 0
  %2328 = vperm.xlu0 %2327, %v2326
  %v2329 = vpop.permute.xlu0 %2328
  %vm2330 = vcmp.eq.s32.totalorder %v2329, 1
  %v2331 = vsel %vm2330, %v2317, %v2129
  %v2332 = vsel %vm2330, %v2323, 0.0
  %2334 = vrot.lane.b32.xlu0 %v2332, 32
  %v2335 = vpop.permute.xlu0 %2334
  %s2337 = scalar_lea.vmem [#allocation4], 8
  %2338 = vst.msk [vmem:[%s2337] sm:$0x3] %vm257, %v2335
  %s2339 = scalar_lea.vmem [#allocation5], 6
  %2340 = vst.msk [vmem:[%s2339 - $0x2] sm:$0xc] %vm260, %v2335
  %2342 = vrot.lane.b32.xlu0 %v2323, 32
  %v2343 = vpop.permute.xlu0 %2342
  %2345 = vrot.lane.b32.xlu0 %v2323, 64
  %v2346 = vpop.permute.xlu0 %2345
  %v2348 = vsel %vm269, %v2343, %v2346
  %vm2349 = vmand %vm2330, %vm66
  %v2350 = vsel %vm2349, %v2348, %v2148
  %v2351 = vpack.c.bf16 %v2350, %v2350
  %v2353 = vsel %vm108, %v2351, 0
  %2355 = vmatprep.subr.bf16.mxu0 0
  %2356 = vmatpush1.bf16.msra.mxu0 %v1289
  %2357 = vmatprep.subr.bf16.mxu0 0
  %2358 = vmatpush1.bf16.msra.mxu0 %v1290
  %2359 = vmatprep.subr.bf16.mxu0 0
  %2360 = vmatpush1.bf16.msra.mxu0 %v1291
  %2361 = vmatprep.subr.bf16.mxu0 0
  %2362 = vmatpush1.bf16.msra.mxu0 %v1292
  %2363 = vmatprep.subr.bf16.mxu0 0
  %2364 = vmatpush1.bf16.msra.mxu0 0
  %2365 = vmatprep.subr.bf16.mxu0 0
  %2366 = vmatpush1.bf16.msra.mxu0 0
  %2367 = vmatprep.subr.bf16.mxu0 0
  %2368 = vmatpush1.bf16.msra.mxu0 0
  %2369 = vmatprep.subr.bf16.mxu0 0
  %2370 = vmatpush1.bf16.msra.mxu0 0
  %2371 = vmatprep.subr.bf16.mxu0 0
  %2372 = vmatpush1.bf16.msra.mxu0 0
  %2373 = vmatprep.subr.bf16.mxu0 0
  %2374 = vmatpush1.bf16.msra.mxu0 0
  %2375 = vmatprep.subr.bf16.mxu0 0
  %2376 = vmatpush1.bf16.msra.mxu0 0
  %2377 = vmatprep.subr.bf16.mxu0 0
  %2378 = vmatpush1.bf16.msra.mxu0 0
  %2379 = vmatprep.subr.bf16.mxu0 0
  %2380 = vmatpush1.bf16.msra.mxu0 0
  %2381 = vmatprep.subr.bf16.mxu0 0
  %2382 = vmatpush1.bf16.msra.mxu0 0
  %2383 = vmatprep.subr.bf16.mxu0 0
  %2384 = vmatpush1.bf16.msra.mxu0 0
  %2385 = vmatprep.subr.bf16.mxu0 0
  %2386 = vmatpush1.bf16.msra.mxu0 0
  %2387 = vmatprep.mubr.bf16.mxu0 0
  %2388 = vmatmul.mubr.bf16.gmra.mrb[0].mxu0 %v2353
  %v2389 = vpop.f32.mrb[0].mxu0
  %v2390 = vadd.f32 0.0, %v2389
  %v2391 = vpop.f32.mrb[0].mxu0
  %v2392 = vpop.f32.mrb[0].mxu0
  %v2393 = vpop.f32.mrb[0].mxu0
  %2394 = vdwg.mxu0
  %v2395 = vld [vmem:[%s964] sm:$0x3]
  %v2396 = vld [vmem:[%s543] sm:$0x3]
  %2398 = vrot.lane.b32.xlu0 %v2396, 32
  %v2399 = vpop.permute.xlu0 %2398
  %v2401 = vsel %vm269, %v2395, %v2399
  %v2402 = vpack.c.bf16 %v2401, %v2401
  %v2403 = vld [vmem:[%s541] sm:$0x3]
  %v2404 = vld [vmem:[%s966] sm:$0x3]
  %2406 = vrot.lane.b32.xlu0 %v2404, 32
  %v2407 = vpop.permute.xlu0 %2406
  %v2409 = vsel %vm269, %v2403, %v2407
  %v2410 = vpack.c.bf16 %v2409, %v2409
  %v2412 = vsel %vm108, %v2402, 0
  %2414 = vmatprep.subr.bf16.mxu0 0
  %2415 = vmatpush1.bf16.msra.mxu0 %v1369
  %2416 = vmatprep.subr.bf16.mxu0 0
  %2417 = vmatpush1.bf16.msra.mxu0 %v1370
  %2418 = vmatprep.subr.bf16.mxu0 0
  %2419 = vmatpush1.bf16.msra.mxu0 %v1371
  %2420 = vmatprep.subr.bf16.mxu0 0
  %2421 = vmatpush1.bf16.msra.mxu0 %v1372
  %2422 = vmatprep.subr.bf16.mxu0 0
  %2423 = vmatpush1.bf16.msra.mxu0 0
  %2424 = vmatprep.subr.bf16.mxu0 0
  %2425 = vmatpush1.bf16.msra.mxu0 0
  %2426 = vmatprep.subr.bf16.mxu0 0
  %2427 = vmatpush1.bf16.msra.mxu0 0
  %2428 = vmatprep.subr.bf16.mxu0 0
  %2429 = vmatpush1.bf16.msra.mxu0 0
  %2430 = vmatprep.subr.bf16.mxu0 0
  %2431 = vmatpush1.bf16.msra.mxu0 0
  %2432 = vmatprep.subr.bf16.mxu0 0
  %2433 = vmatpush1.bf16.msra.mxu0 0
  %2434 = vmatprep.subr.bf16.mxu0 0
  %2435 = vmatpush1.bf16.msra.mxu0 0
  %2436 = vmatprep.subr.bf16.mxu0 0
  %2437 = vmatpush1.bf16.msra.mxu0 0
  %2438 = vmatprep.subr.bf16.mxu0 0
  %2439 = vmatpush1.bf16.msra.mxu0 0
  %2440 = vmatprep.subr.bf16.mxu0 0
  %2441 = vmatpush1.bf16.msra.mxu0 0
  %2442 = vmatprep.subr.bf16.mxu0 0
  %2443 = vmatpush1.bf16.msra.mxu0 0
  %2444 = vmatprep.subr.bf16.mxu0 0
  %2445 = vmatpush1.bf16.msra.mxu0 0
  %2446 = vmatprep.mubr.bf16.mxu0 0
  %2447 = vmatmul.mubr.bf16.gmra.mrb[0].mxu0 %v2412
  %v2448 = vpop.f32.mrb[0].mxu0
  %v2449 = vadd.f32 0.0, %v2448
  %v2450 = vpop.f32.mrb[0].mxu0
  %v2451 = vpop.f32.mrb[0].mxu0
  %v2452 = vpop.f32.mrb[0].mxu0
  %2453 = vdwg.mxu0
  %v2455 = vsel %vm108, %v2410, 0
  %2457 = vmatprep.subr.bf16.mxu0 0
  %2458 = vmatpush1.bf16.msra.mxu0 %v1436
  %2459 = vmatprep.subr.bf16.mxu0 0
  %2460 = vmatpush1.bf16.msra.mxu0 %v1437
  %2461 = vmatprep.subr.bf16.mxu0 0
  %2462 = vmatpush1.bf16.msra.mxu0 %v1438
  %2463 = vmatprep.subr.bf16.mxu0 0
  %2464 = vmatpush1.bf16.msra.mxu0 %v1439
  %2465 = vmatprep.subr.bf16.mxu0 0
  %2466 = vmatpush1.bf16.msra.mxu0 0
  %2467 = vmatprep.subr.bf16.mxu0 0
  %2468 = vmatpush1.bf16.msra.mxu0 0
  %2469 = vmatprep.subr.bf16.mxu0 0
  %2470 = vmatpush1.bf16.msra.mxu0 0
  %2471 = vmatprep.subr.bf16.mxu0 0
  %2472 = vmatpush1.bf16.msra.mxu0 0
  %2473 = vmatprep.subr.bf16.mxu0 0
  %2474 = vmatpush1.bf16.msra.mxu0 0
  %2475 = vmatprep.subr.bf16.mxu0 0
  %2476 = vmatpush1.bf16.msra.mxu0 0
  %2477 = vmatprep.subr.bf16.mxu0 0
  %2478 = vmatpush1.bf16.msra.mxu0 0
  %2479 = vmatprep.subr.bf16.mxu0 0
  %2480 = vmatpush1.bf16.msra.mxu0 0
  %2481 = vmatprep.subr.bf16.mxu0 0
  %2482 = vmatpush1.bf16.msra.mxu0 0
  %2483 = vmatprep.subr.bf16.mxu0 0
  %2484 = vmatpush1.bf16.msra.mxu0 0
  %2485 = vmatprep.subr.bf16.mxu0 0
  %2486 = vmatpush1.bf16.msra.mxu0 0
  %2487 = vmatprep.subr.bf16.mxu0 0
  %2488 = vmatpush1.bf16.msra.mxu0 0
  %2489 = vmatprep.mubr.bf16.mxu0 0
  %2490 = vmatmul.mubr.bf16.gmra.mrb[0].mxu0 %v2455
  %v2491 = vpop.f32.mrb[0].mxu0
  %v2492 = vadd.f32 0.0, %v2491
  %v2493 = vpop.f32.mrb[0].mxu0
  %v2494 = vpop.f32.mrb[0].mxu0
  %v2495 = vpop.f32.mrb[0].mxu0
  %2496 = vdwg.mxu0
  %v2498 = vrot.slane %v2492, 6
  %v2500 = vsel %vm1490, %v2449, %v2498
  %v2501 = vadd.f32 %v2500, %v1272
  %v2502 = vadd.f32 %v2501, %v2390
  %v2503 = vmul.f32 %v2502, 0.5
  %v2504 = vtanh.pop %v2503
  %v2505 = vmul.f32 %v2504, 0.5
  %v2506 = vadd.f32 %v2505, 0.5
  %v2507 = vtanh.pop %v2502
  %v2508 = vsel %vm57, %v2507, %v2506
  %v2509 = vmul.f32 %v2508, %v2331
  %2511 = vrot.lane.b32.xlu0 %v2508, 64
  %v2512 = vpop.permute.xlu0 %2511
  %v2514 = vmul.f32 %v2508, %v2512
  %2516 = vrot.lane.b32.xlu0 %v2514, 32
  %v2517 = vpop.permute.xlu0 %2516
  %v2519 = vadd.f32 %v2509, %v2517
  %v2520 = vtanh.pop %v2519
  %2522 = vrot.lane.b32.xlu0 %v2520, 64
  %v2523 = vpop.permute.xlu0 %2522
  %v2525 = vmul.f32 %v2508, %v2523
  %v2526 = vld [vmem:[%s950] sm:$0xf]
  %vm2527 = vcmp.gt.f32.partialorder %v2526, 0.0
  %v2528 = vsel %vm2527, 1, 0
  %2529 = vset.pattern.permute.xlu0 0
  %2530 = vperm.xlu0 %2529, %v2528
  %v2531 = vpop.permute.xlu0 %2530
  %vm2532 = vcmp.eq.s32.totalorder %v2531, 1
  %v2533 = vsel %vm2532, %v2519, %v2331
  %v2534 = vsel %vm2532, %v2525, 0.0
  %2536 = vrot.lane.b32.xlu0 %v2534, 32
  %v2537 = vpop.permute.xlu0 %2536
  %s2539 = scalar_lea.vmem [#allocation4], 10
  %2540 = vst.msk [vmem:[%s2539] sm:$0x3] %vm257, %v2537
  %s2541 = scalar_lea.vmem [#allocation5], 4
  %2542 = vst.msk [vmem:[%s2541 - $0x2] sm:$0xc] %vm260, %v2537
  %2544 = vrot.lane.b32.xlu0 %v2525, 32
  %v2545 = vpop.permute.xlu0 %2544
  %2547 = vrot.lane.b32.xlu0 %v2525, 64
  %v2548 = vpop.permute.xlu0 %2547
  %v2550 = vsel %vm269, %v2545, %v2548
  %vm2551 = vmand %vm2532, %vm66
  %v2552 = vsel %vm2551, %v2550, %v2350
  %v2553 = vpack.c.bf16 %v2552, %v2552
  %v2555 = vsel %vm108, %v2553, 0
  %2557 = vmatprep.subr.bf16.mxu0 0
  %2558 = vmatpush1.bf16.msra.mxu0 %v1289
  %2559 = vmatprep.subr.bf16.mxu0 0
  %2560 = vmatpush1.bf16.msra.mxu0 %v1290
  %2561 = vmatprep.subr.bf16.mxu0 0
  %2562 = vmatpush1.bf16.msra.mxu0 %v1291
  %2563 = vmatprep.subr.bf16.mxu0 0
  %2564 = vmatpush1.bf16.msra.mxu0 %v1292
  %2565 = vmatprep.subr.bf16.mxu0 0
  %2566 = vmatpush1.bf16.msra.mxu0 0
  %2567 = vmatprep.subr.bf16.mxu0 0
  %2568 = vmatpush1.bf16.msra.mxu0 0
  %2569 = vmatprep.subr.bf16.mxu0 0
  %2570 = vmatpush1.bf16.msra.mxu0 0
  %2571 = vmatprep.subr.bf16.mxu0 0
  %2572 = vmatpush1.bf16.msra.mxu0 0
  %2573 = vmatprep.subr.bf16.mxu0 0
  %2574 = vmatpush1.bf16.msra.mxu0 0
  %2575 = vmatprep.subr.bf16.mxu0 0
  %2576 = vmatpush1.bf16.msra.mxu0 0
  %2577 = vmatprep.subr.bf16.mxu0 0
  %2578 = vmatpush1.bf16.msra.mxu0 0
  %2579 = vmatprep.subr.bf16.mxu0 0
  %2580 = vmatpush1.bf16.msra.mxu0 0
  %2581 = vmatprep.subr.bf16.mxu0 0
  %2582 = vmatpush1.bf16.msra.mxu0 0
  %2583 = vmatprep.subr.bf16.mxu0 0
  %2584 = vmatpush1.bf16.msra.mxu0 0
  %2585 = vmatprep.subr.bf16.mxu0 0
  %2586 = vmatpush1.bf16.msra.mxu0 0
  %2587 = vmatprep.subr.bf16.mxu0 0
  %2588 = vmatpush1.bf16.msra.mxu0 0
  %2589 = vmatprep.mubr.bf16.mxu0 0
  %2590 = vmatmul.mubr.bf16.gmra.mrb[0].mxu0 %v2555
  %v2591 = vpop.f32.mrb[0].mxu0
  %v2592 = vadd.f32 0.0, %v2591
  %v2593 = vpop.f32.mrb[0].mxu0
  %v2594 = vpop.f32.mrb[0].mxu0
  %v2595 = vpop.f32.mrb[0].mxu0
  %2596 = vdwg.mxu0
  %v2597 = vld [vmem:[%s1105] sm:$0x3]
  %v2598 = vld [vmem:[%s402] sm:$0x3]
  %2600 = vrot.lane.b32.xlu0 %v2598, 32
  %v2601 = vpop.permute.xlu0 %2600
  %v2603 = vsel %vm269, %v2597, %v2601
  %v2604 = vpack.c.bf16 %v2603, %v2603
  %v2605 = vld [vmem:[%s400] sm:$0x3]
  %v2606 = vld [vmem:[%s1107] sm:$0x3]
  %2608 = vrot.lane.b32.xlu0 %v2606, 32
  %v2609 = vpop.permute.xlu0 %2608
  %v2611 = vsel %vm269, %v2605, %v2609
  %v2612 = vpack.c.bf16 %v2611, %v2611
  %v2614 = vsel %vm108, %v2604, 0
  %2616 = vmatprep.subr.bf16.mxu0 0
  %2617 = vmatpush1.bf16.msra.mxu0 %v1369
  %2618 = vmatprep.subr.bf16.mxu0 0
  %2619 = vmatpush1.bf16.msra.mxu0 %v1370
  %2620 = vmatprep.subr.bf16.mxu0 0
  %2621 = vmatpush1.bf16.msra.mxu0 %v1371
  %2622 = vmatprep.subr.bf16.mxu0 0
  %2623 = vmatpush1.bf16.msra.mxu0 %v1372
  %2624 = vmatprep.subr.bf16.mxu0 0
  %2625 = vmatpush1.bf16.msra.mxu0 0
  %2626 = vmatprep.subr.bf16.mxu0 0
  %2627 = vmatpush1.bf16.msra.mxu0 0
  %2628 = vmatprep.subr.bf16.mxu0 0
  %2629 = vmatpush1.bf16.msra.mxu0 0
  %2630 = vmatprep.subr.bf16.mxu0 0
  %2631 = vmatpush1.bf16.msra.mxu0 0
  %2632 = vmatprep.subr.bf16.mxu0 0
  %2633 = vmatpush1.bf16.msra.mxu0 0
  %2634 = vmatprep.subr.bf16.mxu0 0
  %2635 = vmatpush1.bf16.msra.mxu0 0
  %2636 = vmatprep.subr.bf16.mxu0 0
  %2637 = vmatpush1.bf16.msra.mxu0 0
  %2638 = vmatprep.subr.bf16.mxu0 0
  %2639 = vmatpush1.bf16.msra.mxu0 0
  %2640 = vmatprep.subr.bf16.mxu0 0
  %2641 = vmatpush1.bf16.msra.mxu0 0
  %2642 = vmatprep.subr.bf16.mxu0 0
  %2643 = vmatpush1.bf16.msra.mxu0 0
  %2644 = vmatprep.subr.bf16.mxu0 0
  %2645 = vmatpush1.bf16.msra.mxu0 0
  %2646 = vmatprep.subr.bf16.mxu0 0
  %2647 = vmatpush1.bf16.msra.mxu0 0
  %2648 = vmatprep.mubr.bf16.mxu0 0
  %2649 = vmatmul.mubr.bf16.gmra.mrb[0].mxu0 %v2614
  %v2650 = vpop.f32.mrb[0].mxu0
  %v2651 = vadd.f32 0.0, %v2650
  %v2652 = vpop.f32.mrb[0].mxu0
  %v2653 = vpop.f32.mrb[0].mxu0
  %v2654 = vpop.f32.mrb[0].mxu0
  %2655 = vdwg.mxu0
  %v2657 = vsel %vm108, %v2612, 0
  %2659 = vmatprep.subr.bf16.mxu0 0
  %2660 = vmatpush1.bf16.msra.mxu0 %v1436
  %2661 = vmatprep.subr.bf16.mxu0 0
  %2662 = vmatpush1.bf16.msra.mxu0 %v1437
  %2663 = vmatprep.subr.bf16.mxu0 0
  %2664 = vmatpush1.bf16.msra.mxu0 %v1438
  %2665 = vmatprep.subr.bf16.mxu0 0
  %2666 = vmatpush1.bf16.msra.mxu0 %v1439
  %2667 = vmatprep.subr.bf16.mxu0 0
  %2668 = vmatpush1.bf16.msra.mxu0 0
  %2669 = vmatprep.subr.bf16.mxu0 0
  %2670 = vmatpush1.bf16.msra.mxu0 0
  %2671 = vmatprep.subr.bf16.mxu0 0
  %2672 = vmatpush1.bf16.msra.mxu0 0
  %2673 = vmatprep.subr.bf16.mxu0 0
  %2674 = vmatpush1.bf16.msra.mxu0 0
  %2675 = vmatprep.subr.bf16.mxu0 0
  %2676 = vmatpush1.bf16.msra.mxu0 0
  %2677 = vmatprep.subr.bf16.mxu0 0
  %2678 = vmatpush1.bf16.msra.mxu0 0
  %2679 = vmatprep.subr.bf16.mxu0 0
  %2680 = vmatpush1.bf16.msra.mxu0 0
  %2681 = vmatprep.subr.bf16.mxu0 0
  %2682 = vmatpush1.bf16.msra.mxu0 0
  %2683 = vmatprep.subr.bf16.mxu0 0
  %2684 = vmatpush1.bf16.msra.mxu0 0
  %2685 = vmatprep.subr.bf16.mxu0 0
  %2686 = vmatpush1.bf16.msra.mxu0 0
  %2687 = vmatprep.subr.bf16.mxu0 0
  %2688 = vmatpush1.bf16.msra.mxu0 0
  %2689 = vmatprep.subr.bf16.mxu0 0
  %2690 = vmatpush1.bf16.msra.mxu0 0
  %2691 = vmatprep.mubr.bf16.mxu0 0
  %2692 = vmatmul.mubr.bf16.gmra.mrb[0].mxu0 %v2657
  %v2693 = vpop.f32.mrb[0].mxu0
  %v2694 = vadd.f32 0.0, %v2693
  %v2695 = vpop.f32.mrb[0].mxu0
  %v2696 = vpop.f32.mrb[0].mxu0
  %v2697 = vpop.f32.mrb[0].mxu0
  %2698 = vdwg.mxu0
  %v2700 = vrot.slane %v2694, 6
  %v2702 = vsel %vm1490, %v2651, %v2700
  %v2703 = vadd.f32 %v2702, %v1272
  %v2704 = vadd.f32 %v2703, %v2592
  %v2705 = vmul.f32 %v2704, 0.5
  %v2706 = vtanh.pop %v2705
  %v2707 = vmul.f32 %v2706, 0.5
  %v2708 = vadd.f32 %v2707, 0.5
  %v2709 = vtanh.pop %v2704
  %v2710 = vsel %vm57, %v2709, %v2708
  %v2711 = vmul.f32 %v2710, %v2533
  %2713 = vrot.lane.b32.xlu0 %v2710, 64
  %v2714 = vpop.permute.xlu0 %2713
  %v2716 = vmul.f32 %v2710, %v2714
  %2718 = vrot.lane.b32.xlu0 %v2716, 32
  %v2719 = vpop.permute.xlu0 %2718
  %v2721 = vadd.f32 %v2711, %v2719
  %v2722 = vtanh.pop %v2721
  %2724 = vrot.lane.b32.xlu0 %v2722, 64
  %v2725 = vpop.permute.xlu0 %2724
  %v2727 = vmul.f32 %v2710, %v2725
  %v2728 = vld [vmem:[%s1091] sm:$0xf]
  %vm2729 = vcmp.gt.f32.partialorder %v2728, 0.0
  %v2730 = vsel %vm2729, 1, 0
  %2731 = vset.pattern.permute.xlu0 0
  %2732 = vperm.xlu0 %2731, %v2730
  %v2733 = vpop.permute.xlu0 %2732
  %vm2734 = vcmp.eq.s32.totalorder %v2733, 1
  %v2735 = vsel %vm2734, %v2721, %v2533
  %v2736 = vsel %vm2734, %v2727, 0.0
  %2738 = vrot.lane.b32.xlu0 %v2736, 32
  %v2739 = vpop.permute.xlu0 %2738
  %s2741 = scalar_lea.vmem [#allocation4], 12
  %2742 = vst.msk [vmem:[%s2741] sm:$0x3] %vm257, %v2739
  %s2743 = scalar_lea.vmem [#allocation5], 2
  %2744 = vst.msk [vmem:[%s2743 - $0x2] sm:$0xc] %vm260, %v2739
  %2746 = vrot.lane.b32.xlu0 %v2727, 32
  %v2747 = vpop.permute.xlu0 %2746
  %2749 = vrot.lane.b32.xlu0 %v2727, 64
  %v2750 = vpop.permute.xlu0 %2749
  %v2752 = vsel %vm269, %v2747, %v2750
  %vm2753 = vmand %vm2734, %vm66
  %v2754 = vsel %vm2753, %v2752, %v2552
  %v2755 = vpack.c.bf16 %v2754, %v2754
  %v2757 = vsel %vm108, %v2755, 0
  %2759 = vmatprep.subr.bf16.mxu0 0
  %2760 = vmatpush1.bf16.msra.mxu0 %v1289
  %2761 = vmatprep.subr.bf16.mxu0 0
  %2762 = vmatpush1.bf16.msra.mxu0 %v1290
  %2763 = vmatprep.subr.bf16.mxu0 0
  %2764 = vmatpush1.bf16.msra.mxu0 %v1291
  %2765 = vmatprep.subr.bf16.mxu0 0
  %2766 = vmatpush1.bf16.msra.mxu0 %v1292
  %2767 = vmatprep.subr.bf16.mxu0 0
  %2768 = vmatpush1.bf16.msra.mxu0 0
  %2769 = vmatprep.subr.bf16.mxu0 0
  %2770 = vmatpush1.bf16.msra.mxu0 0
  %2771 = vmatprep.subr.bf16.mxu0 0
  %2772 = vmatpush1.bf16.msra.mxu0 0
  %2773 = vmatprep.subr.bf16.mxu0 0
  %2774 = vmatpush1.bf16.msra.mxu0 0
  %2775 = vmatprep.subr.bf16.mxu0 0
  %2776 = vmatpush1.bf16.msra.mxu0 0
  %2777 = vmatprep.subr.bf16.mxu0 0
  %2778 = vmatpush1.bf16.msra.mxu0 0
  %2779 = vmatprep.subr.bf16.mxu0 0
  %2780 = vmatpush1.bf16.msra.mxu0 0
  %2781 = vmatprep.subr.bf16.mxu0 0
  %2782 = vmatpush1.bf16.msra.mxu0 0
  %2783 = vmatprep.subr.bf16.mxu0 0
  %2784 = vmatpush1.bf16.msra.mxu0 0
  %2785 = vmatprep.subr.bf16.mxu0 0
  %2786 = vmatpush1.bf16.msra.mxu0 0
  %2787 = vmatprep.subr.bf16.mxu0 0
  %2788 = vmatpush1.bf16.msra.mxu0 0
  %2789 = vmatprep.subr.bf16.mxu0 0
  %2790 = vmatpush1.bf16.msra.mxu0 0
  %2791 = vmatprep.mubr.bf16.mxu0 0
  %2792 = vmatmul.mubr.bf16.gmra.mrb[0].mxu0 %v2757
  %v2793 = vpop.f32.mrb[0].mxu0
  %v2794 = vadd.f32 0.0, %v2793
  %v2795 = vpop.f32.mrb[0].mxu0
  %v2796 = vpop.f32.mrb[0].mxu0
  %v2797 = vpop.f32.mrb[0].mxu0
  %2798 = vdwg.mxu0
  %v2799 = vld [vmem:[%s1245] sm:$0x3]
  %v2800 = vld [vmem:[%s259] sm:$0x3]
  %2802 = vrot.lane.b32.xlu0 %v2800, 32
  %v2803 = vpop.permute.xlu0 %2802
  %v2805 = vsel %vm269, %v2799, %v2803
  %v2806 = vpack.c.bf16 %v2805, %v2805
  %v2807 = vld [vmem:[#allocation2] sm:$0x3]
  %v2808 = vld [vmem:[#allocation3] sm:$0x3]
  %2810 = vrot.lane.b32.xlu0 %v2808, 32
  %v2811 = vpop.permute.xlu0 %2810
  %v2813 = vsel %vm269, %v2807, %v2811
  %v2814 = vpack.c.bf16 %v2813, %v2813
  %v2816 = vsel %vm108, %v2806, 0
  %2818 = vmatprep.subr.bf16.mxu0 0
  %2819 = vmatpush1.bf16.msra.mxu0 %v1369
  %2820 = vmatprep.subr.bf16.mxu0 0
  %2821 = vmatpush1.bf16.msra.mxu0 %v1370
  %2822 = vmatprep.subr.bf16.mxu0 0
  %2823 = vmatpush1.bf16.msra.mxu0 %v1371
  %2824 = vmatprep.subr.bf16.mxu0 0
  %2825 = vmatpush1.bf16.msra.mxu0 %v1372
  %2826 = vmatprep.subr.bf16.mxu0 0
  %2827 = vmatpush1.bf16.msra.mxu0 0
  %2828 = vmatprep.subr.bf16.mxu0 0
  %2829 = vmatpush1.bf16.msra.mxu0 0
  %2830 = vmatprep.subr.bf16.mxu0 0
  %2831 = vmatpush1.bf16.msra.mxu0 0
  %2832 = vmatprep.subr.bf16.mxu0 0
  %2833 = vmatpush1.bf16.msra.mxu0 0
  %2834 = vmatprep.subr.bf16.mxu0 0
  %2835 = vmatpush1.bf16.msra.mxu0 0
  %2836 = vmatprep.subr.bf16.mxu0 0
  %2837 = vmatpush1.bf16.msra.mxu0 0
  %2838 = vmatprep.subr.bf16.mxu0 0
  %2839 = vmatpush1.bf16.msra.mxu0 0
  %2840 = vmatprep.subr.bf16.mxu0 0
  %2841 = vmatpush1.bf16.msra.mxu0 0
  %2842 = vmatprep.subr.bf16.mxu0 0
  %2843 = vmatpush1.bf16.msra.mxu0 0
  %2844 = vmatprep.subr.bf16.mxu0 0
  %2845 = vmatpush1.bf16.msra.mxu0 0
  %2846 = vmatprep.subr.bf16.mxu0 0
  %2847 = vmatpush1.bf16.msra.mxu0 0
  %2848 = vmatprep.subr.bf16.mxu0 0
  %2849 = vmatpush1.bf16.msra.mxu0 0
  %2850 = vmatprep.mubr.bf16.mxu0 0
  %2851 = vmatmul.mubr.bf16.gmra.mrb[0].mxu0 %v2816
  %v2852 = vpop.f32.mrb[0].mxu0
  %v2853 = vadd.f32 0.0, %v2852
  %v2854 = vpop.f32.mrb[0].mxu0
  %v2855 = vpop.f32.mrb[0].mxu0
  %v2856 = vpop.f32.mrb[0].mxu0
  %2857 = vdwg.mxu0
  %v2859 = vsel %vm108, %v2814, 0
  %2861 = vmatprep.subr.bf16.mxu0 0
  %2862 = vmatpush1.bf16.msra.mxu0 %v1436
  %2863 = vmatprep.subr.bf16.mxu0 0
  %2864 = vmatpush1.bf16.msra.mxu0 %v1437
  %2865 = vmatprep.subr.bf16.mxu0 0
  %2866 = vmatpush1.bf16.msra.mxu0 %v1438
  %2867 = vmatprep.subr.bf16.mxu0 0
  %2868 = vmatpush1.bf16.msra.mxu0 %v1439
  %2869 = vmatprep.subr.bf16.mxu0 0
  %2870 = vmatpush1.bf16.msra.mxu0 0
  %2871 = vmatprep.subr.bf16.mxu0 0
  %2872 = vmatpush1.bf16.msra.mxu0 0
  %2873 = vmatprep.subr.bf16.mxu0 0
  %2874 = vmatpush1.bf16.msra.mxu0 0
  %2875 = vmatprep.subr.bf16.mxu0 0
  %2876 = vmatpush1.bf16.msra.mxu0 0
  %2877 = vmatprep.subr.bf16.mxu0 0
  %2878 = vmatpush1.bf16.msra.mxu0 0
  %2879 = vmatprep.subr.bf16.mxu0 0
  %2880 = vmatpush1.bf16.msra.mxu0 0
  %2881 = vmatprep.subr.bf16.mxu0 0
  %2882 = vmatpush1.bf16.msra.mxu0 0
  %2883 = vmatprep.subr.bf16.mxu0 0
  %2884 = vmatpush1.bf16.msra.mxu0 0
  %2885 = vmatprep.subr.bf16.mxu0 0
  %2886 = vmatpush1.bf16.msra.mxu0 0
  %2887 = vmatprep.subr.bf16.mxu0 0
  %2888 = vmatpush1.bf16.msra.mxu0 0
  %2889 = vmatprep.subr.bf16.mxu0 0
  %2890 = vmatpush1.bf16.msra.mxu0 0
  %2891 = vmatprep.subr.bf16.mxu0 0
  %2892 = vmatpush1.bf16.msra.mxu0 0
  %2893 = vmatprep.mubr.bf16.mxu0 0
  %2894 = vmatmul.mubr.bf16.gmra.mrb[0].mxu0 %v2859
  %v2895 = vpop.f32.mrb[0].mxu0
  %v2896 = vadd.f32 0.0, %v2895
  %v2897 = vpop.f32.mrb[0].mxu0
  %v2898 = vpop.f32.mrb[0].mxu0
  %v2899 = vpop.f32.mrb[0].mxu0
  %2900 = vdwg.mxu0
  %v2902 = vrot.slane %v2896, 6
  %v2904 = vsel %vm1490, %v2853, %v2902
  %v2905 = vadd.f32 %v2904, %v1272
  %v2906 = vadd.f32 %v2905, %v2794
  %v2907 = vmul.f32 %v2906, 0.5
  %v2908 = vtanh.pop %v2907
  %v2909 = vmul.f32 %v2908, 0.5
  %v2910 = vadd.f32 %v2909, 0.5
  %v2911 = vtanh.pop %v2906
  %v2912 = vsel %vm57, %v2911, %v2910
  %v2913 = vmul.f32 %v2912, %v2735
  %2915 = vrot.lane.b32.xlu0 %v2912, 64
  %v2916 = vpop.permute.xlu0 %2915
  %v2918 = vmul.f32 %v2912, %v2916
  %2920 = vrot.lane.b32.xlu0 %v2918, 32
  %v2921 = vpop.permute.xlu0 %2920
  %v2923 = vadd.f32 %v2913, %v2921
  %v2924 = vtanh.pop %v2923
  %2926 = vrot.lane.b32.xlu0 %v2924, 64
  %v2927 = vpop.permute.xlu0 %2926
  %v2929 = vmul.f32 %v2912, %v2927
  %v2930 = vld [vmem:[%s1232] sm:$0xf]
  %vm2931 = vcmp.gt.f32.partialorder %v2930, 0.0
  %v2932 = vsel %vm2931, 1, 0
  %2933 = vset.pattern.permute.xlu0 0
  %2934 = vperm.xlu0 %2933, %v2932
  %v2935 = vpop.permute.xlu0 %2934
  %vm2936 = vcmp.eq.s32.totalorder %v2935, 1
  %v2937 = vsel %vm2936, %v2929, 0.0
  %2939 = vrot.lane.b32.xlu0 %v2937, 32
  %v2940 = vpop.permute.xlu0 %2939
  %s2942 = scalar_lea.vmem [#allocation4], 14
  %2943 = vst.msk [vmem:[%s2942] sm:$0x3] %vm257, %v2940
  %2944 = vst.msk [vmem:[#allocation5 - $0x2] sm:$0xc] %vm260, %v2940
  %v2945 = vld [vmem:[#allocation4] sm:$0x3]
  %v2946 = vld [vmem:[#allocation5] sm:$0x3]
  %2948 = vrot.lane.b32.xlu0 %v2946, 32
  %v2949 = vpop.permute.xlu0 %2948
  %v2951 = vsel %vm269, %v2945, %v2949
  %v2954 = vunpack.c.l.s4 1966171168
  %v2955 = vunpack.c.0.s8 %v2954
  %v2956 = vlaneseq
  %v2957 = vshrl.u32 %v2956, 7
  %v2958 = vsub.s32 %v2955, %v2957
  %v2959 = vrot.slane %v2951, %v2958
  %v2960 = vcombine.high %v2959, %v2959
  %v2962 = vunpack.c.l.s4 1966171168
  %v2963 = vunpack.c.0.s8 %v2962
  %v2964 = vlaneseq
  %v2965 = vshrl.u32 %v2964, 7
  %v2966 = vsub.s32 %v2963, %v2965
  %v2967 = vrot.slane %v2959, %v2966
  %v2969 = vunpack.c.l.s4 1966171168
  %v2970 = vunpack.c.0.s8 %v2969
  %v2971 = vlaneseq
  %v2972 = vshrl.u32 %v2971, 7
  %v2973 = vsub.s32 %v2970, %v2972
  %v2974 = vrot.slane %v2960, %v2973
  %v2977 = vld [vmem:[%s1731] sm:$0x3]
  %v2978 = vld [vmem:[%s2743] sm:$0x3]
  %2980 = vrot.lane.b32.xlu0 %v2978, 32
  %v2981 = vpop.permute.xlu0 %2980
  %v2983 = vsel %vm269, %v2977, %v2981
  %v2986 = vunpack.c.l.s4 1966171168
  %v2987 = vunpack.c.0.s8 %v2986
  %v2988 = vlaneseq
  %v2989 = vshrl.u32 %v2988, 7
  %v2990 = vsub.s32 %v2987, %v2989
  %v2991 = vrot.slane %v2983, %v2990
  %v2992 = vcombine.high %v2991, %v2991
  %v2994 = vunpack.c.l.s4 1966171168
  %v2995 = vunpack.c.0.s8 %v2994
  %v2996 = vlaneseq
  %v2997 = vshrl.u32 %v2996, 7
  %v2998 = vsub.s32 %v2995, %v2997
  %v2999 = vrot.slane %v2991, %v2998
  %v3001 = vunpack.c.l.s4 1966171168
  %v3002 = vunpack.c.0.s8 %v3001
  %v3003 = vlaneseq
  %v3004 = vshrl.u32 %v3003, 7
  %v3005 = vsub.s32 %v3002, %v3004
  %v3006 = vrot.slane %v2992, %v3005
  %v3007 = vld [vmem:[%s1933] sm:$0x3]
  %v3008 = vld [vmem:[%s2541] sm:$0x3]
  %3010 = vrot.lane.b32.xlu0 %v3008, 32
  %v3011 = vpop.permute.xlu0 %3010
  %v3013 = vsel %vm269, %v3007, %v3011
  %v3016 = vunpack.c.l.s4 1966171168
  %v3017 = vunpack.c.0.s8 %v3016
  %v3018 = vlaneseq
  %v3019 = vshrl.u32 %v3018, 7
  %v3020 = vsub.s32 %v3017, %v3019
  %v3021 = vrot.slane %v3013, %v3020
  %v3022 = vcombine.high %v3021, %v3021
  %v3024 = vunpack.c.l.s4 1966171168
  %v3025 = vunpack.c.0.s8 %v3024
  %v3026 = vlaneseq
  %v3027 = vshrl.u32 %v3026, 7
  %v3028 = vsub.s32 %v3025, %v3027
  %v3029 = vrot.slane %v3021, %v3028
  %v3031 = vunpack.c.l.s4 1966171168
  %v3032 = vunpack.c.0.s8 %v3031
  %v3033 = vlaneseq
  %v3034 = vshrl.u32 %v3033, 7
  %v3035 = vsub.s32 %v3032, %v3034
  %v3036 = vrot.slane %v3022, %v3035
  %v3037 = vld [vmem:[%s2135] sm:$0x3]
  %v3038 = vld [vmem:[%s2339] sm:$0x3]
  %3040 = vrot.lane.b32.xlu0 %v3038, 32
  %v3041 = vpop.permute.xlu0 %3040
  %v3043 = vsel %vm269, %v3037, %v3041
  %v3046 = vunpack.c.l.s4 1966171168
  %v3047 = vunpack.c.0.s8 %v3046
  %v3048 = vlaneseq
  %v3049 = vshrl.u32 %v3048, 7
  %v3050 = vsub.s32 %v3047, %v3049
  %v3051 = vrot.slane %v3043, %v3050
  %v3052 = vcombine.high %v3051, %v3051
  %v3054 = vunpack.c.l.s4 1966171168
  %v3055 = vunpack.c.0.s8 %v3054
  %v3056 = vlaneseq
  %v3057 = vshrl.u32 %v3056, 7
  %v3058 = vsub.s32 %v3055, %v3057
  %v3059 = vrot.slane %v3051, %v3058
  %v3061 = vunpack.c.l.s4 1966171168
  %v3062 = vunpack.c.0.s8 %v3061
  %v3063 = vlaneseq
  %v3064 = vshrl.u32 %v3063, 7
  %v3065 = vsub.s32 %v3062, %v3064
  %v3066 = vrot.slane %v3052, %v3065
  %v3067 = vld [vmem:[%s2337] sm:$0x3]
  %v3068 = vld [vmem:[%s2137] sm:$0x3]
  %3070 = vrot.lane.b32.xlu0 %v3068, 32
  %v3071 = vpop.permute.xlu0 %3070
  %v3073 = vsel %vm269, %v3067, %v3071
  %v3076 = vunpack.c.l.s4 1966171168
  %v3077 = vunpack.c.0.s8 %v3076
  %v3078 = vlaneseq
  %v3079 = vshrl.u32 %v3078, 7
  %v3080 = vsub.s32 %v3077, %v3079
  %v3081 = vrot.slane %v3073, %v3080
  %v3082 = vcombine.high %v3081, %v3081
  %v3084 = vunpack.c.l.s4 1966171168
  %v3085 = vunpack.c.0.s8 %v3084
  %v3086 = vlaneseq
  %v3087 = vshrl.u32 %v3086, 7
  %v3088 = vsub.s32 %v3085, %v3087
  %v3089 = vrot.slane %v3081, %v3088
  %v3091 = vunpack.c.l.s4 1966171168
  %v3092 = vunpack.c.0.s8 %v3091
  %v3093 = vlaneseq
  %v3094 = vshrl.u32 %v3093, 7
  %v3095 = vsub.s32 %v3092, %v3094
  %v3096 = vrot.slane %v3082, %v3095
  %v3097 = vld [vmem:[%s2539] sm:$0x3]
  %v3098 = vld [vmem:[%s1935] sm:$0x3]
  %3100 = vrot.lane.b32.xlu0 %v3098, 32
  %v3101 = vpop.permute.xlu0 %3100
  %v3103 = vsel %vm269, %v3097, %v3101
  %v3106 = vunpack.c.l.s4 1966171168
  %v3107 = vunpack.c.0.s8 %v3106
  %v3108 = vlaneseq
  %v3109 = vshrl.u32 %v3108, 7
  %v3110 = vsub.s32 %v3107, %v3109
  %v3111 = vrot.slane %v3103, %v3110
  %v3112 = vcombine.high %v3111, %v3111
  %v3114 = vunpack.c.l.s4 1966171168
  %v3115 = vunpack.c.0.s8 %v3114
  %v3116 = vlaneseq
  %v3117 = vshrl.u32 %v3116, 7
  %v3118 = vsub.s32 %v3115, %v3117
  %v3119 = vrot.slane %v3111, %v3118
  %v3121 = vunpack.c.l.s4 1966171168
  %v3122 = vunpack.c.0.s8 %v3121
  %v3123 = vlaneseq
  %v3124 = vshrl.u32 %v3123, 7
  %v3125 = vsub.s32 %v3122, %v3124
  %v3126 = vrot.slane %v3112, %v3125
  %v3127 = vld [vmem:[%s2741] sm:$0x3]
  %v3128 = vld [vmem:[%s1733] sm:$0x3]
  %3130 = vrot.lane.b32.xlu0 %v3128, 32
  %v3131 = vpop.permute.xlu0 %3130
  %v3133 = vsel %vm269, %v3127, %v3131
  %v3136 = vunpack.c.l.s4 1966171168
  %v3137 = vunpack.c.0.s8 %v3136
  %v3138 = vlaneseq
  %v3139 = vshrl.u32 %v3138, 7
  %v3140 = vsub.s32 %v3137, %v3139
  %v3141 = vrot.slane %v3133, %v3140
  %v3142 = vcombine.high %v3141, %v3141
  %v3144 = vunpack.c.l.s4 1966171168
  %v3145 = vunpack.c.0.s8 %v3144
  %v3146 = vlaneseq
  %v3147 = vshrl.u32 %v3146, 7
  %v3148 = vsub.s32 %v3145, %v3147
  %v3149 = vrot.slane %v3141, %v3148
  %v3151 = vunpack.c.l.s4 1966171168
  %v3152 = vunpack.c.0.s8 %v3151
  %v3153 = vlaneseq
  %v3154 = vshrl.u32 %v3153, 7
  %v3155 = vsub.s32 %v3152, %v3154
  %v3156 = vrot.slane %v3142, %v3155
  %v3157 = vld [vmem:[%s2942] sm:$0x3]
  %v3158 = vld [vmem:[%s1531] sm:$0x3]
  %3160 = vrot.lane.b32.xlu0 %v3158, 32
  %v3161 = vpop.permute.xlu0 %3160
  %v3163 = vsel %vm269, %v3157, %v3161
  %v3166 = vunpack.c.l.s4 1966171168
  %v3167 = vunpack.c.0.s8 %v3166
  %v3168 = vlaneseq
  %v3169 = vshrl.u32 %v3168, 7
  %v3170 = vsub.s32 %v3167, %v3169
  %v3171 = vrot.slane %v3163, %v3170
  %v3172 = vcombine.high %v3171, %v3171
  %v3174 = vunpack.c.l.s4 1966171168
  %v3175 = vunpack.c.0.s8 %v3174
  %v3176 = vlaneseq
  %v3177 = vshrl.u32 %v3176, 7
  %v3178 = vsub.s32 %v3175, %v3177
  %v3179 = vrot.slane %v3171, %v3178
  %v3181 = vunpack.c.l.s4 1966171168
  %v3182 = vunpack.c.0.s8 %v3181
  %v3183 = vlaneseq
  %v3184 = vshrl.u32 %v3183, 7
  %v3185 = vsub.s32 %v3182, %v3184
  %v3186 = vrot.slane %v3172, %v3185
  %v3187 = vlaneseq
  %v3188 = vshrl.u32 %v3187, 7
  %v3189 = vsub.s32 0, %v3188
  %v3190 = vrot.slane %v2999, %v3189
  %v3191 = vlaneseq
  %v3192 = vshrl.u32 %v3191, 7
  %v3193 = vsub.s32 0, %v3192
  %v3194 = vrot.slane %v3006, %v3193
  %v3197 = vlaneseq
  %v3198 = vshrl.u32 %v3197, 7
  %v3199 = vsub.s32 0, %v3198
  %v3200 = vrot.slane %v3029, %v3199
  %v3201 = vlaneseq
  %v3202 = vshrl.u32 %v3201, 7
  %v3203 = vsub.s32 0, %v3202
  %v3204 = vrot.slane %v3036, %v3203
  %v3207 = vlaneseq
  %v3208 = vshrl.u32 %v3207, 7
  %v3209 = vsub.s32 0, %v3208
  %v3210 = vrot.slane %v3059, %v3209
  %v3211 = vlaneseq
  %v3212 = vshrl.u32 %v3211, 7
  %v3213 = vsub.s32 0, %v3212
  %v3214 = vrot.slane %v3066, %v3213
  %v3217 = vlaneseq
  %v3218 = vshrl.u32 %v3217, 7
  %v3219 = vsub.s32 0, %v3218
  %v3220 = vrot.slane %v3089, %v3219
  %v3221 = vlaneseq
  %v3222 = vshrl.u32 %v3221, 7
  %v3223 = vsub.s32 0, %v3222
  %v3224 = vrot.slane %v3096, %v3223
  %v3227 = vlaneseq
  %v3228 = vshrl.u32 %v3227, 7
  %v3229 = vsub.s32 0, %v3228
  %v3230 = vrot.slane %v3119, %v3229
  %v3231 = vlaneseq
  %v3232 = vshrl.u32 %v3231, 7
  %v3233 = vsub.s32 0, %v3232
  %v3234 = vrot.slane %v3126, %v3233
  %v3237 = vlaneseq
  %v3238 = vshrl.u32 %v3237, 7
  %v3239 = vsub.s32 0, %v3238
  %v3240 = vrot.slane %v3149, %v3239
  %v3241 = vlaneseq
  %v3242 = vshrl.u32 %v3241, 7
  %v3243 = vsub.s32 0, %v3242
  %v3244 = vrot.slane %v3156, %v3243
  %v3247 = vlaneseq
  %v3248 = vshrl.u32 %v3247, 7
  %v3249 = vsub.s32 0, %v3248
  %v3250 = vrot.slane %v3179, %v3249
  %v3251 = vlaneseq
  %v3252 = vshrl.u32 %v3251, 7
  %v3253 = vsub.s32 0, %v3252
  %v3254 = vrot.slane %v3186, %v3253
  %vm3257 = vcmask 1040384
  %v3258 = vsel %vm3257, %v2967, %v3190
  %v3259 = vsel %vm3257, %v2974, %v3194
  %v3260 = vsel %vm1490, %v3258, %v3200
  %v3261 = vsel %vm1490, %v3259, %v3204
  %vm3262 = vcmask 1042432
  %v3263 = vsel %vm3262, %v3260, %v3210
  %v3264 = vsel %vm3262, %v3261, %v3214
  %vm3265 = vcmask 1043456
  %v3266 = vsel %vm3265, %v3263, %v3220
  %v3267 = vsel %vm3265, %v3264, %v3224
  %vm3268 = vcmask 1044480
  %v3269 = vsel %vm3268, %v3266, %v3230
  %v3270 = vsel %vm3268, %v3267, %v3234
  %vm3271 = vcmask 1045504
  %v3272 = vsel %vm3271, %v3269, %v3240
  %v3273 = vsel %vm3271, %v3270, %v3244
  %vm3274 = vcmask 1046528
  %v3275 = vsel %vm3274, %v3272, %v3250
  %v3276 = vsel %vm3274, %v3273, %v3254
  %v3277 = vld [vmem:[%s3] sm:$0xf]
  %v3278 = vld [vmem:[%s3 + $0x4] sm:$0xf]
  %v3280 = vsel %vm108, %v3277, 0
  %v3283 = vsel %vm108, %v3275, 0
  %3285 = vmatprep.subr.mxu0 0.0
  %3286 = vmatpush1.xpose.msra.mxu0 %v3283
  %3287 = vmatprep.subr.mxu0 0.0
  %3288 = vmatpush1.xpose.msra.mxu0 0.0
  %3289 = vmatprep.subr.mxu0 0.0
  %3290 = vmatpush1.xpose.msra.mxu0 0.0
  %3291 = vmatprep.subr.mxu0 0.0
  %3292 = vmatpush1.xpose.msra.mxu0 0.0
  %3293 = vmatprep.subr.mxu0 0.0
  %3294 = vmatpush1.xpose.msra.mxu0 0.0
  %3295 = vmatprep.subr.mxu0 0.0
  %3296 = vmatpush1.xpose.msra.mxu0 0.0
  %3297 = vmatprep.subr.mxu0 0.0
  %3298 = vmatpush1.xpose.msra.mxu0 0.0
  %3299 = vmatprep.subr.mxu0 0.0
  %3300 = vmatpush1.xpose.msra.mxu0 0.0
  %3301 = vmatprep.subr.mxu0 0.0
  %3302 = vmatpush1.xpose.msra.mxu0 0.0
  %3303 = vmatprep.subr.mxu0 0.0
  %3304 = vmatpush1.xpose.msra.mxu0 0.0
  %3305 = vmatprep.subr.mxu0 0.0
  %3306 = vmatpush1.xpose.msra.mxu0 0.0
  %3307 = vmatprep.subr.mxu0 0.0
  %3308 = vmatpush1.xpose.msra.mxu0 0.0
  %3309 = vmatprep.subr.mxu0 0.0
  %3310 = vmatpush1.xpose.msra.mxu0 0.0
  %3311 = vmatprep.subr.mxu0 0.0
  %3312 = vmatpush1.xpose.msra.mxu0 0.0
  %3313 = vmatprep.subr.mxu0 0.0
  %3314 = vmatpush1.xpose.msra.mxu0 0.0
  %3315 = vmatprep.subr.mxu0 0.0
  %3316 = vmatpush1.xpose.msra.mxu0 0.0
  %3317 = vmatprep.subr.mxu0 0.0
  %3318 = vmatpush1.xpose.msra.mxu0 0.0
  %3319 = vmatprep.subr.mxu0 0.0
  %3320 = vmatpush1.xpose.msra.mxu0 0.0
  %3321 = vmatprep.subr.mxu0 0.0
  %3322 = vmatpush1.xpose.msra.mxu0 0.0
  %3323 = vmatprep.subr.mxu0 0.0
  %3324 = vmatpush1.xpose.msra.mxu0 0.0
  %3325 = vmatprep.subr.mxu0 0.0
  %3326 = vmatpush1.xpose.msra.mxu0 0.0
  %3327 = vmatprep.subr.mxu0 0.0
  %3328 = vmatpush1.xpose.msra.mxu0 0.0
  %3329 = vmatprep.subr.mxu0 0.0
  %3330 = vmatpush1.xpose.msra.mxu0 0.0
  %3331 = vmatprep.subr.mxu0 0.0
  %3332 = vmatpush1.xpose.msra.mxu0 0.0
  %3333 = vmatprep.subr.mxu0 0.0
  %3334 = vmatpush1.xpose.msra.mxu0 0.0
  %3335 = vmatprep.subr.mxu0 0.0
  %3336 = vmatpush1.xpose.msra.mxu0 0.0
  %3337 = vmatprep.subr.mxu0 0.0
  %3338 = vmatpush1.xpose.msra.mxu0 0.0
  %3339 = vmatprep.subr.mxu0 0.0
  %3340 = vmatpush1.xpose.msra.mxu0 0.0
  %3341 = vmatprep.subr.mxu0 0.0
  %3342 = vmatpush1.xpose.msra.mxu0 0.0
  %3343 = vmatprep.subr.mxu0 0.0
  %3344 = vmatpush1.xpose.msra.mxu0 0.0
  %3345 = vmatprep.subr.mxu0 0.0
  %3346 = vmatpush1.xpose.msra.mxu0 0.0
  %3347 = vmatprep.subr.mxu0 0.0
  %3348 = vmatpush1.xpose.msra.mxu0 0.0
  %3349 = vmatprep.mubr.f32.mxu0 0.0
  %3350 = vmatmul.mubr.f32.gmra.mrb[0].mxu0 %v3280
  %v3351 = vpop.f32.mrb[0].mxu0
  %v3352 = vadd.f32 0.0, %v3351
  %v3353 = vpop.f32.mrb[0].mxu0
  %3354 = vdwg.mxu0
  %v3356 = vsel %vm108, %v3278, 0
  %v3359 = vsel %vm108, %v3276, 0
  %3361 = vmatprep.subr.mxu0 0.0
  %3362 = vmatpush1.xpose.msra.mxu0 %v3359
  %3363 = vmatprep.subr.mxu0 0.0
  %3364 = vmatpush1.xpose.msra.mxu0 0.0
  %3365 = vmatprep.subr.mxu0 0.0
  %3366 = vmatpush1.xpose.msra.mxu0 0.0
  %3367 = vmatprep.subr.mxu0 0.0
  %3368 = vmatpush1.xpose.msra.mxu0 0.0
  %3369 = vmatprep.subr.mxu0 0.0
  %3370 = vmatpush1.xpose.msra.mxu0 0.0
  %3371 = vmatprep.subr.mxu0 0.0
  %3372 = vmatpush1.xpose.msra.mxu0 0.0
  %3373 = vmatprep.subr.mxu0 0.0
  %3374 = vmatpush1.xpose.msra.mxu0 0.0
  %3375 = vmatprep.subr.mxu0 0.0
  %3376 = vmatpush1.xpose.msra.mxu0 0.0
  %3377 = vmatprep.subr.mxu0 0.0
  %3378 = vmatpush1.xpose.msra.mxu0 0.0
  %3379 = vmatprep.subr.mxu0 0.0
  %3380 = vmatpush1.xpose.msra.mxu0 0.0
  %3381 = vmatprep.subr.mxu0 0.0
  %3382 = vmatpush1.xpose.msra.mxu0 0.0
  %3383 = vmatprep.subr.mxu0 0.0
  %3384 = vmatpush1.xpose.msra.mxu0 0.0
  %3385 = vmatprep.subr.mxu0 0.0
  %3386 = vmatpush1.xpose.msra.mxu0 0.0
  %3387 = vmatprep.subr.mxu0 0.0
  %3388 = vmatpush1.xpose.msra.mxu0 0.0
  %3389 = vmatprep.subr.mxu0 0.0
  %3390 = vmatpush1.xpose.msra.mxu0 0.0
  %3391 = vmatprep.subr.mxu0 0.0
  %3392 = vmatpush1.xpose.msra.mxu0 0.0
  %3393 = vmatprep.subr.mxu0 0.0
  %3394 = vmatpush1.xpose.msra.mxu0 0.0
  %3395 = vmatprep.subr.mxu0 0.0
  %3396 = vmatpush1.xpose.msra.mxu0 0.0
  %3397 = vmatprep.subr.mxu0 0.0
  %3398 = vmatpush1.xpose.msra.mxu0 0.0
  %3399 = vmatprep.subr.mxu0 0.0
  %3400 = vmatpush1.xpose.msra.mxu0 0.0
  %3401 = vmatprep.subr.mxu0 0.0
  %3402 = vmatpush1.xpose.msra.mxu0 0.0
  %3403 = vmatprep.subr.mxu0 0.0
  %3404 = vmatpush1.xpose.msra.mxu0 0.0
  %3405 = vmatprep.subr.mxu0 0.0
  %3406 = vmatpush1.xpose.msra.mxu0 0.0
  %3407 = vmatprep.subr.mxu0 0.0
  %3408 = vmatpush1.xpose.msra.mxu0 0.0
  %3409 = vmatprep.subr.mxu0 0.0
  %3410 = vmatpush1.xpose.msra.mxu0 0.0
  %3411 = vmatprep.subr.mxu0 0.0
  %3412 = vmatpush1.xpose.msra.mxu0 0.0
  %3413 = vmatprep.subr.mxu0 0.0
  %3414 = vmatpush1.xpose.msra.mxu0 0.0
  %3415 = vmatprep.subr.mxu0 0.0
  %3416 = vmatpush1.xpose.msra.mxu0 0.0
  %3417 = vmatprep.subr.mxu0 0.0
  %3418 = vmatpush1.xpose.msra.mxu0 0.0
  %3419 = vmatprep.subr.mxu0 0.0
  %3420 = vmatpush1.xpose.msra.mxu0 0.0
  %3421 = vmatprep.subr.mxu0 0.0
  %3422 = vmatpush1.xpose.msra.mxu0 0.0
  %3423 = vmatprep.subr.mxu0 0.0
  %3424 = vmatpush1.xpose.msra.mxu0 0.0
  %3425 = vmatprep.mubr.f32.mxu0 0.0
  %3426 = vmatmul.mubr.f32.gmra.mrb[0].mxu0 %v3356
  %v3427 = vpop.f32.mrb[0].mxu0
  %v3428 = vadd.f32 0.0, %v3427
  %v3429 = vpop.f32.mrb[0].mxu0
  %3430 = vdwg.mxu0
  %v3431 = vld [vmem:[%s2] sm:$0x3]
  %vm3432 = vcmp.gt.f32.partialorder %v3431, 0.0
  %v3433 = vsel %vm3432, 1, 0
  %v3435 = vunpack.c.l.s4 1966171168
  %v3436 = vunpack.c.0.s8 %v3435
  %v3437 = vlaneseq
  %v3438 = vshrl.u32 %v3437, 7
  %v3439 = vsub.s32 %v3436, %v3438
  %v3440 = vrot.slane %v3433, %v3439
  %v3441 = vcombine.high %v3440, %v3440
  %v3443 = vunpack.c.l.s4 1966171168
  %v3444 = vunpack.c.0.s8 %v3443
  %v3445 = vlaneseq
  %v3446 = vshrl.u32 %v3445, 7
  %v3447 = vsub.s32 %v3444, %v3446
  %v3448 = vrot.slane %v3440, %v3447
  %v3450 = vunpack.c.l.s4 1966171168
  %v3451 = vunpack.c.0.s8 %v3450
  %v3452 = vlaneseq
  %v3453 = vshrl.u32 %v3452, 7
  %v3454 = vsub.s32 %v3451, %v3453
  %v3455 = vrot.slane %v3441, %v3454
  %vm3456 = vcmp.ne.s32.totalorder %v3448, 0
  %vm3457 = vcmp.ne.s32.totalorder %v3455, 0
  %v3458 = vsel %vm3456, 1, 0
  %v3459 = vsel %vm3457, 1, 0
  %v3460 = vlaneseq
  %v3461 = vshrl.u32 %v3460, 7
  %v3462 = vsub.s32 0, %v3461
  %v3463 = vrot.slane %v3458, %v3462
  %v3464 = vlaneseq
  %v3465 = vshrl.u32 %v3464, 7
  %v3466 = vsub.s32 0, %v3465
  %v3467 = vrot.slane %v3459, %v3466
  %vm3468 = vcmp.eq.s32.totalorder %v3463, 1
  %vm3469 = vcmp.eq.s32.totalorder %v3467, 1
  %v3470 = vsel %vm3468, %v3352, -1e+30
  %v3471 = vsel %vm3469, %v3428, -1e+30
  %vm3472 = vcmask 60416
  %v3473 = vsel %vm3472, %v3470, -inf
  %3474 = vmax.xlane.f32.xlu0 %v3473
  %v3475 = vpop.xlane.xlu0 %3474
  %v3476 = vsel %vm3472, %v3471, -inf
  %3477 = vmax.xlane.f32.xlu0 %v3476
  %v3478 = vpop.xlane.xlu0 %3477
  %v3479 = vsub.f32 %v3470, %v3475
  %v3480 = vsub.f32 %v3471, %v3478
  %v3481 = vmul.f32 %v3479, 1.442695
  %v3482 = vpow.pop %v3481
  %v3483 = vmul.f32 %v3480, 1.442695
  %v3484 = vpow.pop %v3483
  %v3485 = vsel %vm3472, %v3482, 0.0
  %3486 = vadd.xlane.f32.xlu0 %v3485
  %v3487 = vpop.xlane.xlu0 %3486
  %v3488 = vsel %vm3472, %v3484, 0.0
  %3489 = vadd.xlane.f32.xlu0 %v3488
  %v3490 = vpop.xlane.xlu0 %3489
  %v3491 = vrcp.pop %v3487
  %v3492 = vrcp.pop %v3490
  %v3493 = vmul.f32 %v3482, %v3491
  %v3494 = vmul.f32 %v3484, %v3492
  %vm3495 = vcmask 64512
  %v3497 = vsel %vm3495, %v3493, 0
  %3499 = vmatprep.subr.mxu0 0.0
  %3500 = vmatpush1.msra.mxu0 %v3275
  %3501 = vmatprep.subr.mxu0 0.0
  %3502 = vmatpush1.msra.mxu0 0.0
  %3503 = vmatprep.subr.mxu0 0.0
  %3504 = vmatpush1.msra.mxu0 0.0
  %3505 = vmatprep.subr.mxu0 0.0
  %3506 = vmatpush1.msra.mxu0 0.0
  %3507 = vmatprep.subr.mxu0 0.0
  %3508 = vmatpush1.msra.mxu0 0.0
  %3509 = vmatprep.subr.mxu0 0.0
  %3510 = vmatpush1.msra.mxu0 0.0
  %3511 = vmatprep.subr.mxu0 0.0
  %3512 = vmatpush1.msra.mxu0 0.0
  %3513 = vmatprep.subr.mxu0 0.0
  %3514 = vmatpush1.msra.mxu0 0.0
  %3515 = vmatprep.subr.mxu0 0.0
  %3516 = vmatpush1.msra.mxu0 0.0
  %3517 = vmatprep.subr.mxu0 0.0
  %3518 = vmatpush1.msra.mxu0 0.0
  %3519 = vmatprep.subr.mxu0 0.0
  %3520 = vmatpush1.msra.mxu0 0.0
  %3521 = vmatprep.subr.mxu0 0.0
  %3522 = vmatpush1.msra.mxu0 0.0
  %3523 = vmatprep.subr.mxu0 0.0
  %3524 = vmatpush1.msra.mxu0 0.0
  %3525 = vmatprep.subr.mxu0 0.0
  %3526 = vmatpush1.msra.mxu0 0.0
  %3527 = vmatprep.subr.mxu0 0.0
  %3528 = vmatpush1.msra.mxu0 0.0
  %3529 = vmatprep.subr.mxu0 0.0
  %3530 = vmatpush1.msra.mxu0 0.0
  %3531 = vmatprep.subr.mxu0 0.0
  %3532 = vmatpush1.msra.mxu0 0.0
  %3533 = vmatprep.subr.mxu0 0.0
  %3534 = vmatpush1.msra.mxu0 0.0
  %3535 = vmatprep.subr.mxu0 0.0
  %3536 = vmatpush1.msra.mxu0 0.0
  %3537 = vmatprep.subr.mxu0 0.0
  %3538 = vmatpush1.msra.mxu0 0.0
  %3539 = vmatprep.subr.mxu0 0.0
  %3540 = vmatpush1.msra.mxu0 0.0
  %3541 = vmatprep.subr.mxu0 0.0
  %3542 = vmatpush1.msra.mxu0 0.0
  %3543 = vmatprep.subr.mxu0 0.0
  %3544 = vmatpush1.msra.mxu0 0.0
  %3545 = vmatprep.subr.mxu0 0.0
  %3546 = vmatpush1.msra.mxu0 0.0
  %3547 = vmatprep.subr.mxu0 0.0
  %3548 = vmatpush1.msra.mxu0 0.0
  %3549 = vmatprep.subr.mxu0 0.0
  %3550 = vmatpush1.msra.mxu0 0.0
  %3551 = vmatprep.subr.mxu0 0.0
  %3552 = vmatpush1.msra.mxu0 0.0
  %3553 = vmatprep.subr.mxu0 0.0
  %3554 = vmatpush1.msra.mxu0 0.0
  %3555 = vmatprep.subr.mxu0 0.0
  %3556 = vmatpush1.msra.mxu0 0.0
  %3557 = vmatprep.subr.mxu0 0.0
  %3558 = vmatpush1.msra.mxu0 0.0
  %3559 = vmatprep.subr.mxu0 0.0
  %3560 = vmatpush1.msra.mxu0 0.0
  %3561 = vmatprep.subr.mxu0 0.0
  %3562 = vmatpush1.msra.mxu0 0.0
  %3563 = vmatprep.mubr.f32.mxu0 0.0
  %3564 = vmatmul.mubr.f32.gmra.mrb[0].mxu0 %v3497
  %v3565 = vpop.f32.mrb[0].mxu0
  %v3566 = vadd.f32 0.0, %v3565
  %v3567 = vpop.f32.mrb[0].mxu0
  %3568 = vdwg.mxu0
  %v3570 = vsel %vm3495, %v3494, 0
  %3572 = vmatprep.subr.mxu0 0.0
  %3573 = vmatpush1.msra.mxu0 %v3276
  %3574 = vmatprep.subr.mxu0 0.0
  %3575 = vmatpush1.msra.mxu0 0.0
  %3576 = vmatprep.subr.mxu0 0.0
  %3577 = vmatpush1.msra.mxu0 0.0
  %3578 = vmatprep.subr.mxu0 0.0
  %3579 = vmatpush1.msra.mxu0 0.0
  %3580 = vmatprep.subr.mxu0 0.0
  %3581 = vmatpush1.msra.mxu0 0.0
  %3582 = vmatprep.subr.mxu0 0.0
  %3583 = vmatpush1.msra.mxu0 0.0
  %3584 = vmatprep.subr.mxu0 0.0
  %3585 = vmatpush1.msra.mxu0 0.0
  %3586 = vmatprep.subr.mxu0 0.0
  %3587 = vmatpush1.msra.mxu0 0.0
  %3588 = vmatprep.subr.mxu0 0.0
  %3589 = vmatpush1.msra.mxu0 0.0
  %3590 = vmatprep.subr.mxu0 0.0
  %3591 = vmatpush1.msra.mxu0 0.0
  %3592 = vmatprep.subr.mxu0 0.0
  %3593 = vmatpush1.msra.mxu0 0.0
  %3594 = vmatprep.subr.mxu0 0.0
  %3595 = vmatpush1.msra.mxu0 0.0
  %3596 = vmatprep.subr.mxu0 0.0
  %3597 = vmatpush1.msra.mxu0 0.0
  %3598 = vmatprep.subr.mxu0 0.0
  %3599 = vmatpush1.msra.mxu0 0.0
  %3600 = vmatprep.subr.mxu0 0.0
  %3601 = vmatpush1.msra.mxu0 0.0
  %3602 = vmatprep.subr.mxu0 0.0
  %3603 = vmatpush1.msra.mxu0 0.0
  %3604 = vmatprep.subr.mxu0 0.0
  %3605 = vmatpush1.msra.mxu0 0.0
  %3606 = vmatprep.subr.mxu0 0.0
  %3607 = vmatpush1.msra.mxu0 0.0
  %3608 = vmatprep.subr.mxu0 0.0
  %3609 = vmatpush1.msra.mxu0 0.0
  %3610 = vmatprep.subr.mxu0 0.0
  %3611 = vmatpush1.msra.mxu0 0.0
  %3612 = vmatprep.subr.mxu0 0.0
  %3613 = vmatpush1.msra.mxu0 0.0
  %3614 = vmatprep.subr.mxu0 0.0
  %3615 = vmatpush1.msra.mxu0 0.0
  %3616 = vmatprep.subr.mxu0 0.0
  %3617 = vmatpush1.msra.mxu0 0.0
  %3618 = vmatprep.subr.mxu0 0.0
  %3619 = vmatpush1.msra.mxu0 0.0
  %3620 = vmatprep.subr.mxu0 0.0
  %3621 = vmatpush1.msra.mxu0 0.0
  %3622 = vmatprep.subr.mxu0 0.0
  %3623 = vmatpush1.msra.mxu0 0.0
  %3624 = vmatprep.subr.mxu0 0.0
  %3625 = vmatpush1.msra.mxu0 0.0
  %3626 = vmatprep.subr.mxu0 0.0
  %3627 = vmatpush1.msra.mxu0 0.0
  %3628 = vmatprep.subr.mxu0 0.0
  %3629 = vmatpush1.msra.mxu0 0.0
  %3630 = vmatprep.subr.mxu0 0.0
  %3631 = vmatpush1.msra.mxu0 0.0
  %3632 = vmatprep.subr.mxu0 0.0
  %3633 = vmatpush1.msra.mxu0 0.0
  %3634 = vmatprep.subr.mxu0 0.0
  %3635 = vmatpush1.msra.mxu0 0.0
  %3636 = vmatprep.mubr.f32.mxu0 0.0
  %3637 = vmatmul.mubr.f32.gmra.mrb[0].mxu0 %v3570
  %v3638 = vpop.f32.mrb[0].mxu0
  %v3639 = vadd.f32 0.0, %v3638
  %v3640 = vpop.f32.mrb[0].mxu0
  %3641 = vdwg.mxu0
  %v3642 = vld [vmem:[%s11] sm:$0xff]
  %v3643 = vld [vmem:[%s11 + $0x8] sm:$0xff]
  %v3644 = vld [vmem:[%s11 + $0x10] sm:$0xff]
  %v3645 = vld [vmem:[%s11 + $0x18] sm:$0xff]
  %v3646 = vld [vmem:[%s11 + $0x20] sm:$0xff]
  %v3647 = vld [vmem:[%s11 + $0x28] sm:$0xff]
  %v3648 = vld [vmem:[%s11 + $0x30] sm:$0xff]
  %v3649 = vld [vmem:[%s11 + $0x38] sm:$0xff]
  %v3650 = vld [vmem:[%s12] sm:$0x1]
  %v3651 = vld [vmem:[%s13] sm:$0xff]
  %v3652 = vld [vmem:[%s13 + $0x8] sm:$0xff]
  %v3653 = vld [vmem:[%s13 + $0x10] sm:$0xff]
  %v3654 = vld [vmem:[%s13 + $0x18] sm:$0xff]
  %v3655 = vld [vmem:[#allocation6] sm:$0x1]
  %v3657 = vlaneseq
  %v3658 = vshrl.u32 %v3657, 7
  %v3659 = vsub.s32 0, %v3658
  %v3660 = vrot.slane %v3650, %v3659
  %v3663 = vsel %vm108, %v3566, 0
  %3665 = vmatprep.subr.mxu0 0.0
  %3666 = vmatpush1.msra.mxu0 %v3642
  %3667 = vmatprep.subr.mxu0 0.0
  %3668 = vmatpush1.msra.mxu0 %v3643
  %3669 = vmatprep.subr.mxu0 0.0
  %3670 = vmatpush1.msra.mxu0 %v3644
  %3671 = vmatprep.subr.mxu0 0.0
  %3672 = vmatpush1.msra.mxu0 %v3645
  %3673 = vmatprep.subr.mxu0 0.0
  %3674 = vmatpush1.msra.mxu0 %v3646
  %3675 = vmatprep.subr.mxu0 0.0
  %3676 = vmatpush1.msra.mxu0 %v3647
  %3677 = vmatprep.subr.mxu0 0.0
  %3678 = vmatpush1.msra.mxu0 %v3648
  %3679 = vmatprep.subr.mxu0 0.0
  %3680 = vmatpush1.msra.mxu0 %v3649
  %3681 = vmatprep.subr.mxu0 0.0
  %3682 = vmatpush1.msra.mxu0 0.0
  %3683 = vmatprep.subr.mxu0 0.0
  %3684 = vmatpush1.msra.mxu0 0.0
  %3685 = vmatprep.subr.mxu0 0.0
  %3686 = vmatpush1.msra.mxu0 0.0
  %3687 = vmatprep.subr.mxu0 0.0
  %3688 = vmatpush1.msra.mxu0 0.0
  %3689 = vmatprep.subr.mxu0 0.0
  %3690 = vmatpush1.msra.mxu0 0.0
  %3691 = vmatprep.subr.mxu0 0.0
  %3692 = vmatpush1.msra.mxu0 0.0
  %3693 = vmatprep.subr.mxu0 0.0
  %3694 = vmatpush1.msra.mxu0 0.0
  %3695 = vmatprep.subr.mxu0 0.0
  %3696 = vmatpush1.msra.mxu0 0.0
  %3697 = vmatprep.subr.mxu0 0.0
  %3698 = vmatpush1.msra.mxu0 0.0
  %3699 = vmatprep.subr.mxu0 0.0
  %3700 = vmatpush1.msra.mxu0 0.0
  %3701 = vmatprep.subr.mxu0 0.0
  %3702 = vmatpush1.msra.mxu0 0.0
  %3703 = vmatprep.subr.mxu0 0.0
  %3704 = vmatpush1.msra.mxu0 0.0
  %3705 = vmatprep.subr.mxu0 0.0
  %3706 = vmatpush1.msra.mxu0 0.0
  %3707 = vmatprep.subr.mxu0 0.0
  %3708 = vmatpush1.msra.mxu0 0.0
  %3709 = vmatprep.subr.mxu0 0.0
  %3710 = vmatpush1.msra.mxu0 0.0
  %3711 = vmatprep.subr.mxu0 0.0
  %3712 = vmatpush1.msra.mxu0 0.0
  %3713 = vmatprep.subr.mxu0 0.0
  %3714 = vmatpush1.msra.mxu0 0.0
  %3715 = vmatprep.subr.mxu0 0.0
  %3716 = vmatpush1.msra.mxu0 0.0
  %3717 = vmatprep.subr.mxu0 0.0
  %3718 = vmatpush1.msra.mxu0 0.0
  %3719 = vmatprep.subr.mxu0 0.0
  %3720 = vmatpush1.msra.mxu0 0.0
  %3721 = vmatprep.subr.mxu0 0.0
  %3722 = vmatpush1.msra.mxu0 0.0
  %3723 = vmatprep.subr.mxu0 0.0
  %3724 = vmatpush1.msra.mxu0 0.0
  %3725 = vmatprep.subr.mxu0 0.0
  %3726 = vmatpush1.msra.mxu0 0.0
  %3727 = vmatprep.subr.mxu0 0.0
  %3728 = vmatpush1.msra.mxu0 0.0
  %3729 = vmatprep.mubr.f32.mxu0 0.0
  %3730 = vmatmul.mubr.f32.gmra.mrb[0].mxu0 %v3663
  %v3731 = vpop.f32.mrb[0].mxu0
  %v3732 = vadd.f32 %v3660, %v3731
  %v3733 = vpop.f32.mrb[0].mxu0
  %3734 = vdwg.mxu0
  %v3735 = vmax.f32 %v3732, 0.0
  %v3737 = vlaneseq
  %v3738 = vshrl.u32 %v3737, 7
  %v3739 = vsub.s32 0, %v3738
  %v3740 = vrot.slane %v3655, %v3739
  %v3743 = vsel %vm269, %v3735, 0
  %3745 = vmatprep.subr.mxu0 0.0
  %3746 = vmatpush1.msra.mxu0 %v3651
  %3747 = vmatprep.subr.mxu0 0.0
  %3748 = vmatpush1.msra.mxu0 %v3652
  %3749 = vmatprep.subr.mxu0 0.0
  %3750 = vmatpush1.msra.mxu0 %v3653
  %3751 = vmatprep.subr.mxu0 0.0
  %3752 = vmatpush1.msra.mxu0 %v3654
  %3753 = vmatprep.subr.mxu0 0.0
  %3754 = vmatpush1.msra.mxu0 0.0
  %3755 = vmatprep.subr.mxu0 0.0
  %3756 = vmatpush1.msra.mxu0 0.0
  %3757 = vmatprep.subr.mxu0 0.0
  %3758 = vmatpush1.msra.mxu0 0.0
  %3759 = vmatprep.subr.mxu0 0.0
  %3760 = vmatpush1.msra.mxu0 0.0
  %3761 = vmatprep.subr.mxu0 0.0
  %3762 = vmatpush1.msra.mxu0 0.0
  %3763 = vmatprep.subr.mxu0 0.0
  %3764 = vmatpush1.msra.mxu0 0.0
  %3765 = vmatprep.subr.mxu0 0.0
  %3766 = vmatpush1.msra.mxu0 0.0
  %3767 = vmatprep.subr.mxu0 0.0
  %3768 = vmatpush1.msra.mxu0 0.0
  %3769 = vmatprep.subr.mxu0 0.0
  %3770 = vmatpush1.msra.mxu0 0.0
  %3771 = vmatprep.subr.mxu0 0.0
  %3772 = vmatpush1.msra.mxu0 0.0
  %3773 = vmatprep.subr.mxu0 0.0
  %3774 = vmatpush1.msra.mxu0 0.0
  %3775 = vmatprep.subr.mxu0 0.0
  %3776 = vmatpush1.msra.mxu0 0.0
  %3777 = vmatprep.subr.mxu0 0.0
  %3778 = vmatpush1.msra.mxu0 0.0
  %3779 = vmatprep.subr.mxu0 0.0
  %3780 = vmatpush1.msra.mxu0 0.0
  %3781 = vmatprep.subr.mxu0 0.0
  %3782 = vmatpush1.msra.mxu0 0.0
  %3783 = vmatprep.subr.mxu0 0.0
  %3784 = vmatpush1.msra.mxu0 0.0
  %3785 = vmatprep.subr.mxu0 0.0
  %3786 = vmatpush1.msra.mxu0 0.0
  %3787 = vmatprep.subr.mxu0 0.0
  %3788 = vmatpush1.msra.mxu0 0.0
  %3789 = vmatprep.subr.mxu0 0.0
  %3790 = vmatpush1.msra.mxu0 0.0
  %3791 = vmatprep.subr.mxu0 0.0
  %3792 = vmatpush1.msra.mxu0 0.0
  %3793 = vmatprep.subr.mxu0 0.0
  %3794 = vmatpush1.msra.mxu0 0.0
  %3795 = vmatprep.subr.mxu0 0.0
  %3796 = vmatpush1.msra.mxu0 0.0
  %3797 = vmatprep.subr.mxu0 0.0
  %3798 = vmatpush1.msra.mxu0 0.0
  %3799 = vmatprep.subr.mxu0 0.0
  %3800 = vmatpush1.msra.mxu0 0.0
  %3801 = vmatprep.subr.mxu0 0.0
  %3802 = vmatpush1.msra.mxu0 0.0
  %3803 = vmatprep.subr.mxu0 0.0
  %3804 = vmatpush1.msra.mxu0 0.0
  %3805 = vmatprep.subr.mxu0 0.0
  %3806 = vmatpush1.msra.mxu0 0.0
  %3807 = vmatprep.subr.mxu0 0.0
  %3808 = vmatpush1.msra.mxu0 0.0
  %3809 = vmatprep.mubr.f32.mxu0 0.0
  %3810 = vmatmul.mubr.f32.gmra.mrb[0].mxu0 %v3743
  %v3811 = vpop.f32.mrb[0].mxu0
  %v3812 = vadd.f32 %v3740, %v3811
  %v3813 = vpop.f32.mrb[0].mxu0
  %3814 = vdwg.mxu0
  %vm3815 = vcmask 3072
  %3816 = vst.msk [vmem:[%s15] sm:$0xf] %vm3815, %v3812
  %v3818 = vsel %vm108, %v3639, 0
  %3820 = vmatprep.subr.mxu0 0.0
  %3821 = vmatpush1.msra.mxu0 %v3642
  %3822 = vmatprep.subr.mxu0 0.0
  %3823 = vmatpush1.msra.mxu0 %v3643
  %3824 = vmatprep.subr.mxu0 0.0
  %3825 = vmatpush1.msra.mxu0 %v3644
  %3826 = vmatprep.subr.mxu0 0.0
  %3827 = vmatpush1.msra.mxu0 %v3645
  %3828 = vmatprep.subr.mxu0 0.0
  %3829 = vmatpush1.msra.mxu0 %v3646
  %3830 = vmatprep.subr.mxu0 0.0
  %3831 = vmatpush1.msra.mxu0 %v3647
  %3832 = vmatprep.subr.mxu0 0.0
  %3833 = vmatpush1.msra.mxu0 %v3648
  %3834 = vmatprep.subr.mxu0 0.0
  %3835 = vmatpush1.msra.mxu0 %v3649
  %3836 = vmatprep.subr.mxu0 0.0
  %3837 = vmatpush1.msra.mxu0 0.0
  %3838 = vmatprep.subr.mxu0 0.0
  %3839 = vmatpush1.msra.mxu0 0.0
  %3840 = vmatprep.subr.mxu0 0.0
  %3841 = vmatpush1.msra.mxu0 0.0
  %3842 = vmatprep.subr.mxu0 0.0
  %3843 = vmatpush1.msra.mxu0 0.0
  %3844 = vmatprep.subr.mxu0 0.0
  %3845 = vmatpush1.msra.mxu0 0.0
  %3846 = vmatprep.subr.mxu0 0.0
  %3847 = vmatpush1.msra.mxu0 0.0
  %3848 = vmatprep.subr.mxu0 0.0
  %3849 = vmatpush1.msra.mxu0 0.0
  %3850 = vmatprep.subr.mxu0 0.0
  %3851 = vmatpush1.msra.mxu0 0.0
  %3852 = vmatprep.subr.mxu0 0.0
  %3853 = vmatpush1.msra.mxu0 0.0
  %3854 = vmatprep.subr.mxu0 0.0
  %3855 = vmatpush1.msra.mxu0 0.0
  %3856 = vmatprep.subr.mxu0 0.0
  %3857 = vmatpush1.msra.mxu0 0.0
  %3858 = vmatprep.subr.mxu0 0.0
  %3859 = vmatpush1.msra.mxu0 0.0
  %3860 = vmatprep.subr.mxu0 0.0
  %3861 = vmatpush1.msra.mxu0 0.0
  %3862 = vmatprep.subr.mxu0 0.0
  %3863 = vmatpush1.msra.mxu0 0.0
  %3864 = vmatprep.subr.mxu0 0.0
  %3865 = vmatpush1.msra.mxu0 0.0
  %3866 = vmatprep.subr.mxu0 0.0
  %3867 = vmatpush1.msra.mxu0 0.0
  %3868 = vmatprep.subr.mxu0 0.0
  %3869 = vmatpush1.msra.mxu0 0.0
  %3870 = vmatprep.subr.mxu0 0.0
  %3871 = vmatpush1.msra.mxu0 0.0
  %3872 = vmatprep.subr.mxu0 0.0
  %3873 = vmatpush1.msra.mxu0 0.0
  %3874 = vmatprep.subr.mxu0 0.0
  %3875 = vmatpush1.msra.mxu0 0.0
  %3876 = vmatprep.subr.mxu0 0.0
  %3877 = vmatpush1.msra.mxu0 0.0
  %3878 = vmatprep.subr.mxu0 0.0
  %3879 = vmatpush1.msra.mxu0 0.0
  %3880 = vmatprep.subr.mxu0 0.0
  %3881 = vmatpush1.msra.mxu0 0.0
  %3882 = vmatprep.subr.mxu0 0.0
  %3883 = vmatpush1.msra.mxu0 0.0
  %3884 = vmatprep.mubr.f32.mxu0 0.0
  %3885 = vmatmul.mubr.f32.gmra.mrb[0].mxu0 %v3818
  %v3886 = vpop.f32.mrb[0].mxu0
  %v3887 = vadd.f32 %v3660, %v3886
  %v3888 = vpop.f32.mrb[0].mxu0
  %3889 = vdwg.mxu0
  %v3890 = vmax.f32 %v3887, 0.0
  %v3892 = vsel %vm269, %v3890, 0
  %3894 = vmatprep.subr.mxu0 0.0
  %3895 = vmatpush1.msra.mxu0 %v3651
  %3896 = vmatprep.subr.mxu0 0.0
  %3897 = vmatpush1.msra.mxu0 %v3652
  %3898 = vmatprep.subr.mxu0 0.0
  %3899 = vmatpush1.msra.mxu0 %v3653
  %3900 = vmatprep.subr.mxu0 0.0
  %3901 = vmatpush1.msra.mxu0 %v3654
  %3902 = vmatprep.subr.mxu0 0.0
  %3903 = vmatpush1.msra.mxu0 0.0
  %3904 = vmatprep.subr.mxu0 0.0
  %3905 = vmatpush1.msra.mxu0 0.0
  %3906 = vmatprep.subr.mxu0 0.0
  %3907 = vmatpush1.msra.mxu0 0.0
  %3908 = vmatprep.subr.mxu0 0.0
  %3909 = vmatpush1.msra.mxu0 0.0
  %3910 = vmatprep.subr.mxu0 0.0
  %3911 = vmatpush1.msra.mxu0 0.0
  %3912 = vmatprep.subr.mxu0 0.0
  %3913 = vmatpush1.msra.mxu0 0.0
  %3914 = vmatprep.subr.mxu0 0.0
  %3915 = vmatpush1.msra.mxu0 0.0
  %3916 = vmatprep.subr.mxu0 0.0
  %3917 = vmatpush1.msra.mxu0 0.0
  %3918 = vmatprep.subr.mxu0 0.0
  %3919 = vmatpush1.msra.mxu0 0.0
  %3920 = vmatprep.subr.mxu0 0.0
  %3921 = vmatpush1.msra.mxu0 0.0
  %3922 = vmatprep.subr.mxu0 0.0
  %3923 = vmatpush1.msra.mxu0 0.0
  %3924 = vmatprep.subr.mxu0 0.0
  %3925 = vmatpush1.msra.mxu0 0.0
  %3926 = vmatprep.subr.mxu0 0.0
  %3927 = vmatpush1.msra.mxu0 0.0
  %3928 = vmatprep.subr.mxu0 0.0
  %3929 = vmatpush1.msra.mxu0 0.0
  %3930 = vmatprep.subr.mxu0 0.0
  %3931 = vmatpush1.msra.mxu0 0.0
  %3932 = vmatprep.subr.mxu0 0.0
  %3933 = vmatpush1.msra.mxu0 0.0
  %3934 = vmatprep.subr.mxu0 0.0
  %3935 = vmatpush1.msra.mxu0 0.0
  %3936 = vmatprep.subr.mxu0 0.0
  %3937 = vmatpush1.msra.mxu0 0.0
  %3938 = vmatprep.subr.mxu0 0.0
  %3939 = vmatpush1.msra.mxu0 0.0
  %3940 = vmatprep.subr.mxu0 0.0
  %3941 = vmatpush1.msra.mxu0 0.0
  %3942 = vmatprep.subr.mxu0 0.0
  %3943 = vmatpush1.msra.mxu0 0.0
  %3944 = vmatprep.subr.mxu0 0.0
  %3945 = vmatpush1.msra.mxu0 0.0
  %3946 = vmatprep.subr.mxu0 0.0
  %3947 = vmatpush1.msra.mxu0 0.0
  %3948 = vmatprep.subr.mxu0 0.0
  %3949 = vmatpush1.msra.mxu0 0.0
  %3950 = vmatprep.subr.mxu0 0.0
  %3951 = vmatpush1.msra.mxu0 0.0
  %3952 = vmatprep.subr.mxu0 0.0
  %3953 = vmatpush1.msra.mxu0 0.0
  %3954 = vmatprep.subr.mxu0 0.0
  %3955 = vmatpush1.msra.mxu0 0.0
  %3956 = vmatprep.subr.mxu0 0.0
  %3957 = vmatpush1.msra.mxu0 0.0
  %3958 = vmatprep.mubr.f32.mxu0 0.0
  %3959 = vmatmul.mubr.f32.gmra.mrb[0].mxu0 %v3892
  %v3960 = vpop.f32.mrb[0].mxu0
  %v3961 = vadd.f32 %v3740, %v3960
  %v3962 = vpop.f32.mrb[0].mxu0
  %3963 = vdwg.mxu0
  %s3964 = scalar_lea.vmem %s15, 4
  %3965 = vst.msk [vmem:[%s3964] sm:$0xf] %vm3815, %v3961
  // Predicated region
  $region62: #{fast_attention_rnn_forward.1} parent=0 // pred_check
    _
  $region63: #{fast_attention_rnn_forward.1} parent=0 // pred_check_branch
    %3967 = sbr.rel (0) target = $region65
  $region64: #{fast_attention_rnn_forward.1} parent=0 // pred_region
    _
  $region65: #{fast_attention_rnn_forward.1} parent=0 // pred_fallthru
    _
  // Predicated region
  $region66: #{fast_attention_rnn_forward.1} parent=0 // pred_check
    _
  $region67: #{fast_attention_rnn_forward.1} parent=0 // pred_check_branch
    %3969 = sbr.rel (0) target = $region69
  $region68: #{fast_attention_rnn_forward.1} parent=0 // pred_region
    _
  $region69: #{fast_attention_rnn_forward.1} parent=0 // pred_fallthru
    _

</llo_original>
